<compile_context>
chip_gen: v7x
topology: tpu7x:2x2x1
jax: 0.10.0
libtpu: 0.0.40
codegen_flags: <defaults>
</compile_context>

<pallas_src>
import functools

import jax
import jax.numpy as jnp
from jax.experimental import pallas as pl
from jax.experimental.pallas import tpu as pltpu

_LANE = 128
_TB_MAX = 64     # samples per grid step (perf review: 64-256)
_ROWS = 32       # storage rows per sample (input height), kept un-compacted


def _round_up(x, m):
    return ((x + m - 1) // m) * m


# ----------------------------- kernel helpers ---------------------------------
def _shift_rows_up(a, d):
    """result[i] = a[i + d] (circular; wrapped rows only land in junk rows)."""
    if d == 0:
        return a
    return jnp.concatenate([a[d:], a[:d]], axis=0)


def _conv_lhs(a, shift_step, k=5):
    """Wide-K conv lhs: lane-concat of the k row-shifted copies of `a`."""
    return jnp.concatenate(
        [_shift_rows_up(a, kh * shift_step) for kh in range(k)], axis=1)


# ------------------------------- Pallas kernel --------------------------------
def _lenet5_kernel(x_ref, m1_ref, b1_ref, aw1_ref,
                   m2_ref, b2_ref, aw2_ref,
                   m3_ref, b3_ref, w4_ref, b4_ref, w5_ref, b5_ref,
                   o_ref, *, tb):
    f32 = jnp.float32
    bf16 = jnp.bfloat16

    # (tb*32, 32) input rows; one bf16 cast for the whole tile.
    x = x_ref[...].astype(bf16)

    # conv1: single wide-K GEMM (K = 5*32 = 160) over the whole tile.
    z1 = jnp.dot(_conv_lhs(x, 1), m1_ref[...], preferred_element_type=f32)
    h1 = jnp.tanh(z1 + b1_ref[...])                                  # (tb*32, 168)
    # pool1: width/channel pairs via matmul (aw carries the 0.5), row pairs via
    # shift+add (VPU).  Valid rows now sit at stride 2 inside each sample slab.
    h1w = jnp.dot(h1.astype(bf16), aw1_ref[...], preferred_element_type=f32)
    p1 = (0.5 * (h1w + _shift_rows_up(h1w, 1))).astype(bf16)         # (tb*32, 84)

    # conv2 (valid rows at stride 2): K = 5*84 = 420.
    z2 = jnp.dot(_conv_lhs(p1, 2), m2_ref[...], preferred_element_type=f32)
    h2 = jnp.tanh(z2 + b2_ref[...])                                  # (tb*32, 160)
    h2w = jnp.dot(h2.astype(bf16), aw2_ref[...], preferred_element_type=f32)
    p2 = 0.5 * (h2w + _shift_rows_up(h2w, 2))                        # (tb*32, 80), stride 4

    # conv3 features: gather the 5 valid pooled rows (stride 4) of each sample
    # and lane-concat them into a (tb, 400) feature matrix — no scratch,
    # no masked sub-(8,128) stores.
    p2_3d = p2.reshape(tb, _ROWS, 80)
    feat = jnp.concatenate([p2_3d[:, 4 * kh, :] for kh in range(5)], axis=1)
    feat = feat.astype(bf16)                                         # (tb, 400)

    # Dense tail: conv3-as-GEMM + fc1 + fc2 (lane-dense padded logits).
    h3 = jnp.tanh(jnp.dot(feat, m3_ref[...],
                          preferred_element_type=f32) + b3_ref[...])
    h4 = jnp.tanh(jnp.dot(h3.astype(bf16), w4_ref[...],
                          preferred_element_type=f32) + b4_ref[...])
    o_ref[...] = jnp.dot(h4.astype(bf16), w5_ref[...],
                         preferred_element_type=f32) + b5_ref[...]


# ---------------------------- weight preprocessing -----------------------------
def _band_matrices(w, w_in):
    """w: (C_out, C_in, K, K) -> (K*W_in*C_in, W_out*C_out) stacked banded mats.

    Row block kh satisfies M[kh][(w_idx*C_in + ci), (ow*C_out + co)] =
    w[co, ci, kh, w_idx - ow] for 0 <= w_idx - ow < K, so a valid conv is
    sum_kh x_rows_shifted_by_kh @ M[kh] (here fused as one wide-K GEMM).
    """
    c_out, c_in, k, _ = w.shape
    w_out = w_in - k + 1
    mats = []
    for kh in range(k):
        m = jnp.zeros((w_in * c_in, w_out * c_out), jnp.float32)
        for kw in range(k):
            shift = jnp.eye(w_in, w_out, k=-kw, dtype=jnp.float32)
            m = m + jnp.kron(shift, w[:, :, kh, kw].T)
        mats.append(m)
    return jnp.concatenate(mats, axis=0)


def _pool_width_matrix(w_conv, c):
    """2x2/stride-2 avg pool over the (width, channel) lane axis (0.5 included)."""
    pw = 0.5 * jnp.kron(jnp.eye(w_conv // 2, dtype=jnp.float32),
                        jnp.ones((2, 1), jnp.float32))        # (w_conv, w_conv//2)
    return jnp.kron(pw, jnp.eye(c, dtype=jnp.float32))        # (w_conv*c, w_conv//2*c)


def prepare_params(params):
    """One-time prep: banded conv mats (kh-stacked), pool mats, padded FC tail."""
    n_cls = params["fc2_b"].shape[0]
    n_cls_pad = _round_up(n_cls, _LANE)
    w5 = jnp.zeros((84, n_cls_pad), jnp.float32).at[:, :n_cls].set(params["fc2_w"].T)
    b5 = jnp.zeros((1, n_cls_pad), jnp.float32).at[:, :n_cls].set(params["fc2_b"])
    return {
        "m1": _band_matrices(params["conv1_w"], 32).astype(jnp.bfloat16),   # (160, 168)
        "b1": jnp.tile(params["conv1_b"], 28).reshape(1, 168),
        "aw1": _pool_width_matrix(28, 6).astype(jnp.bfloat16),              # (168, 84)
        "m2": _band_matrices(params["conv2_w"], 14).astype(jnp.bfloat16),   # (420, 160)
        "b2": jnp.tile(params["conv2_b"], 10).reshape(1, 160),
        "aw2": _pool_width_matrix(10, 16).astype(jnp.bfloat16),             # (160, 80)
        "m3": _band_matrices(params["conv3_w"], 5).astype(jnp.bfloat16),    # (400, 120)
        "b3": params["conv3_b"].reshape(1, 120),
        "w4": params["fc1_w"].T.astype(jnp.bfloat16),                       # (120, 84)
        "b4": params["fc1_b"].reshape(1, 84),
        "w5": w5.astype(jnp.bfloat16),                                      # (84, 128)
        "b5": b5,
    }


# ---------------------------------- forward ------------------------------------
def lenet5_forward(prepped, x, *, n_classes=10):
    """x: (N, 1, 32, 32) f32 -> logits (N, n_classes) f32."""
    n = x.shape[0]
    assert x.shape[1:] == (1, 32, 32)
    tb = min(_TB_MAX, _round_up(n, 8))
    n_pad = _round_up(n, tb)
    n_cls_pad = prepped["w5"].shape[1]

    xs = x.reshape(n, 32, 32).astype(jnp.float32)
    if n_pad != n:
        xs = jnp.pad(xs, ((0, n_pad - n), (0, 0), (0, 0)))
    xs = xs.reshape(n_pad * _ROWS, 32)          # flat (rows, width) layout

    weight_names = ["m1", "b1", "aw1", "m2", "b2", "aw2",
                    "m3", "b3", "w4", "b4", "w5", "b5"]
    weights = [prepped[k] for k in weight_names]

    def full(a):
        shape = a.shape
        return pl.BlockSpec(shape, lambda *_: (0,) * len(shape))

    kernel = functools.partial(_lenet5_kernel, tb=tb)
    out = pl.pallas_call(
        kernel,
        out_shape=jax.ShapeDtypeStruct((n_pad, n_cls_pad), jnp.float32),
        grid=(n_pad // tb,),
        in_specs=[pl.BlockSpec((tb * _ROWS, 32), lambda i: (i, 0))]
                 + [full(w) for w in weights],
        out_specs=pl.BlockSpec((tb, n_cls_pad), lambda i: (i, 0)),
        compiler_params=pltpu.CompilerParams(
            dimension_semantics=("parallel",),
            vmem_limit_bytes=48 * 1024 * 1024),
    )(xs, *weights)
    return out[:n, :n_classes]


# ---------------------------- params / pure-JAX ref -----------------------------
def init_params(key, n_classes=10):
    ks = jax.random.split(key, 10)

    def u(k, shape, fan_in):
        bound = 1.0 / jnp.sqrt(float(fan_in))
        return jax.random.uniform(k, shape, jnp.float32, -bound, bound)

    return {
        "conv1_w": u(ks[0], (6, 1, 5, 5), 1 * 25),
        "conv1_b": u(ks[1], (6,), 1 * 25),
        "conv2_w": u(ks[2], (16, 6, 5, 5), 6 * 25),
        "conv2_b": u(ks[3], (16,), 6 * 25),
        "conv3_w": u(ks[4], (120, 16, 5, 5), 16 * 25),
        "conv3_b": u(ks[5], (120,), 16 * 25),
        "fc1_w": u(ks[6], (84, 120), 120),   # PyTorch Linear: (out, in)
        "fc1_b": u(ks[7], (84,), 120),
        "fc2_w": u(ks[8], (n_classes, 84), 84),
        "fc2_b": u(ks[9], (n_classes,), 84),
    }


def lenet5_reference(params, x):
    def conv(z, w, b):
        y = jax.lax.conv_general_dilated(
            z, w, window_strides=(1, 1), padding="VALID",
            dimension_numbers=("NCHW", "OIHW", "NCHW"))
        return jnp.tanh(y + b[None, :, None, None])

    def pool(z):
        n, c, h, w = z.shape
        return z.reshape(n, c, h // 2, 2, w // 2, 2).mean(axis=(3, 5))

    z = pool(conv(x, params["conv1_w"], params["conv1_b"]))
    z = pool(conv(z, params["conv2_w"], params["conv2_b"]))
    z = conv(z, params["conv3_w"], params["conv3_b"])
    z = z.reshape(z.shape[0], -1)
    z = jnp.tanh(z @ params["fc1_w"].T + params["fc1_b"])
    return z @ params["fc2_w"].T + params["fc2_b"]


if __name__ == "__main__":
    key = jax.random.PRNGKey(0)
    pkey, xkey = jax.random.split(key)
    params = init_params(pkey, n_classes=10)
    # LeNet-5's conv stack requires 32x32 single-channel input.
    x = jax.random.normal(xkey, (2, 1, 32, 32), dtype=jnp.float32)

    prepped = prepare_params(params)                       # one-time weight prep
    fwd = jax.jit(functools.partial(lenet5_forward, n_classes=10))
    out = fwd(prepped, x)
    jax.block_until_ready(out)

    ref = jax.jit(lenet5_reference)(params, x)
    err = float(jnp.max(jnp.abs(out - ref)))
    assert out.shape == (2, 10) and out.dtype == jnp.float32
    assert err < 5e-2, f"mismatch vs reference: max abs err {err}"
    print("KERNEL_OK")
</pallas_src>

<mosaic_0001>
module attributes {stable_mosaic.version = 11 : i64} {
  func.func @_lenet5_kernel(%arg0: i32, %arg1: memref<256x32xf32, #tpu.memory_space<vmem>>, %arg2: memref<160x168xbf16, #tpu.memory_space<vmem>>, %arg3: memref<1x168xf32, #tpu.memory_space<vmem>>, %arg4: memref<168x84xbf16, #tpu.memory_space<vmem>>, %arg5: memref<420x160xbf16, #tpu.memory_space<vmem>>, %arg6: memref<1x160xf32, #tpu.memory_space<vmem>>, %arg7: memref<160x80xbf16, #tpu.memory_space<vmem>>, %arg8: memref<400x120xbf16, #tpu.memory_space<vmem>>, %arg9: memref<1x120xf32, #tpu.memory_space<vmem>>, %arg10: memref<120x84xbf16, #tpu.memory_space<vmem>>, %arg11: memref<1x84xf32, #tpu.memory_space<vmem>>, %arg12: memref<84x128xbf16, #tpu.memory_space<vmem>>, %arg13: memref<1x128xf32, #tpu.memory_space<vmem>>, %arg14: memref<8x128xf32, #tpu.memory_space<vmem>>) attributes {dimension_semantics = [#tpu.dimension_semantics<parallel>], iteration_bounds = array<i64: 1>, scalar_prefetch = 0 : i64, scratch_operands = 0 : i64, tpu.core_type = #tpu.core_type<tc>, window_params = [{transform_indices = @transform_0, window_bounds = array<i64: 256, 32>}, {pipeline_mode = #tpu.pipeline_mode<synchronous>, transform_indices = @transform_1, window_bounds = array<i64: 160, 168>}, {pipeline_mode = #tpu.pipeline_mode<synchronous>, transform_indices = @transform_2, window_bounds = array<i64: 1, 168>}, {pipeline_mode = #tpu.pipeline_mode<synchronous>, transform_indices = @transform_3, window_bounds = array<i64: 168, 84>}, {pipeline_mode = #tpu.pipeline_mode<synchronous>, transform_indices = @transform_4, window_bounds = array<i64: 420, 160>}, {pipeline_mode = #tpu.pipeline_mode<synchronous>, transform_indices = @transform_5, window_bounds = array<i64: 1, 160>}, {pipeline_mode = #tpu.pipeline_mode<synchronous>, transform_indices = @transform_6, window_bounds = array<i64: 160, 80>}, {pipeline_mode = #tpu.pipeline_mode<synchronous>, transform_indices = @transform_7, window_bounds = array<i64: 400, 120>}, {pipeline_mode = #tpu.pipeline_mode<synchronous>, transform_indices = @transform_8, window_bounds = array<i64: 1, 120>}, {pipeline_mode = #tpu.pipeline_mode<synchronous>, transform_indices = @transform_9, window_bounds = array<i64: 120, 84>}, {pipeline_mode = #tpu.pipeline_mode<synchronous>, transform_indices = @transform_10, window_bounds = array<i64: 1, 84>}, {pipeline_mode = #tpu.pipeline_mode<synchronous>, transform_indices = @transform_11, window_bounds = array<i64: 84, 128>}, {pipeline_mode = #tpu.pipeline_mode<synchronous>, transform_indices = @transform_12, window_bounds = array<i64: 1, 128>}, {transform_indices = @transform_13, window_bounds = array<i64: 8, 128>}]} {
    %c0 = arith.constant 0 : index
    %c0_0 = arith.constant 0 : index
    %0 = vector.load %arg1[%c0, %c0_0] : memref<256x32xf32, #tpu.memory_space<vmem>>, vector<256x32xf32>
    %1 = arith.truncf %0 : vector<256x32xf32> to vector<256x32xbf16>
    %2 = vector.extract_strided_slice %1 {offsets = [1, 0], sizes = [255, 32], strides = [1, 1]} : vector<256x32xbf16> to vector<255x32xbf16>
    %3 = vector.extract_strided_slice %1 {offsets = [0, 0], sizes = [1, 32], strides = [1, 1]} : vector<256x32xbf16> to vector<1x32xbf16>
    %4 = tpu.concatenate %2, %3 in 0 : vector<255x32xbf16>, vector<1x32xbf16> -> vector<256x32xbf16>
    %5 = vector.extract_strided_slice %1 {offsets = [2, 0], sizes = [254, 32], strides = [1, 1]} : vector<256x32xbf16> to vector<254x32xbf16>
    %6 = vector.extract_strided_slice %1 {offsets = [0, 0], sizes = [2, 32], strides = [1, 1]} : vector<256x32xbf16> to vector<2x32xbf16>
    %7 = tpu.concatenate %5, %6 in 0 : vector<254x32xbf16>, vector<2x32xbf16> -> vector<256x32xbf16>
    %8 = vector.extract_strided_slice %1 {offsets = [3, 0], sizes = [253, 32], strides = [1, 1]} : vector<256x32xbf16> to vector<253x32xbf16>
    %9 = vector.extract_strided_slice %1 {offsets = [0, 0], sizes = [3, 32], strides = [1, 1]} : vector<256x32xbf16> to vector<3x32xbf16>
    %10 = tpu.concatenate %8, %9 in 0 : vector<253x32xbf16>, vector<3x32xbf16> -> vector<256x32xbf16>
    %11 = vector.extract_strided_slice %1 {offsets = [4, 0], sizes = [252, 32], strides = [1, 1]} : vector<256x32xbf16> to vector<252x32xbf16>
    %12 = vector.extract_strided_slice %1 {offsets = [0, 0], sizes = [4, 32], strides = [1, 1]} : vector<256x32xbf16> to vector<4x32xbf16>
    %13 = tpu.concatenate %11, %12 in 0 : vector<252x32xbf16>, vector<4x32xbf16> -> vector<256x32xbf16>
    %14 = tpu.concatenate %1, %4, %7, %10, %13 in 1 : vector<256x32xbf16>, vector<256x32xbf16>, vector<256x32xbf16>, vector<256x32xbf16>, vector<256x32xbf16> -> vector<256x160xbf16>
    %c0_1 = arith.constant 0 : index
    %c0_2 = arith.constant 0 : index
    %15 = vector.load %arg2[%c0_1, %c0_2] : memref<160x168xbf16, #tpu.memory_space<vmem>>, vector<160x168xbf16>
    %cst = arith.constant dense<0.000000e+00> : vector<256x168xf32>
    %16 = tpu.matmul %14, %15, %cst {dimension_numbers = #tpu.dot_dimension_numbers<[1], [0], [0], [1], [0, 0, 1, 1], [], []>} : vector<256x160xbf16>, vector<160x168xbf16>, vector<256x168xf32> -> vector<256x168xf32>
    %c0_3 = arith.constant 0 : index
    %c0_4 = arith.constant 0 : index
    %17 = vector.load %arg3[%c0_3, %c0_4] : memref<1x168xf32, #tpu.memory_space<vmem>>, vector<1x168xf32>
    %18 = vector.broadcast %17 : vector<1x168xf32> to vector<256x168xf32>
    %19 = arith.addf %16, %18 : vector<256x168xf32>
    %20 = math.tanh %19 : vector<256x168xf32>
    %21 = arith.truncf %20 : vector<256x168xf32> to vector<256x168xbf16>
    %c0_5 = arith.constant 0 : index
    %c0_6 = arith.constant 0 : index
    %22 = vector.load %arg4[%c0_5, %c0_6] : memref<168x84xbf16, #tpu.memory_space<vmem>>, vector<168x84xbf16>
    %cst_7 = arith.constant dense<0.000000e+00> : vector<256x84xf32>
    %23 = tpu.matmul %21, %22, %cst_7 {dimension_numbers = #tpu.dot_dimension_numbers<[1], [0], [0], [1], [0, 0, 1, 1], [], []>} : vector<256x168xbf16>, vector<168x84xbf16>, vector<256x84xf32> -> vector<256x84xf32>
    %24 = vector.extract_strided_slice %23 {offsets = [1, 0], sizes = [255, 84], strides = [1, 1]} : vector<256x84xf32> to vector<255x84xf32>
    %25 = vector.extract_strided_slice %23 {offsets = [0, 0], sizes = [1, 84], strides = [1, 1]} : vector<256x84xf32> to vector<1x84xf32>
    %26 = tpu.concatenate %24, %25 in 0 : vector<255x84xf32>, vector<1x84xf32> -> vector<256x84xf32>
    %27 = arith.addf %23, %26 : vector<256x84xf32>
    %cst_8 = arith.constant 5.000000e-01 : f32
    %28 = vector.broadcast %cst_8 : f32 to vector<256x84xf32>
    %29 = arith.mulf %28, %27 : vector<256x84xf32>
    %30 = arith.truncf %29 : vector<256x84xf32> to vector<256x84xbf16>
    %31 = vector.extract_strided_slice %30 {offsets = [2, 0], sizes = [254, 84], strides = [1, 1]} : vector<256x84xbf16> to vector<254x84xbf16>
    %32 = vector.extract_strided_slice %30 {offsets = [0, 0], sizes = [2, 84], strides = [1, 1]} : vector<256x84xbf16> to vector<2x84xbf16>
    %33 = tpu.concatenate %31, %32 in 0 : vector<254x84xbf16>, vector<2x84xbf16> -> vector<256x84xbf16>
    %34 = vector.extract_strided_slice %30 {offsets = [4, 0], sizes = [252, 84], strides = [1, 1]} : vector<256x84xbf16> to vector<252x84xbf16>
    %35 = vector.extract_strided_slice %30 {offsets = [0, 0], sizes = [4, 84], strides = [1, 1]} : vector<256x84xbf16> to vector<4x84xbf16>
    %36 = tpu.concatenate %34, %35 in 0 : vector<252x84xbf16>, vector<4x84xbf16> -> vector<256x84xbf16>
    %37 = vector.extract_strided_slice %30 {offsets = [6, 0], sizes = [250, 84], strides = [1, 1]} : vector<256x84xbf16> to vector<250x84xbf16>
    %38 = vector.extract_strided_slice %30 {offsets = [0, 0], sizes = [6, 84], strides = [1, 1]} : vector<256x84xbf16> to vector<6x84xbf16>
    %39 = tpu.concatenate %37, %38 in 0 : vector<250x84xbf16>, vector<6x84xbf16> -> vector<256x84xbf16>
    %40 = vector.extract_strided_slice %30 {offsets = [8, 0], sizes = [248, 84], strides = [1, 1]} : vector<256x84xbf16> to vector<248x84xbf16>
    %41 = vector.extract_strided_slice %30 {offsets = [0, 0], sizes = [8, 84], strides = [1, 1]} : vector<256x84xbf16> to vector<8x84xbf16>
    %42 = tpu.concatenate %40, %41 in 0 : vector<248x84xbf16>, vector<8x84xbf16> -> vector<256x84xbf16>
    %43 = tpu.concatenate %30, %33, %36, %39, %42 in 1 : vector<256x84xbf16>, vector<256x84xbf16>, vector<256x84xbf16>, vector<256x84xbf16>, vector<256x84xbf16> -> vector<256x420xbf16>
    %c0_9 = arith.constant 0 : index
    %c0_10 = arith.constant 0 : index
    %44 = vector.load %arg5[%c0_9, %c0_10] : memref<420x160xbf16, #tpu.memory_space<vmem>>, vector<420x160xbf16>
    %cst_11 = arith.constant dense<0.000000e+00> : vector<256x160xf32>
    %45 = tpu.matmul %43, %44, %cst_11 {dimension_numbers = #tpu.dot_dimension_numbers<[1], [0], [0], [1], [0, 0, 1, 1], [], []>} : vector<256x420xbf16>, vector<420x160xbf16>, vector<256x160xf32> -> vector<256x160xf32>
    %c0_12 = arith.constant 0 : index
    %c0_13 = arith.constant 0 : index
    %46 = vector.load %arg6[%c0_12, %c0_13] : memref<1x160xf32, #tpu.memory_space<vmem>>, vector<1x160xf32>
    %47 = vector.broadcast %46 : vector<1x160xf32> to vector<256x160xf32>
    %48 = arith.addf %45, %47 : vector<256x160xf32>
    %49 = math.tanh %48 : vector<256x160xf32>
    %50 = arith.truncf %49 : vector<256x160xf32> to vector<256x160xbf16>
    %c0_14 = arith.constant 0 : index
    %c0_15 = arith.constant 0 : index
    %51 = vector.load %arg7[%c0_14, %c0_15] : memref<160x80xbf16, #tpu.memory_space<vmem>>, vector<160x80xbf16>
    %cst_16 = arith.constant dense<0.000000e+00> : vector<256x80xf32>
    %52 = tpu.matmul %50, %51, %cst_16 {dimension_numbers = #tpu.dot_dimension_numbers<[1], [0], [0], [1], [0, 0, 1, 1], [], []>} : vector<256x160xbf16>, vector<160x80xbf16>, vector<256x80xf32> -> vector<256x80xf32>
    %53 = vector.extract_strided_slice %52 {offsets = [2, 0], sizes = [254, 80], strides = [1, 1]} : vector<256x80xf32> to vector<254x80xf32>
    %54 = vector.extract_strided_slice %52 {offsets = [0, 0], sizes = [2, 80], strides = [1, 1]} : vector<256x80xf32> to vector<2x80xf32>
    %55 = tpu.concatenate %53, %54 in 0 : vector<254x80xf32>, vector<2x80xf32> -> vector<256x80xf32>
    %56 = arith.addf %52, %55 : vector<256x80xf32>
    %cst_17 = arith.constant 5.000000e-01 : f32
    %57 = vector.broadcast %cst_17 : f32 to vector<256x80xf32>
    %58 = arith.mulf %57, %56 : vector<256x80xf32>
    %59 = vector.shape_cast %58 : vector<256x80xf32> to vector<8x32x80xf32>
    %60 = vector.extract_strided_slice %59 {offsets = [0, 0, 0], sizes = [8, 1, 80], strides = [1, 1, 1]} : vector<8x32x80xf32> to vector<8x1x80xf32>
    %61 = vector.shape_cast %60 : vector<8x1x80xf32> to vector<8x80xf32>
    %62 = vector.extract_strided_slice %59 {offsets = [0, 4, 0], sizes = [8, 1, 80], strides = [1, 1, 1]} : vector<8x32x80xf32> to vector<8x1x80xf32>
    %63 = vector.shape_cast %62 : vector<8x1x80xf32> to vector<8x80xf32>
    %64 = vector.extract_strided_slice %59 {offsets = [0, 8, 0], sizes = [8, 1, 80], strides = [1, 1, 1]} : vector<8x32x80xf32> to vector<8x1x80xf32>
    %65 = vector.shape_cast %64 : vector<8x1x80xf32> to vector<8x80xf32>
    %66 = vector.extract_strided_slice %59 {offsets = [0, 12, 0], sizes = [8, 1, 80], strides = [1, 1, 1]} : vector<8x32x80xf32> to vector<8x1x80xf32>
    %67 = vector.shape_cast %66 : vector<8x1x80xf32> to vector<8x80xf32>
    %68 = vector.extract_strided_slice %59 {offsets = [0, 16, 0], sizes = [8, 1, 80], strides = [1, 1, 1]} : vector<8x32x80xf32> to vector<8x1x80xf32>
    %69 = vector.shape_cast %68 : vector<8x1x80xf32> to vector<8x80xf32>
    %70 = tpu.concatenate %61, %63, %65, %67, %69 in 1 : vector<8x80xf32>, vector<8x80xf32>, vector<8x80xf32>, vector<8x80xf32>, vector<8x80xf32> -> vector<8x400xf32>
    %71 = arith.truncf %70 : vector<8x400xf32> to vector<8x400xbf16>
    %c0_18 = arith.constant 0 : index
    %c0_19 = arith.constant 0 : index
    %72 = vector.load %arg8[%c0_18, %c0_19] : memref<400x120xbf16, #tpu.memory_space<vmem>>, vector<400x120xbf16>
    %cst_20 = arith.constant dense<0.000000e+00> : vector<8x120xf32>
    %73 = tpu.matmul %71, %72, %cst_20 {dimension_numbers = #tpu.dot_dimension_numbers<[1], [0], [0], [1], [0, 0, 1, 1], [], []>} : vector<8x400xbf16>, vector<400x120xbf16>, vector<8x120xf32> -> vector<8x120xf32>
    %c0_21 = arith.constant 0 : index
    %c0_22 = arith.constant 0 : index
    %74 = vector.load %arg9[%c0_21, %c0_22] : memref<1x120xf32, #tpu.memory_space<vmem>>, vector<1x120xf32>
    %75 = vector.broadcast %74 : vector<1x120xf32> to vector<8x120xf32>
    %76 = arith.addf %73, %75 : vector<8x120xf32>
    %77 = math.tanh %76 : vector<8x120xf32>
    %78 = arith.truncf %77 : vector<8x120xf32> to vector<8x120xbf16>
    %c0_23 = arith.constant 0 : index
    %c0_24 = arith.constant 0 : index
    %79 = vector.load %arg10[%c0_23, %c0_24] : memref<120x84xbf16, #tpu.memory_space<vmem>>, vector<120x84xbf16>
    %cst_25 = arith.constant dense<0.000000e+00> : vector<8x84xf32>
    %80 = tpu.matmul %78, %79, %cst_25 {dimension_numbers = #tpu.dot_dimension_numbers<[1], [0], [0], [1], [0, 0, 1, 1], [], []>} : vector<8x120xbf16>, vector<120x84xbf16>, vector<8x84xf32> -> vector<8x84xf32>
    %c0_26 = arith.constant 0 : index
    %c0_27 = arith.constant 0 : index
    %81 = vector.load %arg11[%c0_26, %c0_27] : memref<1x84xf32, #tpu.memory_space<vmem>>, vector<1x84xf32>
    %82 = vector.broadcast %81 : vector<1x84xf32> to vector<8x84xf32>
    %83 = arith.addf %80, %82 : vector<8x84xf32>
    %84 = math.tanh %83 : vector<8x84xf32>
    %85 = arith.truncf %84 : vector<8x84xf32> to vector<8x84xbf16>
    %c0_28 = arith.constant 0 : index
    %c0_29 = arith.constant 0 : index
    %86 = vector.load %arg12[%c0_28, %c0_29] : memref<84x128xbf16, #tpu.memory_space<vmem>>, vector<84x128xbf16>
    %cst_30 = arith.constant dense<0.000000e+00> : vector<8x128xf32>
    %87 = tpu.matmul %85, %86, %cst_30 {dimension_numbers = #tpu.dot_dimension_numbers<[1], [0], [0], [1], [0, 0, 1, 1], [], []>} : vector<8x84xbf16>, vector<84x128xbf16>, vector<8x128xf32> -> vector<8x128xf32>
    %c0_31 = arith.constant 0 : index
    %c0_32 = arith.constant 0 : index
    %88 = vector.load %arg13[%c0_31, %c0_32] : memref<1x128xf32, #tpu.memory_space<vmem>>, vector<1x128xf32>
    %89 = vector.broadcast %88 : vector<1x128xf32> to vector<8x128xf32>
    %90 = arith.addf %87, %89 : vector<8x128xf32>
    %c0_33 = arith.constant 0 : index
    %c0_34 = arith.constant 0 : index
    %91 = vector.load %arg14[%c0_33, %c0_34] : memref<8x128xf32, #tpu.memory_space<vmem>>, vector<8x128xf32>
    tpu.vector_store %arg14[%c0_33, %c0_34], %90 {strides = array<i32>} : memref<8x128xf32, #tpu.memory_space<vmem>>, vector<8x128xf32>,
    return
  }
  func.func @transform_0(%arg0: i32) -> (i32, i32) {
    %c0_i32 = arith.constant 0 : i32
    %c0_i32_0 = arith.constant 0 : i32
    return %arg0, %c0_i32 : i32, i32
  }
  func.func @transform_1(%arg0: i32) -> (i32, i32) {
    %c0_i32 = arith.constant 0 : i32
    %c0_i32_0 = arith.constant 0 : i32
    %c0_i32_1 = arith.constant 0 : i32
    return %c0_i32, %c0_i32_0 : i32, i32
  }
  func.func @transform_2(%arg0: i32) -> (i32, i32) {
    %c0_i32 = arith.constant 0 : i32
    %c0_i32_0 = arith.constant 0 : i32
    %c0_i32_1 = arith.constant 0 : i32
    return %c0_i32, %c0_i32_0 : i32, i32
  }
  func.func @transform_3(%arg0: i32) -> (i32, i32) {
    %c0_i32 = arith.constant 0 : i32
    %c0_i32_0 = arith.constant 0 : i32
    %c0_i32_1 = arith.constant 0 : i32
    return %c0_i32, %c0_i32_0 : i32, i32
  }
  func.func @transform_4(%arg0: i32) -> (i32, i32) {
    %c0_i32 = arith.constant 0 : i32
    %c0_i32_0 = arith.constant 0 : i32
    %c0_i32_1 = arith.constant 0 : i32
    return %c0_i32, %c0_i32_0 : i32, i32
  }
  func.func @transform_5(%arg0: i32) -> (i32, i32) {
    %c0_i32 = arith.constant 0 : i32
    %c0_i32_0 = arith.constant 0 : i32
    %c0_i32_1 = arith.constant 0 : i32
    return %c0_i32, %c0_i32_0 : i32, i32
  }
  func.func @transform_6(%arg0: i32) -> (i32, i32) {
    %c0_i32 = arith.constant 0 : i32
    %c0_i32_0 = arith.constant 0 : i32
    %c0_i32_1 = arith.constant 0 : i32
    return %c0_i32, %c0_i32_0 : i32, i32
  }
  func.func @transform_7(%arg0: i32) -> (i32, i32) {
    %c0_i32 = arith.constant 0 : i32
    %c0_i32_0 = arith.constant 0 : i32
    %c0_i32_1 = arith.constant 0 : i32
    return %c0_i32, %c0_i32_0 : i32, i32
  }
  func.func @transform_8(%arg0: i32) -> (i32, i32) {
    %c0_i32 = arith.constant 0 : i32
    %c0_i32_0 = arith.constant 0 : i32
    %c0_i32_1 = arith.constant 0 : i32
    return %c0_i32, %c0_i32_0 : i32, i32
  }
  func.func @transform_9(%arg0: i32) -> (i32, i32) {
    %c0_i32 = arith.constant 0 : i32
    %c0_i32_0 = arith.constant 0 : i32
    %c0_i32_1 = arith.constant 0 : i32
    return %c0_i32, %c0_i32_0 : i32, i32
  }
  func.func @transform_10(%arg0: i32) -> (i32, i32) {
    %c0_i32 = arith.constant 0 : i32
    %c0_i32_0 = arith.constant 0 : i32
    %c0_i32_1 = arith.constant 0 : i32
    return %c0_i32, %c0_i32_0 : i32, i32
  }
  func.func @transform_11(%arg0: i32) -> (i32, i32) {
    %c0_i32 = arith.constant 0 : i32
    %c0_i32_0 = arith.constant 0 : i32
    %c0_i32_1 = arith.constant 0 : i32
    return %c0_i32, %c0_i32_0 : i32, i32
  }
  func.func @transform_12(%arg0: i32) -> (i32, i32) {
    %c0_i32 = arith.constant 0 : i32
    %c0_i32_0 = arith.constant 0 : i32
    %c0_i32_1 = arith.constant 0 : i32
    return %c0_i32, %c0_i32_0 : i32, i32
  }
  func.func @transform_13(%arg0: i32) -> (i32, i32) {
    %c0_i32 = arith.constant 0 : i32
    %c0_i32_0 = arith.constant 0 : i32
    return %arg0, %c0_i32 : i32, i32
  }
}

</mosaic_0001>

<llo_original>
// kernel: lenet5_forward.1
$region0: #{lenet5_forward.1}
  #allocation0 [shape = 'u32[]', space=smem, size = 0x4, offset = 0x4, fixed_abs, tag = 'smem constant byte address 0x4 - core index']
  #allocation1 [shape = 'u32[144,128]{1,0:T(1,128)}', space=vmem, size = 0x12000, scoped, tag = 'internal scratch']
  %s0 = inlined_call_operand.vmem [shape: f32[256,32], index: 0, kind: input, shape index: {}]
  %s1 = inlined_call_operand.vmem [shape: bf16[160,168], index: 1, kind: input, shape index: {}]
  %s2 = inlined_call_operand.vmem [shape: f32[1,168], index: 2, kind: input, shape index: {}]
  %s3 = inlined_call_operand.vmem [shape: bf16[168,84], index: 3, kind: input, shape index: {}]
  %s4 = inlined_call_operand.vmem [shape: bf16[420,160], index: 4, kind: input, shape index: {}]
  %s5 = inlined_call_operand.vmem [shape: f32[1,160], index: 5, kind: input, shape index: {}]
  %s6 = inlined_call_operand.vmem [shape: bf16[160,80], index: 6, kind: input, shape index: {}]
  %s7 = inlined_call_operand.vmem [shape: bf16[400,120], index: 7, kind: input, shape index: {}]
  %s8 = inlined_call_operand.vmem [shape: f32[1,120], index: 8, kind: input, shape index: {}]
  %s9 = inlined_call_operand.vmem [shape: bf16[120,84], index: 9, kind: input, shape index: {}]
  %s10 = inlined_call_operand.vmem [shape: f32[1,84], index: 10, kind: input, shape index: {}]
  %s11 = inlined_call_operand.vmem [shape: bf16[84,128], index: 11, kind: input, shape index: {}]
  %s12 = inlined_call_operand.vmem [shape: f32[1,128], index: 12, kind: input, shape index: {}]
  %s13 = inlined_call_operand.vmem [shape: f32[8,128], index: 13, kind: output, shape index: {}]
  %s14 = sld [smem:[#allocation0]]
  $region62: #{lenet5_forward.1} parent=0
    _
  %s16 = ssub.s32 1, %s14
  %s17 = scalar_select 0, %s16, %s14
  // Predicated region
  $region2: #{lenet5_forward.1} parent=0 // pred_check
    _
  $region3: #{lenet5_forward.1} parent=0 // pred_check_branch
    %19 = sbr.rel (0) target = $region5
  $region4: #{lenet5_forward.1} parent=0 // pred_region
    _
  $region5: #{lenet5_forward.1} parent=0 // pred_fallthru
    _
  // Predicated region
  $region6: #{lenet5_forward.1} parent=0 // pred_check
    _
  $region7: #{lenet5_forward.1} parent=0 // pred_check_branch
    %21 = sbr.rel (0) target = $region9
  $region8: #{lenet5_forward.1} parent=0 // pred_region
    _
  $region9: #{lenet5_forward.1} parent=0 // pred_fallthru
    _
  // Predicated region
  $region10: #{lenet5_forward.1} parent=0 // pred_check
    _
  $region11: #{lenet5_forward.1} parent=0 // pred_check_branch
    %23 = sbr.rel (0) target = $region13
  $region12: #{lenet5_forward.1} parent=0 // pred_region
    _
  $region13: #{lenet5_forward.1} parent=0 // pred_fallthru
    _
  // Predicated region
  $region14: #{lenet5_forward.1} parent=0 // pred_check
    _
  $region15: #{lenet5_forward.1} parent=0 // pred_check_branch
    %25 = sbr.rel (0) target = $region17
  $region16: #{lenet5_forward.1} parent=0 // pred_region
    _
  $region17: #{lenet5_forward.1} parent=0 // pred_fallthru
    _
  // Predicated region
  $region18: #{lenet5_forward.1} parent=0 // pred_check
    _
  $region19: #{lenet5_forward.1} parent=0 // pred_check_branch
    %27 = sbr.rel (0) target = $region21
  $region20: #{lenet5_forward.1} parent=0 // pred_region
    _
  $region21: #{lenet5_forward.1} parent=0 // pred_fallthru
    _
  // Predicated region
  $region22: #{lenet5_forward.1} parent=0 // pred_check
    _
  $region23: #{lenet5_forward.1} parent=0 // pred_check_branch
    %29 = sbr.rel (0) target = $region25
  $region24: #{lenet5_forward.1} parent=0 // pred_region
    _
  $region25: #{lenet5_forward.1} parent=0 // pred_fallthru
    _
  // Predicated region
  $region26: #{lenet5_forward.1} parent=0 // pred_check
    _
  $region27: #{lenet5_forward.1} parent=0 // pred_check_branch
    %31 = sbr.rel (0) target = $region29
  $region28: #{lenet5_forward.1} parent=0 // pred_region
    _
  $region29: #{lenet5_forward.1} parent=0 // pred_fallthru
    _
  // Predicated region
  $region30: #{lenet5_forward.1} parent=0 // pred_check
    _
  $region31: #{lenet5_forward.1} parent=0 // pred_check_branch
    %33 = sbr.rel (0) target = $region33
  $region32: #{lenet5_forward.1} parent=0 // pred_region
    _
  $region33: #{lenet5_forward.1} parent=0 // pred_fallthru
    _
  // Predicated region
  $region34: #{lenet5_forward.1} parent=0 // pred_check
    _
  $region35: #{lenet5_forward.1} parent=0 // pred_check_branch
    %35 = sbr.rel (0) target = $region37
  $region36: #{lenet5_forward.1} parent=0 // pred_region
    _
  $region37: #{lenet5_forward.1} parent=0 // pred_fallthru
    _
  // Predicated region
  $region38: #{lenet5_forward.1} parent=0 // pred_check
    _
  $region39: #{lenet5_forward.1} parent=0 // pred_check_branch
    %37 = sbr.rel (0) target = $region41
  $region40: #{lenet5_forward.1} parent=0 // pred_region
    _
  $region41: #{lenet5_forward.1} parent=0 // pred_fallthru
    _
  // Predicated region
  $region42: #{lenet5_forward.1} parent=0 // pred_check
    _
  $region43: #{lenet5_forward.1} parent=0 // pred_check_branch
    %39 = sbr.rel (0) target = $region45
  $region44: #{lenet5_forward.1} parent=0 // pred_region
    _
  $region45: #{lenet5_forward.1} parent=0 // pred_fallthru
    _
  // Predicated region
  $region46: #{lenet5_forward.1} parent=0 // pred_check
    _
  $region47: #{lenet5_forward.1} parent=0 // pred_check_branch
    %41 = sbr.rel (0) target = $region49
  $region48: #{lenet5_forward.1} parent=0 // pred_region
    _
  $region49: #{lenet5_forward.1} parent=0 // pred_fallthru
    _
  // Predicated region
  $region50: #{lenet5_forward.1} parent=0 // pred_check
    _
  $region51: #{lenet5_forward.1} parent=0 // pred_check_branch
    %43 = sbr.rel (0) target = $region53
  $region52: #{lenet5_forward.1} parent=0 // pred_region
    _
  $region53: #{lenet5_forward.1} parent=0 // pred_fallthru
    _
  %v45 = vld [vmem:[%s0] sm:$0xff]
  %v46 = vld [vmem:[%s0 + $0x8] sm:$0xff]
  %v47 = vld [vmem:[%s0 + $0x10] sm:$0xff]
  %v48 = vld [vmem:[%s0 + $0x18] sm:$0xff]
  %v49 = vld [vmem:[%s0 + $0x20] sm:$0xff]
  %v50 = vld [vmem:[%s0 + $0x28] sm:$0xff]
  %v51 = vld [vmem:[%s0 + $0x30] sm:$0xff]
  %v52 = vld [vmem:[%s0 + $0x38] sm:$0xff]
  %v53 = vld [vmem:[%s0 + $0x40] sm:$0xff]
  %v54 = vld [vmem:[%s0 + $0x48] sm:$0xff]
  %v55 = vld [vmem:[%s0 + $0x50] sm:$0xff]
  %v56 = vld [vmem:[%s0 + $0x58] sm:$0xff]
  %v57 = vld [vmem:[%s0 + $0x60] sm:$0xff]
  %v58 = vld [vmem:[%s0 + $0x68] sm:$0xff]
  %v59 = vld [vmem:[%s0 + $0x70] sm:$0xff]
  %v60 = vld [vmem:[%s0 + $0x78] sm:$0xff]
  %v61 = vld [vmem:[%s0 + $0x80] sm:$0xff]
  %v62 = vld [vmem:[%s0 + $0x88] sm:$0xff]
  %v63 = vld [vmem:[%s0 + $0x90] sm:$0xff]
  %v64 = vld [vmem:[%s0 + $0x98] sm:$0xff]
  %v65 = vld [vmem:[%s0 + $0xa0] sm:$0xff]
  %v66 = vld [vmem:[%s0 + $0xa8] sm:$0xff]
  %v67 = vld [vmem:[%s0 + $0xb0] sm:$0xff]
  %v68 = vld [vmem:[%s0 + $0xb8] sm:$0xff]
  %v69 = vld [vmem:[%s0 + $0xc0] sm:$0xff]
  %v70 = vld [vmem:[%s0 + $0xc8] sm:$0xff]
  %v71 = vld [vmem:[%s0 + $0xd0] sm:$0xff]
  %v72 = vld [vmem:[%s0 + $0xd8] sm:$0xff]
  %v73 = vld [vmem:[%s0 + $0xe0] sm:$0xff]
  %v74 = vld [vmem:[%s0 + $0xe8] sm:$0xff]
  %v75 = vld [vmem:[%s0 + $0xf0] sm:$0xff]
  %v76 = vld [vmem:[%s0 + $0xf8] sm:$0xff]
  %v77 = vpack.c.bf16 %v46, %v45
  %v78 = vpack.c.bf16 %v48, %v47
  %v79 = vpack.c.bf16 %v50, %v49
  %v80 = vpack.c.bf16 %v52, %v51
  %v81 = vpack.c.bf16 %v54, %v53
  %v82 = vpack.c.bf16 %v56, %v55
  %v83 = vpack.c.bf16 %v58, %v57
  %v84 = vpack.c.bf16 %v60, %v59
  %v85 = vpack.c.bf16 %v62, %v61
  %v86 = vpack.c.bf16 %v64, %v63
  %v87 = vpack.c.bf16 %v66, %v65
  %v88 = vpack.c.bf16 %v68, %v67
  %v89 = vpack.c.bf16 %v70, %v69
  %v90 = vpack.c.bf16 %v72, %v71
  %v91 = vpack.c.bf16 %v74, %v73
  %v92 = vpack.c.bf16 %v76, %v75
  %vm93 = vsmask.f32 7424
  %v95 = vshrl.u32 %v77, 16
  %v97 = vshll.u32 %v77, 16
  %v99 = vrot.slane %v97, 1
  %v100 = vor.u32 %v95, %v99
  %v102 = vshll.u32 %v78, 16
  %v104 = vrot.slane %v102, 1
  %v105 = vsel %vm93, %v100, %v104
  %v106 = vshrl.u32 %v78, 16
  %v108 = vor.u32 %v106, %v104
  %v110 = vshll.u32 %v79, 16
  %v112 = vrot.slane %v110, 1
  %v113 = vsel %vm93, %v108, %v112
  %v114 = vshrl.u32 %v79, 16
  %v116 = vor.u32 %v114, %v112
  %v118 = vshll.u32 %v80, 16
  %v120 = vrot.slane %v118, 1
  %v121 = vsel %vm93, %v116, %v120
  %v122 = vshrl.u32 %v80, 16
  %v124 = vor.u32 %v122, %v120
  %v126 = vshll.u32 %v81, 16
  %v128 = vrot.slane %v126, 1
  %v129 = vsel %vm93, %v124, %v128
  %v130 = vshrl.u32 %v81, 16
  %v132 = vor.u32 %v130, %v128
  %v134 = vshll.u32 %v82, 16
  %v136 = vrot.slane %v134, 1
  %v137 = vsel %vm93, %v132, %v136
  %v138 = vshrl.u32 %v82, 16
  %v140 = vor.u32 %v138, %v136
  %v142 = vshll.u32 %v83, 16
  %v144 = vrot.slane %v142, 1
  %v145 = vsel %vm93, %v140, %v144
  %v146 = vshrl.u32 %v83, 16
  %v148 = vor.u32 %v146, %v144
  %v150 = vshll.u32 %v84, 16
  %v152 = vrot.slane %v150, 1
  %v153 = vsel %vm93, %v148, %v152
  %v154 = vshrl.u32 %v84, 16
  %v156 = vor.u32 %v154, %v152
  %v158 = vshll.u32 %v85, 16
  %v160 = vrot.slane %v158, 1
  %v161 = vsel %vm93, %v156, %v160
  %v162 = vshrl.u32 %v85, 16
  %v164 = vor.u32 %v162, %v160
  %v166 = vshll.u32 %v86, 16
  %v168 = vrot.slane %v166, 1
  %v169 = vsel %vm93, %v164, %v168
  %v170 = vshrl.u32 %v86, 16
  %v172 = vor.u32 %v170, %v168
  %v174 = vshll.u32 %v87, 16
  %v176 = vrot.slane %v174, 1
  %v177 = vsel %vm93, %v172, %v176
  %v178 = vshrl.u32 %v87, 16
  %v180 = vor.u32 %v178, %v176
  %v182 = vshll.u32 %v88, 16
  %v184 = vrot.slane %v182, 1
  %v185 = vsel %vm93, %v180, %v184
  %v186 = vshrl.u32 %v88, 16
  %v188 = vor.u32 %v186, %v184
  %v190 = vshll.u32 %v89, 16
  %v192 = vrot.slane %v190, 1
  %v193 = vsel %vm93, %v188, %v192
  %v194 = vshrl.u32 %v89, 16
  %v196 = vor.u32 %v194, %v192
  %v198 = vshll.u32 %v90, 16
  %v200 = vrot.slane %v198, 1
  %v201 = vsel %vm93, %v196, %v200
  %v202 = vshrl.u32 %v90, 16
  %v204 = vor.u32 %v202, %v200
  %v206 = vshll.u32 %v91, 16
  %v208 = vrot.slane %v206, 1
  %v209 = vsel %vm93, %v204, %v208
  %v210 = vshrl.u32 %v91, 16
  %v212 = vor.u32 %v210, %v208
  %v214 = vshll.u32 %v92, 16
  %v216 = vrot.slane %v214, 1
  %v217 = vsel %vm93, %v212, %v216
  %v218 = vshrl.u32 %v92, 16
  %v220 = vor.u32 %v218, %v216
  %vm223 = vcmask 1047552
  %vm224 = vmand %vm223, %vm93
  %v225 = vsel %vm224, %v220, %v99
  %vm242 = vcmask 1046528
  %v243 = vrot.slane %v77, 1
  %v244 = vrot.slane %v78, 1
  %v245 = vsel %vm242, %v243, %v244
  %v246 = vrot.slane %v79, 1
  %v247 = vsel %vm242, %v244, %v246
  %v248 = vrot.slane %v80, 1
  %v249 = vsel %vm242, %v246, %v248
  %v250 = vrot.slane %v81, 1
  %v251 = vsel %vm242, %v248, %v250
  %v252 = vrot.slane %v82, 1
  %v253 = vsel %vm242, %v250, %v252
  %v254 = vrot.slane %v83, 1
  %v255 = vsel %vm242, %v252, %v254
  %v256 = vrot.slane %v84, 1
  %v257 = vsel %vm242, %v254, %v256
  %v258 = vrot.slane %v85, 1
  %v259 = vsel %vm242, %v256, %v258
  %v260 = vrot.slane %v86, 1
  %v261 = vsel %vm242, %v258, %v260
  %v262 = vrot.slane %v87, 1
  %v263 = vsel %vm242, %v260, %v262
  %v264 = vrot.slane %v88, 1
  %v265 = vsel %vm242, %v262, %v264
  %v266 = vrot.slane %v89, 1
  %v267 = vsel %vm242, %v264, %v266
  %v268 = vrot.slane %v90, 1
  %v269 = vsel %vm242, %v266, %v268
  %v270 = vrot.slane %v91, 1
  %v271 = vsel %vm242, %v268, %v270
  %v272 = vrot.slane %v92, 1
  %v273 = vsel %vm242, %v270, %v272
  %vm274 = vcmask 1046528
  %v277 = vsel %vm274, %v272, %v243
  %vm278 = vsmask.f32 6400
  %v279 = vrot.slane %v95, 1
  %v280 = vrot.slane %v97, 2
  %v281 = vor.u32 %v279, %v280
  %v282 = vrot.slane %v106, 1
  %v283 = vrot.slane %v102, 2
  %v284 = vor.u32 %v282, %v283
  %v285 = vsel %vm278, %v281, %v284
  %v286 = vrot.slane %v114, 1
  %v287 = vrot.slane %v110, 2
  %v288 = vor.u32 %v286, %v287
  %v289 = vsel %vm278, %v284, %v288
  %v290 = vrot.slane %v122, 1
  %v291 = vrot.slane %v118, 2
  %v292 = vor.u32 %v290, %v291
  %v293 = vsel %vm278, %v288, %v292
  %v294 = vrot.slane %v130, 1
  %v295 = vrot.slane %v126, 2
  %v296 = vor.u32 %v294, %v295
  %v297 = vsel %vm278, %v292, %v296
  %v298 = vrot.slane %v138, 1
  %v299 = vrot.slane %v134, 2
  %v300 = vor.u32 %v298, %v299
  %v301 = vsel %vm278, %v296, %v300
  %v302 = vrot.slane %v146, 1
  %v303 = vrot.slane %v142, 2
  %v304 = vor.u32 %v302, %v303
  %v305 = vsel %vm278, %v300, %v304
  %v306 = vrot.slane %v154, 1
  %v307 = vrot.slane %v150, 2
  %v308 = vor.u32 %v306, %v307
  %v309 = vsel %vm278, %v304, %v308
  %v310 = vrot.slane %v162, 1
  %v311 = vrot.slane %v158, 2
  %v312 = vor.u32 %v310, %v311
  %v313 = vsel %vm278, %v308, %v312
  %v314 = vrot.slane %v170, 1
  %v315 = vrot.slane %v166, 2
  %v316 = vor.u32 %v314, %v315
  %v317 = vsel %vm278, %v312, %v316
  %v318 = vrot.slane %v178, 1
  %v319 = vrot.slane %v174, 2
  %v320 = vor.u32 %v318, %v319
  %v321 = vsel %vm278, %v316, %v320
  %v322 = vrot.slane %v186, 1
  %v323 = vrot.slane %v182, 2
  %v324 = vor.u32 %v322, %v323
  %v325 = vsel %vm278, %v320, %v324
  %v326 = vrot.slane %v194, 1
  %v327 = vrot.slane %v190, 2
  %v328 = vor.u32 %v326, %v327
  %v329 = vsel %vm278, %v324, %v328
  %v330 = vrot.slane %v202, 1
  %v331 = vrot.slane %v198, 2
  %v332 = vor.u32 %v330, %v331
  %v333 = vsel %vm278, %v328, %v332
  %v334 = vrot.slane %v210, 1
  %v335 = vrot.slane %v206, 2
  %v336 = vor.u32 %v334, %v335
  %v337 = vsel %vm278, %v332, %v336
  %v338 = vrot.slane %v218, 1
  %v339 = vrot.slane %v214, 2
  %v340 = vor.u32 %v338, %v339
  %v341 = vsel %vm278, %v336, %v340
  %vm344 = vmand %vm242, %vm278
  %v345 = vsel %vm344, %v340, %v281
  %vm346 = vcmask 1045504
  %v347 = vrot.slane %v77, 2
  %v348 = vrot.slane %v78, 2
  %v349 = vsel %vm346, %v347, %v348
  %v350 = vrot.slane %v79, 2
  %v351 = vsel %vm346, %v348, %v350
  %v352 = vrot.slane %v80, 2
  %v353 = vsel %vm346, %v350, %v352
  %v354 = vrot.slane %v81, 2
  %v355 = vsel %vm346, %v352, %v354
  %v356 = vrot.slane %v82, 2
  %v357 = vsel %vm346, %v354, %v356
  %v358 = vrot.slane %v83, 2
  %v359 = vsel %vm346, %v356, %v358
  %v360 = vrot.slane %v84, 2
  %v361 = vsel %vm346, %v358, %v360
  %v362 = vrot.slane %v85, 2
  %v363 = vsel %vm346, %v360, %v362
  %v364 = vrot.slane %v86, 2
  %v365 = vsel %vm346, %v362, %v364
  %v366 = vrot.slane %v87, 2
  %v367 = vsel %vm346, %v364, %v366
  %v368 = vrot.slane %v88, 2
  %v369 = vsel %vm346, %v366, %v368
  %v370 = vrot.slane %v89, 2
  %v371 = vsel %vm346, %v368, %v370
  %v372 = vrot.slane %v90, 2
  %v373 = vsel %vm346, %v370, %v372
  %v374 = vrot.slane %v91, 2
  %v375 = vsel %vm346, %v372, %v374
  %v376 = vrot.slane %v92, 2
  %v377 = vsel %vm346, %v374, %v376
  %vm378 = vcmask 1045504
  %v381 = vsel %vm378, %v376, %v347
  %383 = vrot.lane.b32.xlu0 %v105, 32
  %v384 = vpop.permute.xlu0 %383
  %385 = vrot.lane.b32.xlu0 %v113, 32
  %v386 = vpop.permute.xlu0 %385
  %387 = vrot.lane.b32.xlu0 %v121, 32
  %v388 = vpop.permute.xlu0 %387
  %389 = vrot.lane.b32.xlu0 %v129, 32
  %v390 = vpop.permute.xlu0 %389
  %391 = vrot.lane.b32.xlu0 %v137, 32
  %v392 = vpop.permute.xlu0 %391
  %393 = vrot.lane.b32.xlu0 %v145, 32
  %v394 = vpop.permute.xlu0 %393
  %395 = vrot.lane.b32.xlu0 %v153, 32
  %v396 = vpop.permute.xlu0 %395
  %397 = vrot.lane.b32.xlu0 %v161, 32
  %v398 = vpop.permute.xlu0 %397
  %399 = vrot.lane.b32.xlu0 %v169, 32
  %v400 = vpop.permute.xlu0 %399
  %401 = vrot.lane.b32.xlu0 %v177, 32
  %v402 = vpop.permute.xlu0 %401
  %403 = vrot.lane.b32.xlu0 %v185, 32
  %v404 = vpop.permute.xlu0 %403
  %405 = vrot.lane.b32.xlu0 %v193, 32
  %v406 = vpop.permute.xlu0 %405
  %407 = vrot.lane.b32.xlu0 %v201, 32
  %v408 = vpop.permute.xlu0 %407
  %409 = vrot.lane.b32.xlu0 %v209, 32
  %v410 = vpop.permute.xlu0 %409
  %411 = vrot.lane.b32.xlu0 %v217, 32
  %v412 = vpop.permute.xlu0 %411
  %413 = vrot.lane.b32.xlu0 %v225, 32
  %v414 = vpop.permute.xlu0 %413
  %416 = vrot.lane.b32.xlu0 %v245, 64
  %v417 = vpop.permute.xlu0 %416
  %418 = vrot.lane.b32.xlu0 %v247, 64
  %v419 = vpop.permute.xlu0 %418
  %420 = vrot.lane.b32.xlu0 %v249, 64
  %v421 = vpop.permute.xlu0 %420
  %422 = vrot.lane.b32.xlu0 %v251, 64
  %v423 = vpop.permute.xlu0 %422
  %424 = vrot.lane.b32.xlu0 %v253, 64
  %v425 = vpop.permute.xlu0 %424
  %426 = vrot.lane.b32.xlu0 %v255, 64
  %v427 = vpop.permute.xlu0 %426
  %428 = vrot.lane.b32.xlu0 %v257, 64
  %v429 = vpop.permute.xlu0 %428
  %430 = vrot.lane.b32.xlu0 %v259, 64
  %v431 = vpop.permute.xlu0 %430
  %432 = vrot.lane.b32.xlu0 %v261, 64
  %v433 = vpop.permute.xlu0 %432
  %434 = vrot.lane.b32.xlu0 %v263, 64
  %v435 = vpop.permute.xlu0 %434
  %436 = vrot.lane.b32.xlu0 %v265, 64
  %v437 = vpop.permute.xlu0 %436
  %438 = vrot.lane.b32.xlu0 %v267, 64
  %v439 = vpop.permute.xlu0 %438
  %440 = vrot.lane.b32.xlu0 %v269, 64
  %v441 = vpop.permute.xlu0 %440
  %442 = vrot.lane.b32.xlu0 %v271, 64
  %v443 = vpop.permute.xlu0 %442
  %444 = vrot.lane.b32.xlu0 %v273, 64
  %v445 = vpop.permute.xlu0 %444
  %446 = vrot.lane.b32.xlu0 %v277, 64
  %v447 = vpop.permute.xlu0 %446
  %449 = vrot.lane.b32.xlu0 %v285, 96
  %v450 = vpop.permute.xlu0 %449
  %451 = vrot.lane.b32.xlu0 %v289, 96
  %v452 = vpop.permute.xlu0 %451
  %453 = vrot.lane.b32.xlu0 %v293, 96
  %v454 = vpop.permute.xlu0 %453
  %455 = vrot.lane.b32.xlu0 %v297, 96
  %v456 = vpop.permute.xlu0 %455
  %457 = vrot.lane.b32.xlu0 %v301, 96
  %v458 = vpop.permute.xlu0 %457
  %459 = vrot.lane.b32.xlu0 %v305, 96
  %v460 = vpop.permute.xlu0 %459
  %461 = vrot.lane.b32.xlu0 %v309, 96
  %v462 = vpop.permute.xlu0 %461
  %463 = vrot.lane.b32.xlu0 %v313, 96
  %v464 = vpop.permute.xlu0 %463
  %465 = vrot.lane.b32.xlu0 %v317, 96
  %v466 = vpop.permute.xlu0 %465
  %467 = vrot.lane.b32.xlu0 %v321, 96
  %v468 = vpop.permute.xlu0 %467
  %469 = vrot.lane.b32.xlu0 %v325, 96
  %v470 = vpop.permute.xlu0 %469
  %471 = vrot.lane.b32.xlu0 %v329, 96
  %v472 = vpop.permute.xlu0 %471
  %473 = vrot.lane.b32.xlu0 %v333, 96
  %v474 = vpop.permute.xlu0 %473
  %475 = vrot.lane.b32.xlu0 %v337, 96
  %v476 = vpop.permute.xlu0 %475
  %477 = vrot.lane.b32.xlu0 %v341, 96
  %v478 = vpop.permute.xlu0 %477
  %479 = vrot.lane.b32.xlu0 %v345, 96
  %v480 = vpop.permute.xlu0 %479
  %vm481 = vcmask 261120
  %v483 = vsel %vm481, %v77, %v384
  %v485 = vsel %vm481, %v78, %v386
  %v487 = vsel %vm481, %v79, %v388
  %v489 = vsel %vm481, %v80, %v390
  %v491 = vsel %vm481, %v81, %v392
  %v493 = vsel %vm481, %v82, %v394
  %v495 = vsel %vm481, %v83, %v396
  %v497 = vsel %vm481, %v84, %v398
  %v499 = vsel %vm481, %v85, %v400
  %v501 = vsel %vm481, %v86, %v402
  %v503 = vsel %vm481, %v87, %v404
  %v505 = vsel %vm481, %v88, %v406
  %v507 = vsel %vm481, %v89, %v408
  %v509 = vsel %vm481, %v90, %v410
  %v511 = vsel %vm481, %v91, %v412
  %v513 = vsel %vm481, %v92, %v414
  %vm514 = vcmask 523264
  %v516 = vsel %vm514, %v483, %v417
  %v518 = vsel %vm514, %v485, %v419
  %v520 = vsel %vm514, %v487, %v421
  %v522 = vsel %vm514, %v489, %v423
  %v524 = vsel %vm514, %v491, %v425
  %v526 = vsel %vm514, %v493, %v427
  %v528 = vsel %vm514, %v495, %v429
  %v530 = vsel %vm514, %v497, %v431
  %v532 = vsel %vm514, %v499, %v433
  %v534 = vsel %vm514, %v501, %v435
  %v536 = vsel %vm514, %v503, %v437
  %v538 = vsel %vm514, %v505, %v439
  %v540 = vsel %vm514, %v507, %v441
  %v542 = vsel %vm514, %v509, %v443
  %v544 = vsel %vm514, %v511, %v445
  %v546 = vsel %vm514, %v513, %v447
  %vm547 = vcmask 785408
  %v549 = vsel %vm547, %v516, %v450
  %v552 = vsel %vm547, %v518, %v452
  %v555 = vsel %vm547, %v520, %v454
  %v558 = vsel %vm547, %v522, %v456
  %v561 = vsel %vm547, %v524, %v458
  %v564 = vsel %vm547, %v526, %v460
  %v567 = vsel %vm547, %v528, %v462
  %v570 = vsel %vm547, %v530, %v464
  %v573 = vsel %vm547, %v532, %v466
  %v576 = vsel %vm547, %v534, %v468
  %v579 = vsel %vm547, %v536, %v470
  %v582 = vsel %vm547, %v538, %v472
  %v585 = vsel %vm547, %v540, %v474
  %v588 = vsel %vm547, %v542, %v476
  %v591 = vsel %vm547, %v544, %v478
  %v594 = vsel %vm547, %v546, %v480
  %v596 = vld [vmem:[%s1] sm:$0xff]
  %v597 = vld [vmem:[%s1 + $0x8] sm:$0xff]
  %v598 = vld [vmem:[%s1 + $0x10] sm:$0xff]
  %v599 = vld [vmem:[%s1 + $0x18] sm:$0xff]
  %v600 = vld [vmem:[%s1 + $0x20] sm:$0xff]
  %v601 = vld [vmem:[%s1 + $0x28] sm:$0xff]
  %v602 = vld [vmem:[%s1 + $0x30] sm:$0xff]
  %v603 = vld [vmem:[%s1 + $0x38] sm:$0xff]
  %v604 = vld [vmem:[%s1 + $0x40] sm:$0xff]
  %v605 = vld [vmem:[%s1 + $0x48] sm:$0xff]
  %v606 = vld [vmem:[%s1 + $0x50] sm:$0xff]
  %v607 = vld [vmem:[%s1 + $0x58] sm:$0xff]
  %v608 = vld [vmem:[%s1 + $0x60] sm:$0xff]
  %v609 = vld [vmem:[%s1 + $0x68] sm:$0xff]
  %v610 = vld [vmem:[%s1 + $0x70] sm:$0xff]
  %v611 = vld [vmem:[%s1 + $0x78] sm:$0xff]
  %v612 = vld [vmem:[%s1 + $0x80] sm:$0xff]
  %v613 = vld [vmem:[%s1 + $0x88] sm:$0xff]
  %v614 = vld [vmem:[%s1 + $0x90] sm:$0xff]
  %v615 = vld [vmem:[%s1 + $0x98] sm:$0xff]
  %v616 = vld [vmem:[%s2] sm:$0x3]
  %v618 = vlaneseq
  %v619 = vshrl.u32 %v618, 7
  %v620 = vsub.s32 0, %v619
  %v621 = vrot.slane %v616, %v620
  %v622 = vlaneseq
  %v623 = vshrl.u32 %v622, 7
  %v624 = vsub.s32 1, %v623
  %v625 = vrot.slane %v616, %v624
  %v648 = vunpack.c.l.b16 %v596
  %v649 = vunpack.c.h.b16 %v596
  %v650 = vunpack.c.l.b16 %v597
  %v651 = vunpack.c.h.b16 %v597
  %v652 = vunpack.c.l.b16 %v598
  %v653 = vunpack.c.h.b16 %v598
  %v654 = vunpack.c.l.b16 %v599
  %v655 = vunpack.c.h.b16 %v599
  %v656 = vunpack.c.l.b16 %v600
  %v657 = vunpack.c.h.b16 %v600
  %v658 = vunpack.c.l.b16 %v601
  %v659 = vunpack.c.h.b16 %v601
  %v660 = vunpack.c.l.b16 %v602
  %v661 = vunpack.c.h.b16 %v602
  %v662 = vunpack.c.l.b16 %v603
  %v663 = vunpack.c.h.b16 %v603
  %v664 = vunpack.c.l.b16 %v604
  %v665 = vunpack.c.h.b16 %v604
  %v666 = vunpack.c.l.b16 %v605
  %v667 = vunpack.c.h.b16 %v605
  %v668 = vunpack.c.l.b16 %v606
  %v669 = vunpack.c.h.b16 %v606
  %v670 = vunpack.c.l.b16 %v607
  %v671 = vunpack.c.h.b16 %v607
  %v672 = vunpack.c.l.b16 %v608
  %v673 = vunpack.c.h.b16 %v608
  %v674 = vunpack.c.l.b16 %v609
  %v675 = vunpack.c.h.b16 %v609
  %v676 = vunpack.c.l.b16 %v610
  %v677 = vunpack.c.h.b16 %v610
  %v678 = vunpack.c.l.b16 %v611
  %v679 = vunpack.c.h.b16 %v611
  %v680 = vunpack.c.l.b16 %v612
  %v681 = vunpack.c.h.b16 %v612
  %v682 = vunpack.c.l.b16 %v613
  %v683 = vunpack.c.h.b16 %v613
  %v684 = vunpack.c.l.b16 %v614
  %v685 = vunpack.c.h.b16 %v614
  %v686 = vunpack.c.l.b16 %v615
  %v687 = vunpack.c.h.b16 %v615
  %v688 = vpack.c.b16 %v650, %v648
  %v689 = vpack.c.b16 %v651, %v649
  %v690 = vpack.c.b16 %v654, %v652
  %v691 = vpack.c.b16 %v655, %v653
  %v692 = vpack.c.b16 %v658, %v656
  %v693 = vpack.c.b16 %v659, %v657
  %v694 = vpack.c.b16 %v662, %v660
  %v695 = vpack.c.b16 %v663, %v661
  %v696 = vpack.c.b16 %v666, %v664
  %v697 = vpack.c.b16 %v667, %v665
  %v698 = vpack.c.b16 %v670, %v668
  %v699 = vpack.c.b16 %v671, %v669
  %v700 = vpack.c.b16 %v674, %v672
  %v701 = vpack.c.b16 %v675, %v673
  %v702 = vpack.c.b16 %v678, %v676
  %v703 = vpack.c.b16 %v679, %v677
  %v704 = vpack.c.b16 %v682, %v680
  %v705 = vpack.c.b16 %v683, %v681
  %v706 = vpack.c.b16 %v686, %v684
  %v707 = vpack.c.b16 %v687, %v685
  %v729 = vsel %vm481, %v349, 0
  %v732 = vsel %vm481, %v351, 0
  %v735 = vsel %vm481, %v353, 0
  %v738 = vsel %vm481, %v355, 0
  %v741 = vsel %vm481, %v357, 0
  %v744 = vsel %vm481, %v359, 0
  %v747 = vsel %vm481, %v361, 0
  %v750 = vsel %vm481, %v363, 0
  %v753 = vsel %vm481, %v365, 0
  %v756 = vsel %vm481, %v367, 0
  %v759 = vsel %vm481, %v369, 0
  %v762 = vsel %vm481, %v371, 0
  %v765 = vsel %vm481, %v373, 0
  %v768 = vsel %vm481, %v375, 0
  %v771 = vsel %vm481, %v377, 0
  %v773 = vsel %vm481, %v381, 0
  %775 = vmatprep.subr.bf16.mxu0 %v689
  %776 = vmatpush1.bf16.msra.mxu0 %v688
  %777 = vmatprep.subr.bf16.mxu0 %v691
  %778 = vmatpush1.bf16.msra.mxu0 %v690
  %779 = vmatprep.subr.bf16.mxu0 %v693
  %780 = vmatpush1.bf16.msra.mxu0 %v692
  %781 = vmatprep.subr.bf16.mxu0 %v695
  %782 = vmatpush1.bf16.msra.mxu0 %v694
  %783 = vmatprep.subr.bf16.mxu0 %v697
  %784 = vmatpush1.bf16.msra.mxu0 %v696
  %785 = vmatprep.subr.bf16.mxu0 %v699
  %786 = vmatpush1.bf16.msra.mxu0 %v698
  %787 = vmatprep.subr.bf16.mxu0 %v701
  %788 = vmatpush1.bf16.msra.mxu0 %v700
  %789 = vmatprep.subr.bf16.mxu0 %v703
  %790 = vmatpush1.bf16.msra.mxu0 %v702
  %791 = vmatprep.subr.bf16.mxu0 %v705
  %792 = vmatpush1.bf16.msra.mxu0 %v704
  %793 = vmatprep.subr.bf16.mxu0 %v707
  %794 = vmatpush1.bf16.msra.mxu0 %v706
  %795 = vmatprep.subr.bf16.mxu0 0
  %796 = vmatpush1.bf16.msra.mxu0 0
  %797 = vmatprep.subr.bf16.mxu0 0
  %798 = vmatpush1.bf16.msra.mxu0 0
  %799 = vmatprep.subr.bf16.mxu0 0
  %800 = vmatpush1.bf16.msra.mxu0 0
  %801 = vmatprep.subr.bf16.mxu0 0
  %802 = vmatpush1.bf16.msra.mxu0 0
  %803 = vmatprep.subr.bf16.mxu0 0
  %804 = vmatpush1.bf16.msra.mxu0 0
  %805 = vmatprep.subr.bf16.mxu0 0
  %806 = vmatpush1.bf16.msra.mxu0 0
  %807 = vmatprep.mubr.bf16.mxu0 %v729
  %808 = vmatmul.mubr.bf16.gmra.mrb[0].mxu0 %v549
  %v809 = vpop.f32.mrb[0].mxu0
  %v810 = vadd.f32 %v621, %v809
  %v811 = vpop.f32.mrb[0].mxu0
  %v812 = vadd.f32 %v625, %v811
  %v813 = vpop.f32.mrb[0].mxu0
  %v814 = vadd.f32 %v621, %v813
  %v815 = vpop.f32.mrb[0].mxu0
  %v816 = vadd.f32 %v625, %v815
  %817 = vmatprep.mubr.bf16.mxu0 %v732
  %818 = vmatmul.mubr.bf16.gmra.mrb[0].mxu0 %v552
  %v819 = vpop.f32.mrb[0].mxu0
  %v820 = vadd.f32 %v621, %v819
  %v821 = vpop.f32.mrb[0].mxu0
  %v822 = vadd.f32 %v625, %v821
  %v823 = vpop.f32.mrb[0].mxu0
  %v824 = vadd.f32 %v621, %v823
  %v825 = vpop.f32.mrb[0].mxu0
  %v826 = vadd.f32 %v625, %v825
  %827 = vmatprep.mubr.bf16.mxu0 %v735
  %828 = vmatmul.mubr.bf16.gmra.mrb[0].mxu0 %v555
  %v829 = vpop.f32.mrb[0].mxu0
  %v830 = vadd.f32 %v621, %v829
  %v831 = vpop.f32.mrb[0].mxu0
  %v832 = vadd.f32 %v625, %v831
  %v833 = vpop.f32.mrb[0].mxu0
  %v834 = vadd.f32 %v621, %v833
  %v835 = vpop.f32.mrb[0].mxu0
  %v836 = vadd.f32 %v625, %v835
  %837 = vmatprep.mubr.bf16.mxu0 %v738
  %838 = vmatmul.mubr.bf16.gmra.mrb[0].mxu0 %v558
  %v839 = vpop.f32.mrb[0].mxu0
  %v840 = vadd.f32 %v621, %v839
  %v841 = vpop.f32.mrb[0].mxu0
  %v842 = vadd.f32 %v625, %v841
  %v843 = vpop.f32.mrb[0].mxu0
  %v844 = vadd.f32 %v621, %v843
  %v845 = vpop.f32.mrb[0].mxu0
  %v846 = vadd.f32 %v625, %v845
  %847 = vmatprep.mubr.bf16.mxu0 %v741
  %848 = vmatmul.mubr.bf16.gmra.mrb[0].mxu0 %v561
  %v849 = vpop.f32.mrb[0].mxu0
  %v850 = vadd.f32 %v621, %v849
  %v851 = vpop.f32.mrb[0].mxu0
  %v852 = vadd.f32 %v625, %v851
  %v853 = vpop.f32.mrb[0].mxu0
  %v854 = vadd.f32 %v621, %v853
  %v855 = vpop.f32.mrb[0].mxu0
  %v856 = vadd.f32 %v625, %v855
  %857 = vmatprep.mubr.bf16.mxu0 %v744
  %858 = vmatmul.mubr.bf16.gmra.mrb[0].mxu0 %v564
  %v859 = vpop.f32.mrb[0].mxu0
  %v860 = vadd.f32 %v621, %v859
  %v861 = vpop.f32.mrb[0].mxu0
  %v862 = vadd.f32 %v625, %v861
  %v863 = vpop.f32.mrb[0].mxu0
  %v864 = vadd.f32 %v621, %v863
  %v865 = vpop.f32.mrb[0].mxu0
  %v866 = vadd.f32 %v625, %v865
  %867 = vmatprep.mubr.bf16.mxu0 %v747
  %868 = vmatmul.mubr.bf16.gmra.mrb[0].mxu0 %v567
  %v869 = vpop.f32.mrb[0].mxu0
  %v870 = vadd.f32 %v621, %v869
  %v871 = vpop.f32.mrb[0].mxu0
  %v872 = vadd.f32 %v625, %v871
  %v873 = vpop.f32.mrb[0].mxu0
  %v874 = vadd.f32 %v621, %v873
  %v875 = vpop.f32.mrb[0].mxu0
  %v876 = vadd.f32 %v625, %v875
  %877 = vmatprep.mubr.bf16.mxu0 %v750
  %878 = vmatmul.mubr.bf16.gmra.mrb[0].mxu0 %v570
  %v879 = vpop.f32.mrb[0].mxu0
  %v880 = vadd.f32 %v621, %v879
  %v881 = vpop.f32.mrb[0].mxu0
  %v882 = vadd.f32 %v625, %v881
  %v883 = vpop.f32.mrb[0].mxu0
  %v884 = vadd.f32 %v621, %v883
  %v885 = vpop.f32.mrb[0].mxu0
  %v886 = vadd.f32 %v625, %v885
  %887 = vmatprep.mubr.bf16.mxu0 %v753
  %888 = vmatmul.mubr.bf16.gmra.mrb[0].mxu0 %v573
  %v889 = vpop.f32.mrb[0].mxu0
  %v890 = vadd.f32 %v621, %v889
  %v891 = vpop.f32.mrb[0].mxu0
  %v892 = vadd.f32 %v625, %v891
  %v893 = vpop.f32.mrb[0].mxu0
  %v894 = vadd.f32 %v621, %v893
  %v895 = vpop.f32.mrb[0].mxu0
  %v896 = vadd.f32 %v625, %v895
  %897 = vmatprep.mubr.bf16.mxu0 %v756
  %898 = vmatmul.mubr.bf16.gmra.mrb[0].mxu0 %v576
  %v899 = vpop.f32.mrb[0].mxu0
  %v900 = vadd.f32 %v621, %v899
  %v901 = vpop.f32.mrb[0].mxu0
  %v902 = vadd.f32 %v625, %v901
  %v903 = vpop.f32.mrb[0].mxu0
  %v904 = vadd.f32 %v621, %v903
  %v905 = vpop.f32.mrb[0].mxu0
  %v906 = vadd.f32 %v625, %v905
  %907 = vmatprep.mubr.bf16.mxu0 %v759
  %908 = vmatmul.mubr.bf16.gmra.mrb[0].mxu0 %v579
  %v909 = vpop.f32.mrb[0].mxu0
  %v910 = vadd.f32 %v621, %v909
  %v911 = vpop.f32.mrb[0].mxu0
  %v912 = vadd.f32 %v625, %v911
  %v913 = vpop.f32.mrb[0].mxu0
  %v914 = vadd.f32 %v621, %v913
  %v915 = vpop.f32.mrb[0].mxu0
  %v916 = vadd.f32 %v625, %v915
  %917 = vmatprep.mubr.bf16.mxu0 %v762
  %918 = vmatmul.mubr.bf16.gmra.mrb[0].mxu0 %v582
  %v919 = vpop.f32.mrb[0].mxu0
  %v920 = vadd.f32 %v621, %v919
  %v921 = vpop.f32.mrb[0].mxu0
  %v922 = vadd.f32 %v625, %v921
  %v923 = vpop.f32.mrb[0].mxu0
  %v924 = vadd.f32 %v621, %v923
  %v925 = vpop.f32.mrb[0].mxu0
  %v926 = vadd.f32 %v625, %v925
  %927 = vmatprep.mubr.bf16.mxu0 %v765
  %928 = vmatmul.mubr.bf16.gmra.mrb[0].mxu0 %v585
  %v929 = vpop.f32.mrb[0].mxu0
  %v930 = vadd.f32 %v621, %v929
  %v931 = vpop.f32.mrb[0].mxu0
  %v932 = vadd.f32 %v625, %v931
  %v933 = vpop.f32.mrb[0].mxu0
  %v934 = vadd.f32 %v621, %v933
  %v935 = vpop.f32.mrb[0].mxu0
  %v936 = vadd.f32 %v625, %v935
  %937 = vmatprep.mubr.bf16.mxu0 %v768
  %938 = vmatmul.mubr.bf16.gmra.mrb[0].mxu0 %v588
  %v939 = vpop.f32.mrb[0].mxu0
  %v940 = vadd.f32 %v621, %v939
  %v941 = vpop.f32.mrb[0].mxu0
  %v942 = vadd.f32 %v625, %v941
  %v943 = vpop.f32.mrb[0].mxu0
  %v944 = vadd.f32 %v621, %v943
  %v945 = vpop.f32.mrb[0].mxu0
  %v946 = vadd.f32 %v625, %v945
  %947 = vmatprep.mubr.bf16.mxu0 %v771
  %948 = vmatmul.mubr.bf16.gmra.mrb[0].mxu0 %v591
  %v949 = vpop.f32.mrb[0].mxu0
  %v950 = vadd.f32 %v621, %v949
  %v951 = vpop.f32.mrb[0].mxu0
  %v952 = vadd.f32 %v625, %v951
  %v953 = vpop.f32.mrb[0].mxu0
  %v954 = vadd.f32 %v621, %v953
  %v955 = vpop.f32.mrb[0].mxu0
  %v956 = vadd.f32 %v625, %v955
  %957 = vmatprep.mubr.bf16.mxu0 %v773
  %958 = vmatmul.mubr.bf16.gmra.mrb[0].mxu0 %v594
  %v959 = vpop.f32.mrb[0].mxu0
  %v960 = vadd.f32 %v621, %v959
  %v961 = vpop.f32.mrb[0].mxu0
  %v962 = vadd.f32 %v625, %v961
  %v963 = vpop.f32.mrb[0].mxu0
  %v964 = vadd.f32 %v621, %v963
  %v965 = vpop.f32.mrb[0].mxu0
  %v966 = vadd.f32 %v625, %v965
  %967 = vdwg.mxu0
  %v968 = vtanh.pop %v810
  %v969 = vtanh.pop %v812
  %v970 = vtanh.pop %v814
  %v971 = vtanh.pop %v816
  %v972 = vtanh.pop %v820
  %v973 = vtanh.pop %v822
  %v974 = vtanh.pop %v824
  %v975 = vtanh.pop %v826
  %v976 = vtanh.pop %v830
  %v977 = vtanh.pop %v832
  %v978 = vtanh.pop %v834
  %v979 = vtanh.pop %v836
  %v980 = vtanh.pop %v840
  %v981 = vtanh.pop %v842
  %v982 = vtanh.pop %v844
  %v983 = vtanh.pop %v846
  %v984 = vtanh.pop %v850
  %v985 = vtanh.pop %v852
  %v986 = vtanh.pop %v854
  %v987 = vtanh.pop %v856
  %v988 = vtanh.pop %v860
  %v989 = vtanh.pop %v862
  %v990 = vtanh.pop %v864
  %v991 = vtanh.pop %v866
  %v992 = vtanh.pop %v870
  %v993 = vtanh.pop %v872
  %v994 = vtanh.pop %v874
  %v995 = vtanh.pop %v876
  %v996 = vtanh.pop %v880
  %v997 = vtanh.pop %v882
  %v998 = vtanh.pop %v884
  %v999 = vtanh.pop %v886
  %v1000 = vtanh.pop %v890
  %v1001 = vtanh.pop %v892
  %v1002 = vtanh.pop %v894
  %v1003 = vtanh.pop %v896
  %v1004 = vtanh.pop %v900
  %v1005 = vtanh.pop %v902
  %v1006 = vtanh.pop %v904
  %v1007 = vtanh.pop %v906
  %v1008 = vtanh.pop %v910
  %v1009 = vtanh.pop %v912
  %v1010 = vtanh.pop %v914
  %v1011 = vtanh.pop %v916
  %v1012 = vtanh.pop %v920
  %v1013 = vtanh.pop %v922
  %v1014 = vtanh.pop %v924
  %v1015 = vtanh.pop %v926
  %v1016 = vtanh.pop %v930
  %v1017 = vtanh.pop %v932
  %v1018 = vtanh.pop %v934
  %v1019 = vtanh.pop %v936
  %v1020 = vtanh.pop %v940
  %v1021 = vtanh.pop %v942
  %v1022 = vtanh.pop %v944
  %v1023 = vtanh.pop %v946
  %v1024 = vtanh.pop %v950
  %v1025 = vtanh.pop %v952
  %v1026 = vtanh.pop %v954
  %v1027 = vtanh.pop %v956
  %v1028 = vtanh.pop %v960
  %v1029 = vtanh.pop %v962
  %v1030 = vtanh.pop %v964
  %v1031 = vtanh.pop %v966
  %v1032 = vpack.c.bf16 %v970, %v968
  %v1033 = vpack.c.bf16 %v971, %v969
  %v1034 = vpack.c.bf16 %v974, %v972
  %v1035 = vpack.c.bf16 %v975, %v973
  %v1036 = vpack.c.bf16 %v978, %v976
  %v1037 = vpack.c.bf16 %v979, %v977
  %v1038 = vpack.c.bf16 %v982, %v980
  %v1039 = vpack.c.bf16 %v983, %v981
  %v1040 = vpack.c.bf16 %v986, %v984
  %v1041 = vpack.c.bf16 %v987, %v985
  %v1042 = vpack.c.bf16 %v990, %v988
  %v1043 = vpack.c.bf16 %v991, %v989
  %v1044 = vpack.c.bf16 %v994, %v992
  %v1045 = vpack.c.bf16 %v995, %v993
  %v1046 = vpack.c.bf16 %v998, %v996
  %v1047 = vpack.c.bf16 %v999, %v997
  %v1048 = vpack.c.bf16 %v1002, %v1000
  %v1049 = vpack.c.bf16 %v1003, %v1001
  %v1050 = vpack.c.bf16 %v1006, %v1004
  %v1051 = vpack.c.bf16 %v1007, %v1005
  %v1052 = vpack.c.bf16 %v1010, %v1008
  %v1053 = vpack.c.bf16 %v1011, %v1009
  %v1054 = vpack.c.bf16 %v1014, %v1012
  %v1055 = vpack.c.bf16 %v1015, %v1013
  %v1056 = vpack.c.bf16 %v1018, %v1016
  %v1057 = vpack.c.bf16 %v1019, %v1017
  %v1058 = vpack.c.bf16 %v1022, %v1020
  %v1059 = vpack.c.bf16 %v1023, %v1021
  %v1060 = vpack.c.bf16 %v1026, %v1024
  %v1061 = vpack.c.bf16 %v1027, %v1025
  %v1062 = vpack.c.bf16 %v1030, %v1028
  %v1063 = vpack.c.bf16 %v1031, %v1029
  %v1064 = vld [vmem:[%s3] sm:$0xf]
  %v1065 = vld [vmem:[%s3 + $0x4] sm:$0xf]
  %v1066 = vld [vmem:[%s3 + $0x8] sm:$0xf]
  %v1067 = vld [vmem:[%s3 + $0xc] sm:$0xf]
  %v1068 = vld [vmem:[%s3 + $0x10] sm:$0xf]
  %v1069 = vld [vmem:[%s3 + $0x14] sm:$0xf]
  %v1070 = vld [vmem:[%s3 + $0x18] sm:$0xf]
  %v1071 = vld [vmem:[%s3 + $0x1c] sm:$0xf]
  %v1072 = vld [vmem:[%s3 + $0x20] sm:$0xf]
  %v1073 = vld [vmem:[%s3 + $0x24] sm:$0xf]
  %v1074 = vld [vmem:[%s3 + $0x28] sm:$0xf]
  %v1075 = vld [vmem:[%s3 + $0x2c] sm:$0xf]
  %v1076 = vld [vmem:[%s3 + $0x30] sm:$0xf]
  %v1077 = vld [vmem:[%s3 + $0x34] sm:$0xf]
  %v1078 = vld [vmem:[%s3 + $0x38] sm:$0xf]
  %v1079 = vld [vmem:[%s3 + $0x3c] sm:$0xf]
  %v1080 = vld [vmem:[%s3 + $0x40] sm:$0xf]
  %v1081 = vld [vmem:[%s3 + $0x44] sm:$0xf]
  %v1082 = vld [vmem:[%s3 + $0x48] sm:$0xf]
  %v1083 = vld [vmem:[%s3 + $0x4c] sm:$0xf]
  %v1084 = vld [vmem:[%s3 + $0x50] sm:$0xf]
  %v1106 = vunpack.c.l.b16 %v1064
  %v1107 = vunpack.c.l.b16 %v1065
  %v1108 = vunpack.c.l.b16 %v1066
  %v1109 = vunpack.c.l.b16 %v1067
  %v1110 = vunpack.c.l.b16 %v1068
  %v1111 = vunpack.c.l.b16 %v1069
  %v1112 = vunpack.c.l.b16 %v1070
  %v1113 = vunpack.c.l.b16 %v1071
  %v1114 = vunpack.c.l.b16 %v1072
  %v1115 = vunpack.c.l.b16 %v1073
  %v1116 = vunpack.c.l.b16 %v1074
  %v1117 = vunpack.c.l.b16 %v1075
  %v1118 = vunpack.c.l.b16 %v1076
  %v1119 = vunpack.c.l.b16 %v1077
  %v1120 = vunpack.c.l.b16 %v1078
  %v1121 = vunpack.c.l.b16 %v1079
  %v1122 = vunpack.c.l.b16 %v1080
  %v1123 = vunpack.c.l.b16 %v1081
  %v1124 = vunpack.c.l.b16 %v1082
  %v1125 = vunpack.c.l.b16 %v1083
  %v1126 = vunpack.c.l.b16 %v1084
  %v1127 = vpack.c.b16 %v1107, %v1106
  %v1128 = vpack.c.b16 %v1109, %v1108
  %v1129 = vpack.c.b16 %v1111, %v1110
  %v1130 = vpack.c.b16 %v1113, %v1112
  %v1131 = vpack.c.b16 %v1115, %v1114
  %v1132 = vpack.c.b16 %v1117, %v1116
  %v1133 = vpack.c.b16 %v1119, %v1118
  %v1134 = vpack.c.b16 %v1121, %v1120
  %v1135 = vpack.c.b16 %v1123, %v1122
  %v1136 = vpack.c.b16 %v1125, %v1124
  %v1137 = vpack.c.b16 %v1126, %v1126
  %vm1148 = vcmask 326656
  %v1150 = vsel %vm1148, %v1033, 0
  %v1153 = vsel %vm1148, %v1035, 0
  %v1156 = vsel %vm1148, %v1037, 0
  %v1159 = vsel %vm1148, %v1039, 0
  %v1162 = vsel %vm1148, %v1041, 0
  %v1165 = vsel %vm1148, %v1043, 0
  %v1168 = vsel %vm1148, %v1045, 0
  %v1171 = vsel %vm1148, %v1047, 0
  %v1174 = vsel %vm1148, %v1049, 0
  %v1177 = vsel %vm1148, %v1051, 0
  %v1180 = vsel %vm1148, %v1053, 0
  %v1183 = vsel %vm1148, %v1055, 0
  %v1186 = vsel %vm1148, %v1057, 0
  %v1189 = vsel %vm1148, %v1059, 0
  %v1192 = vsel %vm1148, %v1061, 0
  %v1195 = vsel %vm1148, %v1063, 0
  %vm1197 = vcmask 1043456
  %v1199 = vsel %vm1197, %v1137, 0
  %1201 = vmatprep.subr.bf16.mxu0 0
  %1202 = vmatpush1.bf16.msra.mxu0 %v1127
  %1203 = vmatprep.subr.bf16.mxu0 0
  %1204 = vmatpush1.bf16.msra.mxu0 %v1128
  %1205 = vmatprep.subr.bf16.mxu0 0
  %1206 = vmatpush1.bf16.msra.mxu0 %v1129
  %1207 = vmatprep.subr.bf16.mxu0 0
  %1208 = vmatpush1.bf16.msra.mxu0 %v1130
  %1209 = vmatprep.subr.bf16.mxu0 0
  %1210 = vmatpush1.bf16.msra.mxu0 %v1131
  %1211 = vmatprep.subr.bf16.mxu0 0
  %1212 = vmatpush1.bf16.msra.mxu0 %v1132
  %1213 = vmatprep.subr.bf16.mxu0 0
  %1214 = vmatpush1.bf16.msra.mxu0 %v1133
  %1215 = vmatprep.subr.bf16.mxu0 0
  %1216 = vmatpush1.bf16.msra.mxu0 %v1134
  %1217 = vmatprep.subr.bf16.mxu0 0
  %1218 = vmatpush1.bf16.msra.mxu0 %v1135
  %1219 = vmatprep.subr.bf16.mxu0 0
  %1220 = vmatpush1.bf16.msra.mxu0 %v1136
  %1221 = vmatprep.subr.bf16.mxu0 0
  %1222 = vmatpush1.bf16.msra.mxu0 %v1199
  %1223 = vmatprep.subr.bf16.mxu0 0
  %1224 = vmatpush1.bf16.msra.mxu0 0
  %1225 = vmatprep.subr.bf16.mxu0 0
  %1226 = vmatpush1.bf16.msra.mxu0 0
  %1227 = vmatprep.subr.bf16.mxu0 0
  %1228 = vmatpush1.bf16.msra.mxu0 0
  %1229 = vmatprep.subr.bf16.mxu0 0
  %1230 = vmatpush1.bf16.msra.mxu0 0
  %1231 = vmatprep.subr.bf16.mxu0 0
  %1232 = vmatpush1.bf16.msra.mxu0 0
  %1233 = vmatprep.mubr.bf16.mxu0 %v1150
  %1234 = vmatmul.mubr.bf16.gmra.mrb[0].mxu0 %v1032
  %v1235 = vpop.f32.mrb[0].mxu0
  %v1236 = vadd.f32 0.0, %v1235
  %v1237 = vpop.f32.mrb[0].mxu0
  %v1238 = vpop.f32.mrb[0].mxu0
  %v1239 = vadd.f32 0.0, %v1238
  %v1240 = vpop.f32.mrb[0].mxu0
  %1241 = vmatprep.mubr.bf16.mxu0 %v1153
  %1242 = vmatmul.mubr.bf16.gmra.mrb[0].mxu0 %v1034
  %v1243 = vpop.f32.mrb[0].mxu0
  %v1244 = vadd.f32 0.0, %v1243
  %v1245 = vpop.f32.mrb[0].mxu0
  %v1246 = vpop.f32.mrb[0].mxu0
  %v1247 = vadd.f32 0.0, %v1246
  %v1248 = vpop.f32.mrb[0].mxu0
  %1249 = vmatprep.mubr.bf16.mxu0 %v1156
  %1250 = vmatmul.mubr.bf16.gmra.mrb[0].mxu0 %v1036
  %v1251 = vpop.f32.mrb[0].mxu0
  %v1252 = vadd.f32 0.0, %v1251
  %v1253 = vpop.f32.mrb[0].mxu0
  %v1254 = vpop.f32.mrb[0].mxu0
  %v1255 = vadd.f32 0.0, %v1254
  %v1256 = vpop.f32.mrb[0].mxu0
  %1257 = vmatprep.mubr.bf16.mxu0 %v1159
  %1258 = vmatmul.mubr.bf16.gmra.mrb[0].mxu0 %v1038
  %v1259 = vpop.f32.mrb[0].mxu0
  %v1260 = vadd.f32 0.0, %v1259
  %v1261 = vpop.f32.mrb[0].mxu0
  %v1262 = vpop.f32.mrb[0].mxu0
  %v1263 = vadd.f32 0.0, %v1262
  %v1264 = vpop.f32.mrb[0].mxu0
  %1265 = vmatprep.mubr.bf16.mxu0 %v1162
  %1266 = vmatmul.mubr.bf16.gmra.mrb[0].mxu0 %v1040
  %v1267 = vpop.f32.mrb[0].mxu0
  %v1268 = vadd.f32 0.0, %v1267
  %v1269 = vpop.f32.mrb[0].mxu0
  %v1270 = vpop.f32.mrb[0].mxu0
  %v1271 = vadd.f32 0.0, %v1270
  %v1272 = vpop.f32.mrb[0].mxu0
  %1273 = vmatprep.mubr.bf16.mxu0 %v1165
  %1274 = vmatmul.mubr.bf16.gmra.mrb[0].mxu0 %v1042
  %v1275 = vpop.f32.mrb[0].mxu0
  %v1276 = vadd.f32 0.0, %v1275
  %v1277 = vpop.f32.mrb[0].mxu0
  %v1278 = vpop.f32.mrb[0].mxu0
  %v1279 = vadd.f32 0.0, %v1278
  %v1280 = vpop.f32.mrb[0].mxu0
  %1281 = vmatprep.mubr.bf16.mxu0 %v1168
  %1282 = vmatmul.mubr.bf16.gmra.mrb[0].mxu0 %v1044
  %v1283 = vpop.f32.mrb[0].mxu0
  %v1284 = vadd.f32 0.0, %v1283
  %v1285 = vpop.f32.mrb[0].mxu0
  %v1286 = vpop.f32.mrb[0].mxu0
  %v1287 = vadd.f32 0.0, %v1286
  %v1288 = vpop.f32.mrb[0].mxu0
  %1289 = vmatprep.mubr.bf16.mxu0 %v1171
  %1290 = vmatmul.mubr.bf16.gmra.mrb[0].mxu0 %v1046
  %v1291 = vpop.f32.mrb[0].mxu0
  %v1292 = vadd.f32 0.0, %v1291
  %v1293 = vpop.f32.mrb[0].mxu0
  %v1294 = vpop.f32.mrb[0].mxu0
  %v1295 = vadd.f32 0.0, %v1294
  %v1296 = vpop.f32.mrb[0].mxu0
  %1297 = vmatprep.mubr.bf16.mxu0 %v1174
  %1298 = vmatmul.mubr.bf16.gmra.mrb[0].mxu0 %v1048
  %v1299 = vpop.f32.mrb[0].mxu0
  %v1300 = vadd.f32 0.0, %v1299
  %v1301 = vpop.f32.mrb[0].mxu0
  %v1302 = vpop.f32.mrb[0].mxu0
  %v1303 = vadd.f32 0.0, %v1302
  %v1304 = vpop.f32.mrb[0].mxu0
  %1305 = vmatprep.mubr.bf16.mxu0 %v1177
  %1306 = vmatmul.mubr.bf16.gmra.mrb[0].mxu0 %v1050
  %v1307 = vpop.f32.mrb[0].mxu0
  %v1308 = vadd.f32 0.0, %v1307
  %v1309 = vpop.f32.mrb[0].mxu0
  %v1310 = vpop.f32.mrb[0].mxu0
  %v1311 = vadd.f32 0.0, %v1310
  %v1312 = vpop.f32.mrb[0].mxu0
  %1313 = vmatprep.mubr.bf16.mxu0 %v1180
  %1314 = vmatmul.mubr.bf16.gmra.mrb[0].mxu0 %v1052
  %v1315 = vpop.f32.mrb[0].mxu0
  %v1316 = vadd.f32 0.0, %v1315
  %v1317 = vpop.f32.mrb[0].mxu0
  %v1318 = vpop.f32.mrb[0].mxu0
  %v1319 = vadd.f32 0.0, %v1318
  %v1320 = vpop.f32.mrb[0].mxu0
  %1321 = vmatprep.mubr.bf16.mxu0 %v1183
  %1322 = vmatmul.mubr.bf16.gmra.mrb[0].mxu0 %v1054
  %v1323 = vpop.f32.mrb[0].mxu0
  %v1324 = vadd.f32 0.0, %v1323
  %v1325 = vpop.f32.mrb[0].mxu0
  %v1326 = vpop.f32.mrb[0].mxu0
  %v1327 = vadd.f32 0.0, %v1326
  %v1328 = vpop.f32.mrb[0].mxu0
  %1329 = vmatprep.mubr.bf16.mxu0 %v1186
  %1330 = vmatmul.mubr.bf16.gmra.mrb[0].mxu0 %v1056
  %v1331 = vpop.f32.mrb[0].mxu0
  %v1332 = vadd.f32 0.0, %v1331
  %v1333 = vpop.f32.mrb[0].mxu0
  %v1334 = vpop.f32.mrb[0].mxu0
  %v1335 = vadd.f32 0.0, %v1334
  %v1336 = vpop.f32.mrb[0].mxu0
  %1337 = vmatprep.mubr.bf16.mxu0 %v1189
  %1338 = vmatmul.mubr.bf16.gmra.mrb[0].mxu0 %v1058
  %v1339 = vpop.f32.mrb[0].mxu0
  %v1340 = vadd.f32 0.0, %v1339
  %v1341 = vpop.f32.mrb[0].mxu0
  %v1342 = vpop.f32.mrb[0].mxu0
  %v1343 = vadd.f32 0.0, %v1342
  %v1344 = vpop.f32.mrb[0].mxu0
  %1345 = vmatprep.mubr.bf16.mxu0 %v1192
  %1346 = vmatmul.mubr.bf16.gmra.mrb[0].mxu0 %v1060
  %v1347 = vpop.f32.mrb[0].mxu0
  %v1348 = vadd.f32 0.0, %v1347
  %v1349 = vpop.f32.mrb[0].mxu0
  %v1350 = vpop.f32.mrb[0].mxu0
  %v1351 = vadd.f32 0.0, %v1350
  %v1352 = vpop.f32.mrb[0].mxu0
  %1353 = vmatprep.mubr.bf16.mxu0 %v1195
  %1354 = vmatmul.mubr.bf16.gmra.mrb[0].mxu0 %v1062
  %v1355 = vpop.f32.mrb[0].mxu0
  %v1356 = vadd.f32 0.0, %v1355
  %v1357 = vpop.f32.mrb[0].mxu0
  %v1358 = vpop.f32.mrb[0].mxu0
  %v1359 = vadd.f32 0.0, %v1358
  %v1360 = vpop.f32.mrb[0].mxu0
  %1361 = vdwg.mxu0
  %v1394 = vrot.slane %v1236, 1
  %v1395 = vrot.slane %v1239, 1
  %v1396 = vsel %vm274, %v1394, %v1395
  %v1397 = vrot.slane %v1244, 1
  %v1398 = vsel %vm274, %v1395, %v1397
  %v1399 = vrot.slane %v1247, 1
  %v1400 = vsel %vm274, %v1397, %v1399
  %v1401 = vrot.slane %v1252, 1
  %v1402 = vsel %vm274, %v1399, %v1401
  %v1403 = vrot.slane %v1255, 1
  %v1404 = vsel %vm274, %v1401, %v1403
  %v1405 = vrot.slane %v1260, 1
  %v1406 = vsel %vm274, %v1403, %v1405
  %v1407 = vrot.slane %v1263, 1
  %v1408 = vsel %vm274, %v1405, %v1407
  %v1409 = vrot.slane %v1268, 1
  %v1410 = vsel %vm274, %v1407, %v1409
  %v1411 = vrot.slane %v1271, 1
  %v1412 = vsel %vm274, %v1409, %v1411
  %v1413 = vrot.slane %v1276, 1
  %v1414 = vsel %vm274, %v1411, %v1413
  %v1415 = vrot.slane %v1279, 1
  %v1416 = vsel %vm274, %v1413, %v1415
  %v1417 = vrot.slane %v1284, 1
  %v1418 = vsel %vm274, %v1415, %v1417
  %v1419 = vrot.slane %v1287, 1
  %v1420 = vsel %vm274, %v1417, %v1419
  %v1421 = vrot.slane %v1292, 1
  %v1422 = vsel %vm274, %v1419, %v1421
  %v1423 = vrot.slane %v1295, 1
  %v1424 = vsel %vm274, %v1421, %v1423
  %v1425 = vrot.slane %v1300, 1
  %v1426 = vsel %vm274, %v1423, %v1425
  %v1427 = vrot.slane %v1303, 1
  %v1428 = vsel %vm274, %v1425, %v1427
  %v1429 = vrot.slane %v1308, 1
  %v1430 = vsel %vm274, %v1427, %v1429
  %v1431 = vrot.slane %v1311, 1
  %v1432 = vsel %vm274, %v1429, %v1431
  %v1433 = vrot.slane %v1316, 1
  %v1434 = vsel %vm274, %v1431, %v1433
  %v1435 = vrot.slane %v1319, 1
  %v1436 = vsel %vm274, %v1433, %v1435
  %v1437 = vrot.slane %v1324, 1
  %v1438 = vsel %vm274, %v1435, %v1437
  %v1439 = vrot.slane %v1327, 1
  %v1440 = vsel %vm274, %v1437, %v1439
  %v1441 = vrot.slane %v1332, 1
  %v1442 = vsel %vm274, %v1439, %v1441
  %v1443 = vrot.slane %v1335, 1
  %v1444 = vsel %vm274, %v1441, %v1443
  %v1445 = vrot.slane %v1340, 1
  %v1446 = vsel %vm274, %v1443, %v1445
  %v1447 = vrot.slane %v1343, 1
  %v1448 = vsel %vm274, %v1445, %v1447
  %v1449 = vrot.slane %v1348, 1
  %v1450 = vsel %vm274, %v1447, %v1449
  %v1451 = vrot.slane %v1351, 1
  %v1452 = vsel %vm274, %v1449, %v1451
  %v1453 = vrot.slane %v1356, 1
  %v1454 = vsel %vm274, %v1451, %v1453
  %v1455 = vrot.slane %v1359, 1
  %v1456 = vsel %vm274, %v1453, %v1455
  %v1490 = vsel %vm274, %v1455, %v1394
  %v1491 = vadd.f32 %v1236, %v1396
  %v1492 = vadd.f32 %v1239, %v1398
  %v1493 = vadd.f32 %v1244, %v1400
  %v1494 = vadd.f32 %v1247, %v1402
  %v1495 = vadd.f32 %v1252, %v1404
  %v1496 = vadd.f32 %v1255, %v1406
  %v1497 = vadd.f32 %v1260, %v1408
  %v1498 = vadd.f32 %v1263, %v1410
  %v1499 = vadd.f32 %v1268, %v1412
  %v1500 = vadd.f32 %v1271, %v1414
  %v1501 = vadd.f32 %v1276, %v1416
  %v1502 = vadd.f32 %v1279, %v1418
  %v1503 = vadd.f32 %v1284, %v1420
  %v1504 = vadd.f32 %v1287, %v1422
  %v1505 = vadd.f32 %v1292, %v1424
  %v1506 = vadd.f32 %v1295, %v1426
  %v1507 = vadd.f32 %v1300, %v1428
  %v1508 = vadd.f32 %v1303, %v1430
  %v1509 = vadd.f32 %v1308, %v1432
  %v1510 = vadd.f32 %v1311, %v1434
  %v1511 = vadd.f32 %v1316, %v1436
  %v1512 = vadd.f32 %v1319, %v1438
  %v1513 = vadd.f32 %v1324, %v1440
  %v1514 = vadd.f32 %v1327, %v1442
  %v1515 = vadd.f32 %v1332, %v1444
  %v1516 = vadd.f32 %v1335, %v1446
  %v1517 = vadd.f32 %v1340, %v1448
  %v1518 = vadd.f32 %v1343, %v1450
  %v1519 = vadd.f32 %v1348, %v1452
  %v1520 = vadd.f32 %v1351, %v1454
  %v1521 = vadd.f32 %v1356, %v1456
  %v1522 = vadd.f32 %v1359, %v1490
  %v1523 = vmul.f32 %v1491, 0.5
  %v1524 = vmul.f32 %v1492, 0.5
  %v1525 = vmul.f32 %v1493, 0.5
  %v1526 = vmul.f32 %v1494, 0.5
  %v1527 = vmul.f32 %v1495, 0.5
  %v1528 = vmul.f32 %v1496, 0.5
  %v1529 = vmul.f32 %v1497, 0.5
  %v1530 = vmul.f32 %v1498, 0.5
  %v1531 = vmul.f32 %v1499, 0.5
  %v1532 = vmul.f32 %v1500, 0.5
  %v1533 = vmul.f32 %v1501, 0.5
  %v1534 = vmul.f32 %v1502, 0.5
  %v1535 = vmul.f32 %v1503, 0.5
  %v1536 = vmul.f32 %v1504, 0.5
  %v1537 = vmul.f32 %v1505, 0.5
  %v1538 = vmul.f32 %v1506, 0.5
  %v1539 = vmul.f32 %v1507, 0.5
  %v1540 = vmul.f32 %v1508, 0.5
  %v1541 = vmul.f32 %v1509, 0.5
  %v1542 = vmul.f32 %v1510, 0.5
  %v1543 = vmul.f32 %v1511, 0.5
  %v1544 = vmul.f32 %v1512, 0.5
  %v1545 = vmul.f32 %v1513, 0.5
  %v1546 = vmul.f32 %v1514, 0.5
  %v1547 = vmul.f32 %v1515, 0.5
  %v1548 = vmul.f32 %v1516, 0.5
  %v1549 = vmul.f32 %v1517, 0.5
  %v1550 = vmul.f32 %v1518, 0.5
  %v1551 = vmul.f32 %v1519, 0.5
  %v1552 = vmul.f32 %v1520, 0.5
  %v1553 = vmul.f32 %v1521, 0.5
  %v1554 = vmul.f32 %v1522, 0.5
  %v1555 = vpack.c.bf16 %v1524, %v1523
  %v1556 = vpack.c.bf16 %v1526, %v1525
  %v1557 = vpack.c.bf16 %v1528, %v1527
  %v1558 = vpack.c.bf16 %v1530, %v1529
  %v1559 = vpack.c.bf16 %v1532, %v1531
  %v1560 = vpack.c.bf16 %v1534, %v1533
  %v1561 = vpack.c.bf16 %v1536, %v1535
  %v1562 = vpack.c.bf16 %v1538, %v1537
  %v1563 = vpack.c.bf16 %v1540, %v1539
  %v1564 = vpack.c.bf16 %v1542, %v1541
  %v1565 = vpack.c.bf16 %v1544, %v1543
  %v1566 = vpack.c.bf16 %v1546, %v1545
  %v1567 = vpack.c.bf16 %v1548, %v1547
  %v1568 = vpack.c.bf16 %v1550, %v1549
  %v1569 = vpack.c.bf16 %v1552, %v1551
  %v1570 = vpack.c.bf16 %v1554, %v1553
  %v1587 = vrot.slane %v1555, 1
  %v1588 = vrot.slane %v1556, 1
  %v1589 = vsel %vm242, %v1587, %v1588
  %v1590 = vrot.slane %v1557, 1
  %v1591 = vsel %vm242, %v1588, %v1590
  %v1592 = vrot.slane %v1558, 1
  %v1593 = vsel %vm242, %v1590, %v1592
  %v1594 = vrot.slane %v1559, 1
  %v1595 = vsel %vm242, %v1592, %v1594
  %v1596 = vrot.slane %v1560, 1
  %v1597 = vsel %vm242, %v1594, %v1596
  %v1598 = vrot.slane %v1561, 1
  %v1599 = vsel %vm242, %v1596, %v1598
  %v1600 = vrot.slane %v1562, 1
  %v1601 = vsel %vm242, %v1598, %v1600
  %v1602 = vrot.slane %v1563, 1
  %v1603 = vsel %vm242, %v1600, %v1602
  %v1604 = vrot.slane %v1564, 1
  %v1605 = vsel %vm242, %v1602, %v1604
  %v1606 = vrot.slane %v1565, 1
  %v1607 = vsel %vm242, %v1604, %v1606
  %v1608 = vrot.slane %v1566, 1
  %v1609 = vsel %vm242, %v1606, %v1608
  %v1610 = vrot.slane %v1567, 1
  %v1611 = vsel %vm242, %v1608, %v1610
  %v1612 = vrot.slane %v1568, 1
  %v1613 = vsel %vm242, %v1610, %v1612
  %v1614 = vrot.slane %v1569, 1
  %v1615 = vsel %vm242, %v1612, %v1614
  %v1616 = vrot.slane %v1570, 1
  %v1617 = vsel %vm242, %v1614, %v1616
  %v1620 = vsel %vm274, %v1616, %v1587
  %v1621 = vrot.slane %v1555, 2
  %v1622 = vrot.slane %v1556, 2
  %v1623 = vsel %vm346, %v1621, %v1622
  %v1624 = vrot.slane %v1557, 2
  %v1625 = vsel %vm346, %v1622, %v1624
  %v1626 = vrot.slane %v1558, 2
  %v1627 = vsel %vm346, %v1624, %v1626
  %v1628 = vrot.slane %v1559, 2
  %v1629 = vsel %vm346, %v1626, %v1628
  %v1630 = vrot.slane %v1560, 2
  %v1631 = vsel %vm346, %v1628, %v1630
  %v1632 = vrot.slane %v1561, 2
  %v1633 = vsel %vm346, %v1630, %v1632
  %v1634 = vrot.slane %v1562, 2
  %v1635 = vsel %vm346, %v1632, %v1634
  %v1636 = vrot.slane %v1563, 2
  %v1637 = vsel %vm346, %v1634, %v1636
  %v1638 = vrot.slane %v1564, 2
  %v1639 = vsel %vm346, %v1636, %v1638
  %v1640 = vrot.slane %v1565, 2
  %v1641 = vsel %vm346, %v1638, %v1640
  %v1642 = vrot.slane %v1566, 2
  %v1643 = vsel %vm346, %v1640, %v1642
  %v1644 = vrot.slane %v1567, 2
  %v1645 = vsel %vm346, %v1642, %v1644
  %v1646 = vrot.slane %v1568, 2
  %v1647 = vsel %vm346, %v1644, %v1646
  %v1648 = vrot.slane %v1569, 2
  %v1649 = vsel %vm346, %v1646, %v1648
  %v1650 = vrot.slane %v1570, 2
  %v1651 = vsel %vm346, %v1648, %v1650
  %v1654 = vsel %vm378, %v1650, %v1621
  %vm1655 = vcmask 1044480
  %v1656 = vrot.slane %v1555, 3
  %v1657 = vrot.slane %v1556, 3
  %v1658 = vsel %vm1655, %v1656, %v1657
  %v1659 = vrot.slane %v1557, 3
  %v1660 = vsel %vm1655, %v1657, %v1659
  %v1661 = vrot.slane %v1558, 3
  %v1662 = vsel %vm1655, %v1659, %v1661
  %v1663 = vrot.slane %v1559, 3
  %v1664 = vsel %vm1655, %v1661, %v1663
  %v1665 = vrot.slane %v1560, 3
  %v1666 = vsel %vm1655, %v1663, %v1665
  %v1667 = vrot.slane %v1561, 3
  %v1668 = vsel %vm1655, %v1665, %v1667
  %v1669 = vrot.slane %v1562, 3
  %v1670 = vsel %vm1655, %v1667, %v1669
  %v1671 = vrot.slane %v1563, 3
  %v1672 = vsel %vm1655, %v1669, %v1671
  %v1673 = vrot.slane %v1564, 3
  %v1674 = vsel %vm1655, %v1671, %v1673
  %v1675 = vrot.slane %v1565, 3
  %v1676 = vsel %vm1655, %v1673, %v1675
  %v1677 = vrot.slane %v1566, 3
  %v1678 = vsel %vm1655, %v1675, %v1677
  %v1679 = vrot.slane %v1567, 3
  %v1680 = vsel %vm1655, %v1677, %v1679
  %v1681 = vrot.slane %v1568, 3
  %v1682 = vsel %vm1655, %v1679, %v1681
  %v1683 = vrot.slane %v1569, 3
  %v1684 = vsel %vm1655, %v1681, %v1683
  %v1685 = vrot.slane %v1570, 3
  %v1686 = vsel %vm1655, %v1683, %v1685
  %vm1687 = vcmask 1044480
  %v1690 = vsel %vm1687, %v1685, %v1656
  %vm1691 = vcmask 1043456
  %v1692 = vrot.slane %v1555, 4
  %v1693 = vrot.slane %v1556, 4
  %v1694 = vsel %vm1691, %v1692, %v1693
  %v1695 = vrot.slane %v1557, 4
  %v1696 = vsel %vm1691, %v1693, %v1695
  %v1697 = vrot.slane %v1558, 4
  %v1698 = vsel %vm1691, %v1695, %v1697
  %v1699 = vrot.slane %v1559, 4
  %v1700 = vsel %vm1691, %v1697, %v1699
  %v1701 = vrot.slane %v1560, 4
  %v1702 = vsel %vm1691, %v1699, %v1701
  %v1703 = vrot.slane %v1561, 4
  %v1704 = vsel %vm1691, %v1701, %v1703
  %v1705 = vrot.slane %v1562, 4
  %v1706 = vsel %vm1691, %v1703, %v1705
  %v1707 = vrot.slane %v1563, 4
  %v1708 = vsel %vm1691, %v1705, %v1707
  %v1709 = vrot.slane %v1564, 4
  %v1710 = vsel %vm1691, %v1707, %v1709
  %v1711 = vrot.slane %v1565, 4
  %v1712 = vsel %vm1691, %v1709, %v1711
  %v1713 = vrot.slane %v1566, 4
  %v1714 = vsel %vm1691, %v1711, %v1713
  %v1715 = vrot.slane %v1567, 4
  %v1716 = vsel %vm1691, %v1713, %v1715
  %v1717 = vrot.slane %v1568, 4
  %v1718 = vsel %vm1691, %v1715, %v1717
  %v1719 = vrot.slane %v1569, 4
  %v1720 = vsel %vm1691, %v1717, %v1719
  %v1721 = vrot.slane %v1570, 4
  %v1722 = vsel %vm1691, %v1719, %v1721
  %v1725 = vsel %vm1197, %v1721, %v1692
  %1727 = vrot.lane.b32.xlu0 %v1589, 84
  %v1728 = vpop.permute.xlu0 %1727
  %1729 = vrot.lane.b32.xlu0 %v1591, 84
  %v1730 = vpop.permute.xlu0 %1729
  %1731 = vrot.lane.b32.xlu0 %v1593, 84
  %v1732 = vpop.permute.xlu0 %1731
  %1733 = vrot.lane.b32.xlu0 %v1595, 84
  %v1734 = vpop.permute.xlu0 %1733
  %1735 = vrot.lane.b32.xlu0 %v1597, 84
  %v1736 = vpop.permute.xlu0 %1735
  %1737 = vrot.lane.b32.xlu0 %v1599, 84
  %v1738 = vpop.permute.xlu0 %1737
  %1739 = vrot.lane.b32.xlu0 %v1601, 84
  %v1740 = vpop.permute.xlu0 %1739
  %1741 = vrot.lane.b32.xlu0 %v1603, 84
  %v1742 = vpop.permute.xlu0 %1741
  %1743 = vrot.lane.b32.xlu0 %v1605, 84
  %v1744 = vpop.permute.xlu0 %1743
  %1745 = vrot.lane.b32.xlu0 %v1607, 84
  %v1746 = vpop.permute.xlu0 %1745
  %1747 = vrot.lane.b32.xlu0 %v1609, 84
  %v1748 = vpop.permute.xlu0 %1747
  %1749 = vrot.lane.b32.xlu0 %v1611, 84
  %v1750 = vpop.permute.xlu0 %1749
  %1751 = vrot.lane.b32.xlu0 %v1613, 84
  %v1752 = vpop.permute.xlu0 %1751
  %1753 = vrot.lane.b32.xlu0 %v1615, 84
  %v1754 = vpop.permute.xlu0 %1753
  %1755 = vrot.lane.b32.xlu0 %v1617, 84
  %v1756 = vpop.permute.xlu0 %1755
  %1757 = vrot.lane.b32.xlu0 %v1620, 84
  %v1758 = vpop.permute.xlu0 %1757
  %1760 = vrot.lane.b32.xlu0 %v1623, 40
  %v1761 = vpop.permute.xlu0 %1760
  %1762 = vrot.lane.b32.xlu0 %v1625, 40
  %v1763 = vpop.permute.xlu0 %1762
  %1764 = vrot.lane.b32.xlu0 %v1627, 40
  %v1765 = vpop.permute.xlu0 %1764
  %1766 = vrot.lane.b32.xlu0 %v1629, 40
  %v1767 = vpop.permute.xlu0 %1766
  %1768 = vrot.lane.b32.xlu0 %v1631, 40
  %v1769 = vpop.permute.xlu0 %1768
  %1770 = vrot.lane.b32.xlu0 %v1633, 40
  %v1771 = vpop.permute.xlu0 %1770
  %1772 = vrot.lane.b32.xlu0 %v1635, 40
  %v1773 = vpop.permute.xlu0 %1772
  %1774 = vrot.lane.b32.xlu0 %v1637, 40
  %v1775 = vpop.permute.xlu0 %1774
  %1776 = vrot.lane.b32.xlu0 %v1639, 40
  %v1777 = vpop.permute.xlu0 %1776
  %1778 = vrot.lane.b32.xlu0 %v1641, 40
  %v1779 = vpop.permute.xlu0 %1778
  %1780 = vrot.lane.b32.xlu0 %v1643, 40
  %v1781 = vpop.permute.xlu0 %1780
  %1782 = vrot.lane.b32.xlu0 %v1645, 40
  %v1783 = vpop.permute.xlu0 %1782
  %1784 = vrot.lane.b32.xlu0 %v1647, 40
  %v1785 = vpop.permute.xlu0 %1784
  %1786 = vrot.lane.b32.xlu0 %v1649, 40
  %v1787 = vpop.permute.xlu0 %1786
  %1788 = vrot.lane.b32.xlu0 %v1651, 40
  %v1789 = vpop.permute.xlu0 %1788
  %1790 = vrot.lane.b32.xlu0 %v1654, 40
  %v1791 = vpop.permute.xlu0 %1790
  %1793 = vrot.lane.b32.xlu0 %v1658, 124
  %v1794 = vpop.permute.xlu0 %1793
  %1795 = vrot.lane.b32.xlu0 %v1660, 124
  %v1796 = vpop.permute.xlu0 %1795
  %1797 = vrot.lane.b32.xlu0 %v1662, 124
  %v1798 = vpop.permute.xlu0 %1797
  %1799 = vrot.lane.b32.xlu0 %v1664, 124
  %v1800 = vpop.permute.xlu0 %1799
  %1801 = vrot.lane.b32.xlu0 %v1666, 124
  %v1802 = vpop.permute.xlu0 %1801
  %1803 = vrot.lane.b32.xlu0 %v1668, 124
  %v1804 = vpop.permute.xlu0 %1803
  %1805 = vrot.lane.b32.xlu0 %v1670, 124
  %v1806 = vpop.permute.xlu0 %1805
  %1807 = vrot.lane.b32.xlu0 %v1672, 124
  %v1808 = vpop.permute.xlu0 %1807
  %1809 = vrot.lane.b32.xlu0 %v1674, 124
  %v1810 = vpop.permute.xlu0 %1809
  %1811 = vrot.lane.b32.xlu0 %v1676, 124
  %v1812 = vpop.permute.xlu0 %1811
  %1813 = vrot.lane.b32.xlu0 %v1678, 124
  %v1814 = vpop.permute.xlu0 %1813
  %1815 = vrot.lane.b32.xlu0 %v1680, 124
  %v1816 = vpop.permute.xlu0 %1815
  %1817 = vrot.lane.b32.xlu0 %v1682, 124
  %v1818 = vpop.permute.xlu0 %1817
  %1819 = vrot.lane.b32.xlu0 %v1684, 124
  %v1820 = vpop.permute.xlu0 %1819
  %1821 = vrot.lane.b32.xlu0 %v1686, 124
  %v1822 = vpop.permute.xlu0 %1821
  %1823 = vrot.lane.b32.xlu0 %v1690, 124
  %v1824 = vpop.permute.xlu0 %1823
  %1826 = vrot.lane.b32.xlu0 %v1694, 80
  %v1827 = vpop.permute.xlu0 %1826
  %1828 = vrot.lane.b32.xlu0 %v1696, 80
  %v1829 = vpop.permute.xlu0 %1828
  %1830 = vrot.lane.b32.xlu0 %v1698, 80
  %v1831 = vpop.permute.xlu0 %1830
  %1832 = vrot.lane.b32.xlu0 %v1700, 80
  %v1833 = vpop.permute.xlu0 %1832
  %1834 = vrot.lane.b32.xlu0 %v1702, 80
  %v1835 = vpop.permute.xlu0 %1834
  %1836 = vrot.lane.b32.xlu0 %v1704, 80
  %v1837 = vpop.permute.xlu0 %1836
  %1838 = vrot.lane.b32.xlu0 %v1706, 80
  %v1839 = vpop.permute.xlu0 %1838
  %1840 = vrot.lane.b32.xlu0 %v1708, 80
  %v1841 = vpop.permute.xlu0 %1840
  %1842 = vrot.lane.b32.xlu0 %v1710, 80
  %v1843 = vpop.permute.xlu0 %1842
  %1844 = vrot.lane.b32.xlu0 %v1712, 80
  %v1845 = vpop.permute.xlu0 %1844
  %1846 = vrot.lane.b32.xlu0 %v1714, 80
  %v1847 = vpop.permute.xlu0 %1846
  %1848 = vrot.lane.b32.xlu0 %v1716, 80
  %v1849 = vpop.permute.xlu0 %1848
  %1850 = vrot.lane.b32.xlu0 %v1718, 80
  %v1851 = vpop.permute.xlu0 %1850
  %1852 = vrot.lane.b32.xlu0 %v1720, 80
  %v1853 = vpop.permute.xlu0 %1852
  %1854 = vrot.lane.b32.xlu0 %v1722, 80
  %v1855 = vpop.permute.xlu0 %1854
  %1856 = vrot.lane.b32.xlu0 %v1725, 80
  %v1857 = vpop.permute.xlu0 %1856
  %vm1858 = vcmask 687104
  %v1861 = vsel %vm1858, %v1555, %v1728
  %v1865 = vsel %vm1858, %v1556, %v1730
  %v1869 = vsel %vm1858, %v1557, %v1732
  %v1873 = vsel %vm1858, %v1558, %v1734
  %v1877 = vsel %vm1858, %v1559, %v1736
  %v1881 = vsel %vm1858, %v1560, %v1738
  %v1885 = vsel %vm1858, %v1561, %v1740
  %v1889 = vsel %vm1858, %v1562, %v1742
  %v1893 = vsel %vm1858, %v1563, %v1744
  %v1897 = vsel %vm1858, %v1564, %v1746
  %v1901 = vsel %vm1858, %v1565, %v1748
  %v1905 = vsel %vm1858, %v1566, %v1750
  %v1909 = vsel %vm1858, %v1567, %v1752
  %v1913 = vsel %vm1858, %v1568, %v1754
  %v1917 = vsel %vm1858, %v1569, %v1756
  %v1921 = vsel %vm1858, %v1570, %v1758
  %v1924 = vsel %vm1148, %v1728, %v1761
  %v1926 = vsel %vm1148, %v1730, %v1763
  %v1928 = vsel %vm1148, %v1732, %v1765
  %v1930 = vsel %vm1148, %v1734, %v1767
  %v1932 = vsel %vm1148, %v1736, %v1769
  %v1934 = vsel %vm1148, %v1738, %v1771
  %v1936 = vsel %vm1148, %v1740, %v1773
  %v1938 = vsel %vm1148, %v1742, %v1775
  %v1940 = vsel %vm1148, %v1744, %v1777
  %v1942 = vsel %vm1148, %v1746, %v1779
  %v1944 = vsel %vm1148, %v1748, %v1781
  %v1946 = vsel %vm1148, %v1750, %v1783
  %v1948 = vsel %vm1148, %v1752, %v1785
  %v1950 = vsel %vm1148, %v1754, %v1787
  %v1952 = vsel %vm1148, %v1756, %v1789
  %v1954 = vsel %vm1148, %v1758, %v1791
  %vm1955 = vcmask 1014784
  %v1957 = vsel %vm1955, %v1924, %v1794
  %v1960 = vsel %vm1955, %v1926, %v1796
  %v1963 = vsel %vm1955, %v1928, %v1798
  %v1966 = vsel %vm1955, %v1930, %v1800
  %v1969 = vsel %vm1955, %v1932, %v1802
  %v1972 = vsel %vm1955, %v1934, %v1804
  %v1975 = vsel %vm1955, %v1936, %v1806
  %v1978 = vsel %vm1955, %v1938, %v1808
  %v1981 = vsel %vm1955, %v1940, %v1810
  %v1984 = vsel %vm1955, %v1942, %v1812
  %v1987 = vsel %vm1955, %v1944, %v1814
  %v1990 = vsel %vm1955, %v1946, %v1816
  %v1993 = vsel %vm1955, %v1948, %v1818
  %v1996 = vsel %vm1955, %v1950, %v1820
  %v1999 = vsel %vm1955, %v1952, %v1822
  %v2002 = vsel %vm1955, %v1954, %v1824
  %vm2004 = vcmask 654336
  %v2006 = vsel %vm2004, %v1794, %v1827
  %v2009 = vsel %vm2004, %v1796, %v1829
  %v2012 = vsel %vm2004, %v1798, %v1831
  %v2015 = vsel %vm2004, %v1800, %v1833
  %v2018 = vsel %vm2004, %v1802, %v1835
  %v2021 = vsel %vm2004, %v1804, %v1837
  %v2024 = vsel %vm2004, %v1806, %v1839
  %v2027 = vsel %vm2004, %v1808, %v1841
  %v2030 = vsel %vm2004, %v1810, %v1843
  %v2033 = vsel %vm2004, %v1812, %v1845
  %v2036 = vsel %vm2004, %v1814, %v1847
  %v2039 = vsel %vm2004, %v1816, %v1849
  %v2042 = vsel %vm2004, %v1818, %v1851
  %v2045 = vsel %vm2004, %v1820, %v1853
  %v2048 = vsel %vm2004, %v1822, %v1855
  %v2051 = vsel %vm2004, %v1824, %v1857
  %v2053 = vld [vmem:[%s4] sm:$0xff]
  %v2054 = vld [vmem:[%s4 + $0x8] sm:$0xff]
  %v2055 = vld [vmem:[%s4 + $0x10] sm:$0xff]
  %v2056 = vld [vmem:[%s4 + $0x18] sm:$0xff]
  %v2057 = vld [vmem:[%s4 + $0x20] sm:$0xff]
  %v2058 = vld [vmem:[%s4 + $0x28] sm:$0xff]
  %v2059 = vld [vmem:[%s4 + $0x30] sm:$0xff]
  %v2060 = vld [vmem:[%s4 + $0x38] sm:$0xff]
  %v2061 = vld [vmem:[%s4 + $0x40] sm:$0xff]
  %v2062 = vld [vmem:[%s4 + $0x48] sm:$0xff]
  %v2063 = vld [vmem:[%s4 + $0x50] sm:$0xff]
  %v2064 = vld [vmem:[%s4 + $0x58] sm:$0xff]
  %v2065 = vld [vmem:[%s4 + $0x60] sm:$0xff]
  %v2066 = vld [vmem:[%s4 + $0x68] sm:$0xff]
  %v2067 = vld [vmem:[%s4 + $0x70] sm:$0xff]
  %v2068 = vld [vmem:[%s4 + $0x78] sm:$0xff]
  %v2069 = vld [vmem:[%s4 + $0x80] sm:$0xff]
  %v2070 = vld [vmem:[%s4 + $0x88] sm:$0xff]
  %v2071 = vld [vmem:[%s4 + $0x90] sm:$0xff]
  %v2072 = vld [vmem:[%s4 + $0x98] sm:$0xff]
  %v2073 = vld [vmem:[%s4 + $0xa0] sm:$0xff]
  %v2074 = vld [vmem:[%s4 + $0xa8] sm:$0xff]
  %v2075 = vld [vmem:[%s4 + $0xb0] sm:$0xff]
  %v2076 = vld [vmem:[%s4 + $0xb8] sm:$0xff]
  %v2077 = vld [vmem:[%s4 + $0xc0] sm:$0xff]
  %v2078 = vld [vmem:[%s4 + $0xc8] sm:$0xff]
  %v2079 = vld [vmem:[%s4 + $0xd0] sm:$0xff]
  %v2080 = vld [vmem:[%s4 + $0xd8] sm:$0xff]
  %v2081 = vld [vmem:[%s4 + $0xe0] sm:$0xff]
  %v2082 = vld [vmem:[%s4 + $0xe8] sm:$0xff]
  %v2083 = vld [vmem:[%s4 + $0xf0] sm:$0xff]
  %v2084 = vld [vmem:[%s4 + $0xf8] sm:$0xff]
  %v2085 = vld [vmem:[%s4 + $0x100] sm:$0xff]
  %v2086 = vld [vmem:[%s4 + $0x108] sm:$0xff]
  %v2087 = vld [vmem:[%s4 + $0x110] sm:$0xff]
  %v2088 = vld [vmem:[%s4 + $0x118] sm:$0xff]
  %v2089 = vld [vmem:[%s4 + $0x120] sm:$0xff]
  %v2090 = vld [vmem:[%s4 + $0x128] sm:$0xff]
  %v2091 = vld [vmem:[%s4 + $0x130] sm:$0xff]
  %v2092 = vld [vmem:[%s4 + $0x138] sm:$0xff]
  %v2093 = vld [vmem:[%s4 + $0x140] sm:$0xff]
  %v2094 = vld [vmem:[%s4 + $0x148] sm:$0xff]
  %v2095 = vld [vmem:[%s4 + $0x150] sm:$0xff]
  %v2096 = vld [vmem:[%s4 + $0x158] sm:$0xff]
  %v2097 = vld [vmem:[%s4 + $0x160] sm:$0xff]
  %v2098 = vld [vmem:[%s4 + $0x168] sm:$0xff]
  %v2099 = vld [vmem:[%s4 + $0x170] sm:$0xff]
  %v2100 = vld [vmem:[%s4 + $0x178] sm:$0xff]
  %v2101 = vld [vmem:[%s4 + $0x180] sm:$0xff]
  %v2102 = vld [vmem:[%s4 + $0x188] sm:$0xff]
  %v2103 = vld [vmem:[%s4 + $0x190] sm:$0xff]
  %v2104 = vld [vmem:[%s4 + $0x198] sm:$0xff]
  %v2105 = vld [vmem:[%s4 + $0x1a0] sm:$0x33]
  %v2106 = vld [vmem:[%s5] sm:$0x3]
  %v2108 = vlaneseq
  %v2109 = vshrl.u32 %v2108, 7
  %v2110 = vsub.s32 0, %v2109
  %v2111 = vrot.slane %v2106, %v2110
  %v2112 = vlaneseq
  %v2113 = vshrl.u32 %v2112, 7
  %v2114 = vsub.s32 1, %v2113
  %v2115 = vrot.slane %v2106, %v2114
  %v2171 = vunpack.c.l.b16 %v2053
  %v2172 = vunpack.c.h.b16 %v2053
  %v2173 = vunpack.c.l.b16 %v2054
  %v2174 = vunpack.c.h.b16 %v2054
  %v2175 = vunpack.c.l.b16 %v2055
  %v2176 = vunpack.c.h.b16 %v2055
  %v2177 = vunpack.c.l.b16 %v2056
  %v2178 = vunpack.c.h.b16 %v2056
  %v2179 = vunpack.c.l.b16 %v2057
  %v2180 = vunpack.c.h.b16 %v2057
  %v2181 = vunpack.c.l.b16 %v2058
  %v2182 = vunpack.c.h.b16 %v2058
  %v2183 = vunpack.c.l.b16 %v2059
  %v2184 = vunpack.c.h.b16 %v2059
  %v2185 = vunpack.c.l.b16 %v2060
  %v2186 = vunpack.c.h.b16 %v2060
  %v2187 = vunpack.c.l.b16 %v2061
  %v2188 = vunpack.c.h.b16 %v2061
  %v2189 = vunpack.c.l.b16 %v2062
  %v2190 = vunpack.c.h.b16 %v2062
  %v2191 = vunpack.c.l.b16 %v2063
  %v2192 = vunpack.c.h.b16 %v2063
  %v2193 = vunpack.c.l.b16 %v2064
  %v2194 = vunpack.c.h.b16 %v2064
  %v2195 = vunpack.c.l.b16 %v2065
  %v2196 = vunpack.c.h.b16 %v2065
  %v2197 = vunpack.c.l.b16 %v2066
  %v2198 = vunpack.c.h.b16 %v2066
  %v2199 = vunpack.c.l.b16 %v2067
  %v2200 = vunpack.c.h.b16 %v2067
  %v2201 = vunpack.c.l.b16 %v2068
  %v2202 = vunpack.c.h.b16 %v2068
  %v2203 = vunpack.c.l.b16 %v2069
  %v2204 = vunpack.c.h.b16 %v2069
  %v2205 = vunpack.c.l.b16 %v2070
  %v2206 = vunpack.c.h.b16 %v2070
  %v2207 = vunpack.c.l.b16 %v2071
  %v2208 = vunpack.c.h.b16 %v2071
  %v2209 = vunpack.c.l.b16 %v2072
  %v2210 = vunpack.c.h.b16 %v2072
  %v2211 = vunpack.c.l.b16 %v2073
  %v2212 = vunpack.c.h.b16 %v2073
  %v2213 = vunpack.c.l.b16 %v2074
  %v2214 = vunpack.c.h.b16 %v2074
  %v2215 = vunpack.c.l.b16 %v2075
  %v2216 = vunpack.c.h.b16 %v2075
  %v2217 = vunpack.c.l.b16 %v2076
  %v2218 = vunpack.c.h.b16 %v2076
  %v2219 = vunpack.c.l.b16 %v2077
  %v2220 = vunpack.c.h.b16 %v2077
  %v2221 = vunpack.c.l.b16 %v2078
  %v2222 = vunpack.c.h.b16 %v2078
  %v2223 = vunpack.c.l.b16 %v2079
  %v2224 = vunpack.c.h.b16 %v2079
  %v2225 = vunpack.c.l.b16 %v2080
  %v2226 = vunpack.c.h.b16 %v2080
  %v2227 = vunpack.c.l.b16 %v2081
  %v2228 = vunpack.c.h.b16 %v2081
  %v2229 = vunpack.c.l.b16 %v2082
  %v2230 = vunpack.c.h.b16 %v2082
  %v2231 = vunpack.c.l.b16 %v2083
  %v2232 = vunpack.c.h.b16 %v2083
  %v2233 = vunpack.c.l.b16 %v2084
  %v2234 = vunpack.c.h.b16 %v2084
  %v2235 = vunpack.c.l.b16 %v2085
  %v2236 = vunpack.c.h.b16 %v2085
  %v2237 = vunpack.c.l.b16 %v2086
  %v2238 = vunpack.c.h.b16 %v2086
  %v2239 = vunpack.c.l.b16 %v2087
  %v2240 = vunpack.c.h.b16 %v2087
  %v2241 = vunpack.c.l.b16 %v2088
  %v2242 = vunpack.c.h.b16 %v2088
  %v2243 = vunpack.c.l.b16 %v2089
  %v2244 = vunpack.c.h.b16 %v2089
  %v2245 = vunpack.c.l.b16 %v2090
  %v2246 = vunpack.c.h.b16 %v2090
  %v2247 = vunpack.c.l.b16 %v2091
  %v2248 = vunpack.c.h.b16 %v2091
  %v2249 = vunpack.c.l.b16 %v2092
  %v2250 = vunpack.c.h.b16 %v2092
  %v2251 = vunpack.c.l.b16 %v2093
  %v2252 = vunpack.c.h.b16 %v2093
  %v2253 = vunpack.c.l.b16 %v2094
  %v2254 = vunpack.c.h.b16 %v2094
  %v2255 = vunpack.c.l.b16 %v2095
  %v2256 = vunpack.c.h.b16 %v2095
  %v2257 = vunpack.c.l.b16 %v2096
  %v2258 = vunpack.c.h.b16 %v2096
  %v2259 = vunpack.c.l.b16 %v2097
  %v2260 = vunpack.c.h.b16 %v2097
  %v2261 = vunpack.c.l.b16 %v2098
  %v2262 = vunpack.c.h.b16 %v2098
  %v2263 = vunpack.c.l.b16 %v2099
  %v2264 = vunpack.c.h.b16 %v2099
  %v2265 = vunpack.c.l.b16 %v2100
  %v2266 = vunpack.c.h.b16 %v2100
  %v2267 = vunpack.c.l.b16 %v2101
  %v2268 = vunpack.c.h.b16 %v2101
  %v2269 = vunpack.c.l.b16 %v2102
  %v2270 = vunpack.c.h.b16 %v2102
  %v2271 = vunpack.c.l.b16 %v2103
  %v2272 = vunpack.c.h.b16 %v2103
  %v2273 = vunpack.c.l.b16 %v2104
  %v2274 = vunpack.c.h.b16 %v2104
  %v2275 = vunpack.c.l.b16 %v2105
  %v2276 = vunpack.c.h.b16 %v2105
  %v2277 = vpack.c.b16 %v2173, %v2171
  %v2278 = vpack.c.b16 %v2174, %v2172
  %v2279 = vpack.c.b16 %v2177, %v2175
  %v2280 = vpack.c.b16 %v2178, %v2176
  %v2281 = vpack.c.b16 %v2181, %v2179
  %v2282 = vpack.c.b16 %v2182, %v2180
  %v2283 = vpack.c.b16 %v2185, %v2183
  %v2284 = vpack.c.b16 %v2186, %v2184
  %v2285 = vpack.c.b16 %v2189, %v2187
  %v2286 = vpack.c.b16 %v2190, %v2188
  %v2287 = vpack.c.b16 %v2193, %v2191
  %v2288 = vpack.c.b16 %v2194, %v2192
  %v2289 = vpack.c.b16 %v2197, %v2195
  %v2290 = vpack.c.b16 %v2198, %v2196
  %v2291 = vpack.c.b16 %v2201, %v2199
  %v2292 = vpack.c.b16 %v2202, %v2200
  %v2293 = vpack.c.b16 %v2205, %v2203
  %v2294 = vpack.c.b16 %v2206, %v2204
  %v2295 = vpack.c.b16 %v2209, %v2207
  %v2296 = vpack.c.b16 %v2210, %v2208
  %v2297 = vpack.c.b16 %v2213, %v2211
  %v2298 = vpack.c.b16 %v2214, %v2212
  %v2299 = vpack.c.b16 %v2217, %v2215
  %v2300 = vpack.c.b16 %v2218, %v2216
  %v2301 = vpack.c.b16 %v2221, %v2219
  %v2302 = vpack.c.b16 %v2222, %v2220
  %v2303 = vpack.c.b16 %v2225, %v2223
  %v2304 = vpack.c.b16 %v2226, %v2224
  %v2305 = vpack.c.b16 %v2229, %v2227
  %v2306 = vpack.c.b16 %v2230, %v2228
  %v2307 = vpack.c.b16 %v2233, %v2231
  %v2308 = vpack.c.b16 %v2234, %v2232
  %v2309 = vpack.c.b16 %v2237, %v2235
  %v2310 = vpack.c.b16 %v2238, %v2236
  %v2311 = vpack.c.b16 %v2241, %v2239
  %v2312 = vpack.c.b16 %v2242, %v2240
  %v2313 = vpack.c.b16 %v2245, %v2243
  %v2314 = vpack.c.b16 %v2246, %v2244
  %v2315 = vpack.c.b16 %v2249, %v2247
  %v2316 = vpack.c.b16 %v2250, %v2248
  %v2317 = vpack.c.b16 %v2253, %v2251
  %v2318 = vpack.c.b16 %v2254, %v2252
  %v2319 = vpack.c.b16 %v2257, %v2255
  %v2320 = vpack.c.b16 %v2258, %v2256
  %v2321 = vpack.c.b16 %v2261, %v2259
  %v2322 = vpack.c.b16 %v2262, %v2260
  %v2323 = vpack.c.b16 %v2265, %v2263
  %v2324 = vpack.c.b16 %v2266, %v2264
  %v2325 = vpack.c.b16 %v2269, %v2267
  %v2326 = vpack.c.b16 %v2270, %v2268
  %v2327 = vpack.c.b16 %v2273, %v2271
  %v2328 = vpack.c.b16 %v2274, %v2272
  %v2329 = vpack.c.b16 %v2275, %v2275
  %v2330 = vpack.c.b16 %v2276, %v2276
  %vm2383 = vcmask 293888
  %v2384 = vsel %vm2383, %v1827, 0
  %v2386 = vsel %vm2383, %v1829, 0
  %v2388 = vsel %vm2383, %v1831, 0
  %v2390 = vsel %vm2383, %v1833, 0
  %v2392 = vsel %vm2383, %v1835, 0
  %v2394 = vsel %vm2383, %v1837, 0
  %v2396 = vsel %vm2383, %v1839, 0
  %v2398 = vsel %vm2383, %v1841, 0
  %v2400 = vsel %vm2383, %v1843, 0
  %v2402 = vsel %vm2383, %v1845, 0
  %v2404 = vsel %vm2383, %v1847, 0
  %v2406 = vsel %vm2383, %v1849, 0
  %v2408 = vsel %vm2383, %v1851, 0
  %v2410 = vsel %vm2383, %v1853, 0
  %v2412 = vsel %vm2383, %v1855, 0
  %v2414 = vsel %vm2383, %v1857, 0
  %vm2416 = vcmask 1041408
  %v2418 = vsel %vm2416, %v2329, 0
  %v2421 = vsel %vm2416, %v2330, 0
  %2423 = vmatprep.subr.bf16.mxu0 %v2278
  %2424 = vmatpush1.bf16.msra.mxu0 %v2277
  %2425 = vmatprep.subr.bf16.mxu0 %v2280
  %2426 = vmatpush1.bf16.msra.mxu0 %v2279
  %2427 = vmatprep.subr.bf16.mxu0 %v2282
  %2428 = vmatpush1.bf16.msra.mxu0 %v2281
  %2429 = vmatprep.subr.bf16.mxu0 %v2284
  %2430 = vmatpush1.bf16.msra.mxu0 %v2283
  %2431 = vmatprep.subr.bf16.mxu0 %v2286
  %2432 = vmatpush1.bf16.msra.mxu0 %v2285
  %2433 = vmatprep.subr.bf16.mxu0 %v2288
  %2434 = vmatpush1.bf16.msra.mxu0 %v2287
  %2435 = vmatprep.subr.bf16.mxu0 %v2290
  %2436 = vmatpush1.bf16.msra.mxu0 %v2289
  %2437 = vmatprep.subr.bf16.mxu0 %v2292
  %2438 = vmatpush1.bf16.msra.mxu0 %v2291
  %2439 = vmatprep.subr.bf16.mxu0 %v2294
  %2440 = vmatpush1.bf16.msra.mxu0 %v2293
  %2441 = vmatprep.subr.bf16.mxu0 %v2296
  %2442 = vmatpush1.bf16.msra.mxu0 %v2295
  %2443 = vmatprep.subr.bf16.mxu0 %v2298
  %2444 = vmatpush1.bf16.msra.mxu0 %v2297
  %2445 = vmatprep.subr.bf16.mxu0 %v2300
  %2446 = vmatpush1.bf16.msra.mxu0 %v2299
  %2447 = vmatprep.subr.bf16.mxu0 %v2302
  %2448 = vmatpush1.bf16.msra.mxu0 %v2301
  %2449 = vmatprep.subr.bf16.mxu0 %v2304
  %2450 = vmatpush1.bf16.msra.mxu0 %v2303
  %2451 = vmatprep.subr.bf16.mxu0 %v2306
  %2452 = vmatpush1.bf16.msra.mxu0 %v2305
  %2453 = vmatprep.subr.bf16.mxu0 %v2308
  %2454 = vmatpush1.bf16.msra.mxu0 %v2307
  %2455 = vmatprep.mubr.bf16.mxu0 %v1957
  %2456 = vmatmul.mubr.bf16.gmra.mrb[0].mxu0 %v1861
  %v2457 = vpop.f32.mrb[0].mxu0
  %v2458 = vadd.f32 %v2111, %v2457
  %v2459 = vpop.f32.mrb[0].mxu0
  %v2460 = vadd.f32 %v2115, %v2459
  %v2461 = vpop.f32.mrb[0].mxu0
  %v2462 = vadd.f32 %v2111, %v2461
  %v2463 = vpop.f32.mrb[0].mxu0
  %v2464 = vadd.f32 %v2115, %v2463
  %2465 = vmatprep.mubr.bf16.mxu0 %v1960
  %2466 = vmatmul.mubr.bf16.gmra.mrb[0].mxu0 %v1865
  %v2467 = vpop.f32.mrb[0].mxu0
  %v2468 = vadd.f32 %v2111, %v2467
  %v2469 = vpop.f32.mrb[0].mxu0
  %v2470 = vadd.f32 %v2115, %v2469
  %v2471 = vpop.f32.mrb[0].mxu0
  %v2472 = vadd.f32 %v2111, %v2471
  %v2473 = vpop.f32.mrb[0].mxu0
  %v2474 = vadd.f32 %v2115, %v2473
  %2475 = vmatprep.mubr.bf16.mxu0 %v1963
  %2476 = vmatmul.mubr.bf16.gmra.mrb[0].mxu0 %v1869
  %v2477 = vpop.f32.mrb[0].mxu0
  %v2478 = vadd.f32 %v2111, %v2477
  %v2479 = vpop.f32.mrb[0].mxu0
  %v2480 = vadd.f32 %v2115, %v2479
  %v2481 = vpop.f32.mrb[0].mxu0
  %v2482 = vadd.f32 %v2111, %v2481
  %v2483 = vpop.f32.mrb[0].mxu0
  %v2484 = vadd.f32 %v2115, %v2483
  %2485 = vmatprep.mubr.bf16.mxu0 %v1966
  %2486 = vmatmul.mubr.bf16.gmra.mrb[0].mxu0 %v1873
  %v2487 = vpop.f32.mrb[0].mxu0
  %v2488 = vadd.f32 %v2111, %v2487
  %v2489 = vpop.f32.mrb[0].mxu0
  %v2490 = vadd.f32 %v2115, %v2489
  %v2491 = vpop.f32.mrb[0].mxu0
  %v2492 = vadd.f32 %v2111, %v2491
  %v2493 = vpop.f32.mrb[0].mxu0
  %v2494 = vadd.f32 %v2115, %v2493
  %2495 = vmatprep.mubr.bf16.mxu0 %v1969
  %2496 = vmatmul.mubr.bf16.gmra.mrb[0].mxu0 %v1877
  %v2497 = vpop.f32.mrb[0].mxu0
  %v2498 = vadd.f32 %v2111, %v2497
  %v2499 = vpop.f32.mrb[0].mxu0
  %v2500 = vadd.f32 %v2115, %v2499
  %v2501 = vpop.f32.mrb[0].mxu0
  %v2502 = vadd.f32 %v2111, %v2501
  %v2503 = vpop.f32.mrb[0].mxu0
  %v2504 = vadd.f32 %v2115, %v2503
  %2505 = vmatprep.mubr.bf16.mxu0 %v1972
  %2506 = vmatmul.mubr.bf16.gmra.mrb[0].mxu0 %v1881
  %v2507 = vpop.f32.mrb[0].mxu0
  %v2508 = vadd.f32 %v2111, %v2507
  %v2509 = vpop.f32.mrb[0].mxu0
  %v2510 = vadd.f32 %v2115, %v2509
  %v2511 = vpop.f32.mrb[0].mxu0
  %v2512 = vadd.f32 %v2111, %v2511
  %v2513 = vpop.f32.mrb[0].mxu0
  %v2514 = vadd.f32 %v2115, %v2513
  %2515 = vmatprep.mubr.bf16.mxu0 %v1975
  %2516 = vmatmul.mubr.bf16.gmra.mrb[0].mxu0 %v1885
  %v2517 = vpop.f32.mrb[0].mxu0
  %v2518 = vadd.f32 %v2111, %v2517
  %v2519 = vpop.f32.mrb[0].mxu0
  %v2520 = vadd.f32 %v2115, %v2519
  %v2521 = vpop.f32.mrb[0].mxu0
  %v2522 = vadd.f32 %v2111, %v2521
  %v2523 = vpop.f32.mrb[0].mxu0
  %v2524 = vadd.f32 %v2115, %v2523
  %2525 = vmatprep.mubr.bf16.mxu0 %v1978
  %2526 = vmatmul.mubr.bf16.gmra.mrb[0].mxu0 %v1889
  %v2527 = vpop.f32.mrb[0].mxu0
  %v2528 = vadd.f32 %v2111, %v2527
  %v2529 = vpop.f32.mrb[0].mxu0
  %v2530 = vadd.f32 %v2115, %v2529
  %v2531 = vpop.f32.mrb[0].mxu0
  %v2532 = vadd.f32 %v2111, %v2531
  %v2533 = vpop.f32.mrb[0].mxu0
  %v2534 = vadd.f32 %v2115, %v2533
  %2535 = vmatprep.mubr.bf16.mxu0 %v1981
  %2536 = vmatmul.mubr.bf16.gmra.mrb[0].mxu0 %v1893
  %v2537 = vpop.f32.mrb[0].mxu0
  %v2538 = vadd.f32 %v2111, %v2537
  %v2539 = vpop.f32.mrb[0].mxu0
  %v2540 = vadd.f32 %v2115, %v2539
  %v2541 = vpop.f32.mrb[0].mxu0
  %v2542 = vadd.f32 %v2111, %v2541
  %v2543 = vpop.f32.mrb[0].mxu0
  %v2544 = vadd.f32 %v2115, %v2543
  %2545 = vmatprep.mubr.bf16.mxu0 %v1984
  %2546 = vmatmul.mubr.bf16.gmra.mrb[0].mxu0 %v1897
  %v2547 = vpop.f32.mrb[0].mxu0
  %v2548 = vadd.f32 %v2111, %v2547
  %v2549 = vpop.f32.mrb[0].mxu0
  %v2550 = vadd.f32 %v2115, %v2549
  %v2551 = vpop.f32.mrb[0].mxu0
  %v2552 = vadd.f32 %v2111, %v2551
  %v2553 = vpop.f32.mrb[0].mxu0
  %v2554 = vadd.f32 %v2115, %v2553
  %2555 = vmatprep.mubr.bf16.mxu0 %v1987
  %2556 = vmatmul.mubr.bf16.gmra.mrb[0].mxu0 %v1901
  %v2557 = vpop.f32.mrb[0].mxu0
  %v2558 = vadd.f32 %v2111, %v2557
  %v2559 = vpop.f32.mrb[0].mxu0
  %v2560 = vadd.f32 %v2115, %v2559
  %v2561 = vpop.f32.mrb[0].mxu0
  %v2562 = vadd.f32 %v2111, %v2561
  %v2563 = vpop.f32.mrb[0].mxu0
  %v2564 = vadd.f32 %v2115, %v2563
  %2565 = vmatprep.mubr.bf16.mxu0 %v1990
  %2566 = vmatmul.mubr.bf16.gmra.mrb[0].mxu0 %v1905
  %v2567 = vpop.f32.mrb[0].mxu0
  %v2568 = vadd.f32 %v2111, %v2567
  %v2569 = vpop.f32.mrb[0].mxu0
  %v2570 = vadd.f32 %v2115, %v2569
  %v2571 = vpop.f32.mrb[0].mxu0
  %v2572 = vadd.f32 %v2111, %v2571
  %v2573 = vpop.f32.mrb[0].mxu0
  %v2574 = vadd.f32 %v2115, %v2573
  %2575 = vmatprep.mubr.bf16.mxu0 %v1993
  %2576 = vmatmul.mubr.bf16.gmra.mrb[0].mxu0 %v1909
  %v2577 = vpop.f32.mrb[0].mxu0
  %v2578 = vadd.f32 %v2111, %v2577
  %v2579 = vpop.f32.mrb[0].mxu0
  %v2580 = vadd.f32 %v2115, %v2579
  %v2581 = vpop.f32.mrb[0].mxu0
  %v2582 = vadd.f32 %v2111, %v2581
  %v2583 = vpop.f32.mrb[0].mxu0
  %v2584 = vadd.f32 %v2115, %v2583
  %2585 = vmatprep.mubr.bf16.mxu0 %v1996
  %2586 = vmatmul.mubr.bf16.gmra.mrb[0].mxu0 %v1913
  %v2587 = vpop.f32.mrb[0].mxu0
  %v2588 = vadd.f32 %v2111, %v2587
  %v2589 = vpop.f32.mrb[0].mxu0
  %v2590 = vadd.f32 %v2115, %v2589
  %v2591 = vpop.f32.mrb[0].mxu0
  %v2592 = vadd.f32 %v2111, %v2591
  %v2593 = vpop.f32.mrb[0].mxu0
  %v2594 = vadd.f32 %v2115, %v2593
  %2595 = vmatprep.mubr.bf16.mxu0 %v1999
  %2596 = vmatmul.mubr.bf16.gmra.mrb[0].mxu0 %v1917
  %v2597 = vpop.f32.mrb[0].mxu0
  %v2598 = vadd.f32 %v2111, %v2597
  %v2599 = vpop.f32.mrb[0].mxu0
  %v2600 = vadd.f32 %v2115, %v2599
  %v2601 = vpop.f32.mrb[0].mxu0
  %v2602 = vadd.f32 %v2111, %v2601
  %v2603 = vpop.f32.mrb[0].mxu0
  %v2604 = vadd.f32 %v2115, %v2603
  %2605 = vmatprep.mubr.bf16.mxu0 %v2002
  %2606 = vmatmul.mubr.bf16.gmra.mrb[0].mxu0 %v1921
  %v2607 = vpop.f32.mrb[0].mxu0
  %v2608 = vadd.f32 %v2111, %v2607
  %v2609 = vpop.f32.mrb[0].mxu0
  %v2610 = vadd.f32 %v2115, %v2609
  %v2611 = vpop.f32.mrb[0].mxu0
  %v2612 = vadd.f32 %v2111, %v2611
  %v2613 = vpop.f32.mrb[0].mxu0
  %v2614 = vadd.f32 %v2115, %v2613
  %2615 = vdwg.mxu0
  %2616 = vmatprep.subr.bf16.mxu0 %v2310
  %2617 = vmatpush1.bf16.msra.mxu0 %v2309
  %2618 = vmatprep.subr.bf16.mxu0 %v2312
  %2619 = vmatpush1.bf16.msra.mxu0 %v2311
  %2620 = vmatprep.subr.bf16.mxu0 %v2314
  %2621 = vmatpush1.bf16.msra.mxu0 %v2313
  %2622 = vmatprep.subr.bf16.mxu0 %v2316
  %2623 = vmatpush1.bf16.msra.mxu0 %v2315
  %2624 = vmatprep.subr.bf16.mxu0 %v2318
  %2625 = vmatpush1.bf16.msra.mxu0 %v2317
  %2626 = vmatprep.subr.bf16.mxu0 %v2320
  %2627 = vmatpush1.bf16.msra.mxu0 %v2319
  %2628 = vmatprep.subr.bf16.mxu0 %v2322
  %2629 = vmatpush1.bf16.msra.mxu0 %v2321
  %2630 = vmatprep.subr.bf16.mxu0 %v2324
  %2631 = vmatpush1.bf16.msra.mxu0 %v2323
  %2632 = vmatprep.subr.bf16.mxu0 %v2326
  %2633 = vmatpush1.bf16.msra.mxu0 %v2325
  %2634 = vmatprep.subr.bf16.mxu0 %v2328
  %2635 = vmatpush1.bf16.msra.mxu0 %v2327
  %2636 = vmatprep.subr.bf16.mxu0 %v2421
  %2637 = vmatpush1.bf16.msra.mxu0 %v2418
  %2638 = vmatprep.subr.bf16.mxu0 0
  %2639 = vmatpush1.bf16.msra.mxu0 0
  %2640 = vmatprep.subr.bf16.mxu0 0
  %2641 = vmatpush1.bf16.msra.mxu0 0
  %2642 = vmatprep.subr.bf16.mxu0 0
  %2643 = vmatpush1.bf16.msra.mxu0 0
  %2644 = vmatprep.subr.bf16.mxu0 0
  %2645 = vmatpush1.bf16.msra.mxu0 0
  %2646 = vmatprep.subr.bf16.mxu0 0
  %2647 = vmatpush1.bf16.msra.mxu0 0
  %2648 = vmatprep.mubr.bf16.mxu0 %v2384
  %2649 = vmatmul.mubr.bf16.gmra.mrb[0].mxu0 %v2006
  %v2650 = vpop.f32.mrb[0].mxu0
  %v2651 = vadd.f32 %v2458, %v2650
  %v2652 = vpop.f32.mrb[0].mxu0
  %v2653 = vadd.f32 %v2460, %v2652
  %v2654 = vpop.f32.mrb[0].mxu0
  %v2655 = vadd.f32 %v2462, %v2654
  %v2656 = vpop.f32.mrb[0].mxu0
  %v2657 = vadd.f32 %v2464, %v2656
  %2658 = vmatprep.mubr.bf16.mxu0 %v2386
  %2659 = vmatmul.mubr.bf16.gmra.mrb[0].mxu0 %v2009
  %v2660 = vpop.f32.mrb[0].mxu0
  %v2661 = vadd.f32 %v2468, %v2660
  %v2662 = vpop.f32.mrb[0].mxu0
  %v2663 = vadd.f32 %v2470, %v2662
  %v2664 = vpop.f32.mrb[0].mxu0
  %v2665 = vadd.f32 %v2472, %v2664
  %v2666 = vpop.f32.mrb[0].mxu0
  %v2667 = vadd.f32 %v2474, %v2666
  %2668 = vmatprep.mubr.bf16.mxu0 %v2388
  %2669 = vmatmul.mubr.bf16.gmra.mrb[0].mxu0 %v2012
  %v2670 = vpop.f32.mrb[0].mxu0
  %v2671 = vadd.f32 %v2478, %v2670
  %v2672 = vpop.f32.mrb[0].mxu0
  %v2673 = vadd.f32 %v2480, %v2672
  %v2674 = vpop.f32.mrb[0].mxu0
  %v2675 = vadd.f32 %v2482, %v2674
  %v2676 = vpop.f32.mrb[0].mxu0
  %v2677 = vadd.f32 %v2484, %v2676
  %2678 = vmatprep.mubr.bf16.mxu0 %v2390
  %2679 = vmatmul.mubr.bf16.gmra.mrb[0].mxu0 %v2015
  %v2680 = vpop.f32.mrb[0].mxu0
  %v2681 = vadd.f32 %v2488, %v2680
  %v2682 = vpop.f32.mrb[0].mxu0
  %v2683 = vadd.f32 %v2490, %v2682
  %v2684 = vpop.f32.mrb[0].mxu0
  %v2685 = vadd.f32 %v2492, %v2684
  %v2686 = vpop.f32.mrb[0].mxu0
  %v2687 = vadd.f32 %v2494, %v2686
  %2688 = vmatprep.mubr.bf16.mxu0 %v2392
  %2689 = vmatmul.mubr.bf16.gmra.mrb[0].mxu0 %v2018
  %v2690 = vpop.f32.mrb[0].mxu0
  %v2691 = vadd.f32 %v2498, %v2690
  %v2692 = vpop.f32.mrb[0].mxu0
  %v2693 = vadd.f32 %v2500, %v2692
  %v2694 = vpop.f32.mrb[0].mxu0
  %v2695 = vadd.f32 %v2502, %v2694
  %v2696 = vpop.f32.mrb[0].mxu0
  %v2697 = vadd.f32 %v2504, %v2696
  %2698 = vmatprep.mubr.bf16.mxu0 %v2394
  %2699 = vmatmul.mubr.bf16.gmra.mrb[0].mxu0 %v2021
  %v2700 = vpop.f32.mrb[0].mxu0
  %v2701 = vadd.f32 %v2508, %v2700
  %v2702 = vpop.f32.mrb[0].mxu0
  %v2703 = vadd.f32 %v2510, %v2702
  %v2704 = vpop.f32.mrb[0].mxu0
  %v2705 = vadd.f32 %v2512, %v2704
  %v2706 = vpop.f32.mrb[0].mxu0
  %v2707 = vadd.f32 %v2514, %v2706
  %2708 = vmatprep.mubr.bf16.mxu0 %v2396
  %2709 = vmatmul.mubr.bf16.gmra.mrb[0].mxu0 %v2024
  %v2710 = vpop.f32.mrb[0].mxu0
  %v2711 = vadd.f32 %v2518, %v2710
  %v2712 = vpop.f32.mrb[0].mxu0
  %v2713 = vadd.f32 %v2520, %v2712
  %v2714 = vpop.f32.mrb[0].mxu0
  %v2715 = vadd.f32 %v2522, %v2714
  %v2716 = vpop.f32.mrb[0].mxu0
  %v2717 = vadd.f32 %v2524, %v2716
  %2718 = vmatprep.mubr.bf16.mxu0 %v2398
  %2719 = vmatmul.mubr.bf16.gmra.mrb[0].mxu0 %v2027
  %v2720 = vpop.f32.mrb[0].mxu0
  %v2721 = vadd.f32 %v2528, %v2720
  %v2722 = vpop.f32.mrb[0].mxu0
  %v2723 = vadd.f32 %v2530, %v2722
  %v2724 = vpop.f32.mrb[0].mxu0
  %v2725 = vadd.f32 %v2532, %v2724
  %v2726 = vpop.f32.mrb[0].mxu0
  %v2727 = vadd.f32 %v2534, %v2726
  %2728 = vmatprep.mubr.bf16.mxu0 %v2400
  %2729 = vmatmul.mubr.bf16.gmra.mrb[0].mxu0 %v2030
  %v2730 = vpop.f32.mrb[0].mxu0
  %v2731 = vadd.f32 %v2538, %v2730
  %v2732 = vpop.f32.mrb[0].mxu0
  %v2733 = vadd.f32 %v2540, %v2732
  %v2734 = vpop.f32.mrb[0].mxu0
  %v2735 = vadd.f32 %v2542, %v2734
  %v2736 = vpop.f32.mrb[0].mxu0
  %v2737 = vadd.f32 %v2544, %v2736
  %2738 = vmatprep.mubr.bf16.mxu0 %v2402
  %2739 = vmatmul.mubr.bf16.gmra.mrb[0].mxu0 %v2033
  %v2740 = vpop.f32.mrb[0].mxu0
  %v2741 = vadd.f32 %v2548, %v2740
  %v2742 = vpop.f32.mrb[0].mxu0
  %v2743 = vadd.f32 %v2550, %v2742
  %v2744 = vpop.f32.mrb[0].mxu0
  %v2745 = vadd.f32 %v2552, %v2744
  %v2746 = vpop.f32.mrb[0].mxu0
  %v2747 = vadd.f32 %v2554, %v2746
  %2748 = vmatprep.mubr.bf16.mxu0 %v2404
  %2749 = vmatmul.mubr.bf16.gmra.mrb[0].mxu0 %v2036
  %v2750 = vpop.f32.mrb[0].mxu0
  %v2751 = vadd.f32 %v2558, %v2750
  %v2752 = vpop.f32.mrb[0].mxu0
  %v2753 = vadd.f32 %v2560, %v2752
  %v2754 = vpop.f32.mrb[0].mxu0
  %v2755 = vadd.f32 %v2562, %v2754
  %v2756 = vpop.f32.mrb[0].mxu0
  %v2757 = vadd.f32 %v2564, %v2756
  %2758 = vmatprep.mubr.bf16.mxu0 %v2406
  %2759 = vmatmul.mubr.bf16.gmra.mrb[0].mxu0 %v2039
  %v2760 = vpop.f32.mrb[0].mxu0
  %v2761 = vadd.f32 %v2568, %v2760
  %v2762 = vpop.f32.mrb[0].mxu0
  %v2763 = vadd.f32 %v2570, %v2762
  %v2764 = vpop.f32.mrb[0].mxu0
  %v2765 = vadd.f32 %v2572, %v2764
  %v2766 = vpop.f32.mrb[0].mxu0
  %v2767 = vadd.f32 %v2574, %v2766
  %2768 = vmatprep.mubr.bf16.mxu0 %v2408
  %2769 = vmatmul.mubr.bf16.gmra.mrb[0].mxu0 %v2042
  %v2770 = vpop.f32.mrb[0].mxu0
  %v2771 = vadd.f32 %v2578, %v2770
  %v2772 = vpop.f32.mrb[0].mxu0
  %v2773 = vadd.f32 %v2580, %v2772
  %v2774 = vpop.f32.mrb[0].mxu0
  %v2775 = vadd.f32 %v2582, %v2774
  %v2776 = vpop.f32.mrb[0].mxu0
  %v2777 = vadd.f32 %v2584, %v2776
  %2778 = vmatprep.mubr.bf16.mxu0 %v2410
  %2779 = vmatmul.mubr.bf16.gmra.mrb[0].mxu0 %v2045
  %v2780 = vpop.f32.mrb[0].mxu0
  %v2781 = vadd.f32 %v2588, %v2780
  %v2782 = vpop.f32.mrb[0].mxu0
  %v2783 = vadd.f32 %v2590, %v2782
  %v2784 = vpop.f32.mrb[0].mxu0
  %v2785 = vadd.f32 %v2592, %v2784
  %v2786 = vpop.f32.mrb[0].mxu0
  %v2787 = vadd.f32 %v2594, %v2786
  %2788 = vmatprep.mubr.bf16.mxu0 %v2412
  %2789 = vmatmul.mubr.bf16.gmra.mrb[0].mxu0 %v2048
  %v2790 = vpop.f32.mrb[0].mxu0
  %v2791 = vadd.f32 %v2598, %v2790
  %v2792 = vpop.f32.mrb[0].mxu0
  %v2793 = vadd.f32 %v2600, %v2792
  %v2794 = vpop.f32.mrb[0].mxu0
  %v2795 = vadd.f32 %v2602, %v2794
  %v2796 = vpop.f32.mrb[0].mxu0
  %v2797 = vadd.f32 %v2604, %v2796
  %2798 = vmatprep.mubr.bf16.mxu0 %v2414
  %2799 = vmatmul.mubr.bf16.gmra.mrb[0].mxu0 %v2051
  %v2800 = vpop.f32.mrb[0].mxu0
  %v2801 = vadd.f32 %v2608, %v2800
  %v2802 = vpop.f32.mrb[0].mxu0
  %v2803 = vadd.f32 %v2610, %v2802
  %v2804 = vpop.f32.mrb[0].mxu0
  %v2805 = vadd.f32 %v2612, %v2804
  %v2806 = vpop.f32.mrb[0].mxu0
  %v2807 = vadd.f32 %v2614, %v2806
  %2808 = vdwg.mxu0
  %v2809 = vtanh.pop %v2651
  %v2810 = vtanh.pop %v2653
  %v2811 = vtanh.pop %v2655
  %v2812 = vtanh.pop %v2657
  %v2813 = vtanh.pop %v2661
  %v2814 = vtanh.pop %v2663
  %v2815 = vtanh.pop %v2665
  %v2816 = vtanh.pop %v2667
  %v2817 = vtanh.pop %v2671
  %v2818 = vtanh.pop %v2673
  %v2819 = vtanh.pop %v2675
  %v2820 = vtanh.pop %v2677
  %v2821 = vtanh.pop %v2681
  %v2822 = vtanh.pop %v2683
  %v2823 = vtanh.pop %v2685
  %v2824 = vtanh.pop %v2687
  %v2825 = vtanh.pop %v2691
  %v2826 = vtanh.pop %v2693
  %v2827 = vtanh.pop %v2695
  %v2828 = vtanh.pop %v2697
  %v2829 = vtanh.pop %v2701
  %v2830 = vtanh.pop %v2703
  %v2831 = vtanh.pop %v2705
  %v2832 = vtanh.pop %v2707
  %v2833 = vtanh.pop %v2711
  %v2834 = vtanh.pop %v2713
  %v2835 = vtanh.pop %v2715
  %v2836 = vtanh.pop %v2717
  %v2837 = vtanh.pop %v2721
  %v2838 = vtanh.pop %v2723
  %v2839 = vtanh.pop %v2725
  %v2840 = vtanh.pop %v2727
  %v2841 = vtanh.pop %v2731
  %v2842 = vtanh.pop %v2733
  %v2843 = vtanh.pop %v2735
  %v2844 = vtanh.pop %v2737
  %v2845 = vtanh.pop %v2741
  %v2846 = vtanh.pop %v2743
  %v2847 = vtanh.pop %v2745
  %v2848 = vtanh.pop %v2747
  %v2849 = vtanh.pop %v2751
  %v2850 = vtanh.pop %v2753
  %v2851 = vtanh.pop %v2755
  %v2852 = vtanh.pop %v2757
  %v2853 = vtanh.pop %v2761
  %v2854 = vtanh.pop %v2763
  %v2855 = vtanh.pop %v2765
  %v2856 = vtanh.pop %v2767
  %v2857 = vtanh.pop %v2771
  %v2858 = vtanh.pop %v2773
  %v2859 = vtanh.pop %v2775
  %v2860 = vtanh.pop %v2777
  %v2861 = vtanh.pop %v2781
  %v2862 = vtanh.pop %v2783
  %v2863 = vtanh.pop %v2785
  %v2864 = vtanh.pop %v2787
  %v2865 = vtanh.pop %v2791
  %v2866 = vtanh.pop %v2793
  %v2867 = vtanh.pop %v2795
  %v2868 = vtanh.pop %v2797
  %v2869 = vtanh.pop %v2801
  %v2870 = vtanh.pop %v2803
  %v2871 = vtanh.pop %v2805
  %v2872 = vtanh.pop %v2807
  %v2873 = vpack.c.bf16 %v2811, %v2809
  %v2874 = vpack.c.bf16 %v2812, %v2810
  %v2875 = vpack.c.bf16 %v2815, %v2813
  %v2876 = vpack.c.bf16 %v2816, %v2814
  %v2877 = vpack.c.bf16 %v2819, %v2817
  %v2878 = vpack.c.bf16 %v2820, %v2818
  %v2879 = vpack.c.bf16 %v2823, %v2821
  %v2880 = vpack.c.bf16 %v2824, %v2822
  %v2881 = vpack.c.bf16 %v2827, %v2825
  %v2882 = vpack.c.bf16 %v2828, %v2826
  %v2883 = vpack.c.bf16 %v2831, %v2829
  %v2884 = vpack.c.bf16 %v2832, %v2830
  %v2885 = vpack.c.bf16 %v2835, %v2833
  %v2886 = vpack.c.bf16 %v2836, %v2834
  %v2887 = vpack.c.bf16 %v2839, %v2837
  %v2888 = vpack.c.bf16 %v2840, %v2838
  %v2889 = vpack.c.bf16 %v2843, %v2841
  %v2890 = vpack.c.bf16 %v2844, %v2842
  %v2891 = vpack.c.bf16 %v2847, %v2845
  %v2892 = vpack.c.bf16 %v2848, %v2846
  %v2893 = vpack.c.bf16 %v2851, %v2849
  %v2894 = vpack.c.bf16 %v2852, %v2850
  %v2895 = vpack.c.bf16 %v2855, %v2853
  %v2896 = vpack.c.bf16 %v2856, %v2854
  %v2897 = vpack.c.bf16 %v2859, %v2857
  %v2898 = vpack.c.bf16 %v2860, %v2858
  %v2899 = vpack.c.bf16 %v2863, %v2861
  %v2900 = vpack.c.bf16 %v2864, %v2862
  %v2901 = vpack.c.bf16 %v2867, %v2865
  %v2902 = vpack.c.bf16 %v2868, %v2866
  %v2903 = vpack.c.bf16 %v2871, %v2869
  %v2904 = vpack.c.bf16 %v2872, %v2870
  %v2905 = vld [vmem:[%s6] sm:$0xf]
  %v2906 = vld [vmem:[%s6 + $0x4] sm:$0xf]
  %v2907 = vld [vmem:[%s6 + $0x8] sm:$0xf]
  %v2908 = vld [vmem:[%s6 + $0xc] sm:$0xf]
  %v2909 = vld [vmem:[%s6 + $0x10] sm:$0xf]
  %v2910 = vld [vmem:[%s6 + $0x14] sm:$0xf]
  %v2911 = vld [vmem:[%s6 + $0x18] sm:$0xf]
  %v2912 = vld [vmem:[%s6 + $0x1c] sm:$0xf]
  %v2913 = vld [vmem:[%s6 + $0x20] sm:$0xf]
  %v2914 = vld [vmem:[%s6 + $0x24] sm:$0xf]
  %v2915 = vld [vmem:[%s6 + $0x28] sm:$0xf]
  %v2916 = vld [vmem:[%s6 + $0x2c] sm:$0xf]
  %v2917 = vld [vmem:[%s6 + $0x30] sm:$0xf]
  %v2918 = vld [vmem:[%s6 + $0x34] sm:$0xf]
  %v2919 = vld [vmem:[%s6 + $0x38] sm:$0xf]
  %v2920 = vld [vmem:[%s6 + $0x3c] sm:$0xf]
  %v2921 = vld [vmem:[%s6 + $0x40] sm:$0xf]
  %v2922 = vld [vmem:[%s6 + $0x44] sm:$0xf]
  %v2923 = vld [vmem:[%s6 + $0x48] sm:$0xf]
  %v2924 = vld [vmem:[%s6 + $0x4c] sm:$0xf]
  %v2945 = vunpack.c.l.b16 %v2905
  %v2946 = vunpack.c.l.b16 %v2906
  %v2947 = vunpack.c.l.b16 %v2907
  %v2948 = vunpack.c.l.b16 %v2908
  %v2949 = vunpack.c.l.b16 %v2909
  %v2950 = vunpack.c.l.b16 %v2910
  %v2951 = vunpack.c.l.b16 %v2911
  %v2952 = vunpack.c.l.b16 %v2912
  %v2953 = vunpack.c.l.b16 %v2913
  %v2954 = vunpack.c.l.b16 %v2914
  %v2955 = vunpack.c.l.b16 %v2915
  %v2956 = vunpack.c.l.b16 %v2916
  %v2957 = vunpack.c.l.b16 %v2917
  %v2958 = vunpack.c.l.b16 %v2918
  %v2959 = vunpack.c.l.b16 %v2919
  %v2960 = vunpack.c.l.b16 %v2920
  %v2961 = vunpack.c.l.b16 %v2921
  %v2962 = vunpack.c.l.b16 %v2922
  %v2963 = vunpack.c.l.b16 %v2923
  %v2964 = vunpack.c.l.b16 %v2924
  %v2965 = vpack.c.b16 %v2946, %v2945
  %v2966 = vpack.c.b16 %v2948, %v2947
  %v2967 = vpack.c.b16 %v2950, %v2949
  %v2968 = vpack.c.b16 %v2952, %v2951
  %v2969 = vpack.c.b16 %v2954, %v2953
  %v2970 = vpack.c.b16 %v2956, %v2955
  %v2971 = vpack.c.b16 %v2958, %v2957
  %v2972 = vpack.c.b16 %v2960, %v2959
  %v2973 = vpack.c.b16 %v2962, %v2961
  %v2974 = vpack.c.b16 %v2964, %v2963
  %v2986 = vsel %vm481, %v2874, 0
  %v2989 = vsel %vm481, %v2876, 0
  %v2992 = vsel %vm481, %v2878, 0
  %v2995 = vsel %vm481, %v2880, 0
  %v2998 = vsel %vm481, %v2882, 0
  %v3001 = vsel %vm481, %v2884, 0
  %v3004 = vsel %vm481, %v2886, 0
  %v3007 = vsel %vm481, %v2888, 0
  %v3010 = vsel %vm481, %v2890, 0
  %v3013 = vsel %vm481, %v2892, 0
  %v3016 = vsel %vm481, %v2894, 0
  %v3019 = vsel %vm481, %v2896, 0
  %v3022 = vsel %vm481, %v2898, 0
  %v3025 = vsel %vm481, %v2900, 0
  %v3028 = vsel %vm481, %v2902, 0
  %v3031 = vsel %vm481, %v2904, 0
  %3033 = vmatprep.subr.bf16.mxu0 0
  %3034 = vmatpush1.bf16.msra.mxu0 %v2965
  %3035 = vmatprep.subr.bf16.mxu0 0
  %3036 = vmatpush1.bf16.msra.mxu0 %v2966
  %3037 = vmatprep.subr.bf16.mxu0 0
  %3038 = vmatpush1.bf16.msra.mxu0 %v2967
  %3039 = vmatprep.subr.bf16.mxu0 0
  %3040 = vmatpush1.bf16.msra.mxu0 %v2968
  %3041 = vmatprep.subr.bf16.mxu0 0
  %3042 = vmatpush1.bf16.msra.mxu0 %v2969
  %3043 = vmatprep.subr.bf16.mxu0 0
  %3044 = vmatpush1.bf16.msra.mxu0 %v2970
  %3045 = vmatprep.subr.bf16.mxu0 0
  %3046 = vmatpush1.bf16.msra.mxu0 %v2971
  %3047 = vmatprep.subr.bf16.mxu0 0
  %3048 = vmatpush1.bf16.msra.mxu0 %v2972
  %3049 = vmatprep.subr.bf16.mxu0 0
  %3050 = vmatpush1.bf16.msra.mxu0 %v2973
  %3051 = vmatprep.subr.bf16.mxu0 0
  %3052 = vmatpush1.bf16.msra.mxu0 %v2974
  %3053 = vmatprep.subr.bf16.mxu0 0
  %3054 = vmatpush1.bf16.msra.mxu0 0
  %3055 = vmatprep.subr.bf16.mxu0 0
  %3056 = vmatpush1.bf16.msra.mxu0 0
  %3057 = vmatprep.subr.bf16.mxu0 0
  %3058 = vmatpush1.bf16.msra.mxu0 0
  %3059 = vmatprep.subr.bf16.mxu0 0
  %3060 = vmatpush1.bf16.msra.mxu0 0
  %3061 = vmatprep.subr.bf16.mxu0 0
  %3062 = vmatpush1.bf16.msra.mxu0 0
  %3063 = vmatprep.subr.bf16.mxu0 0
  %3064 = vmatpush1.bf16.msra.mxu0 0
  %3065 = vmatprep.mubr.bf16.mxu0 %v2986
  %3066 = vmatmul.mubr.bf16.gmra.mrb[0].mxu0 %v2873
  %v3067 = vpop.f32.mrb[0].mxu0
  %v3068 = vadd.f32 0.0, %v3067
  %v3069 = vpop.f32.mrb[0].mxu0
  %v3070 = vpop.f32.mrb[0].mxu0
  %v3071 = vadd.f32 0.0, %v3070
  %v3072 = vpop.f32.mrb[0].mxu0
  %3073 = vmatprep.mubr.bf16.mxu0 %v2989
  %3074 = vmatmul.mubr.bf16.gmra.mrb[0].mxu0 %v2875
  %v3075 = vpop.f32.mrb[0].mxu0
  %v3076 = vadd.f32 0.0, %v3075
  %v3077 = vpop.f32.mrb[0].mxu0
  %v3078 = vpop.f32.mrb[0].mxu0
  %v3079 = vadd.f32 0.0, %v3078
  %v3080 = vpop.f32.mrb[0].mxu0
  %3081 = vmatprep.mubr.bf16.mxu0 %v2992
  %3082 = vmatmul.mubr.bf16.gmra.mrb[0].mxu0 %v2877
  %v3083 = vpop.f32.mrb[0].mxu0
  %v3084 = vadd.f32 0.0, %v3083
  %v3085 = vpop.f32.mrb[0].mxu0
  %v3086 = vpop.f32.mrb[0].mxu0
  %v3087 = vadd.f32 0.0, %v3086
  %v3088 = vpop.f32.mrb[0].mxu0
  %3089 = vmatprep.mubr.bf16.mxu0 %v2995
  %3090 = vmatmul.mubr.bf16.gmra.mrb[0].mxu0 %v2879
  %v3091 = vpop.f32.mrb[0].mxu0
  %v3092 = vadd.f32 0.0, %v3091
  %v3093 = vpop.f32.mrb[0].mxu0
  %v3094 = vpop.f32.mrb[0].mxu0
  %v3095 = vadd.f32 0.0, %v3094
  %v3096 = vpop.f32.mrb[0].mxu0
  %3097 = vmatprep.mubr.bf16.mxu0 %v2998
  %3098 = vmatmul.mubr.bf16.gmra.mrb[0].mxu0 %v2881
  %v3099 = vpop.f32.mrb[0].mxu0
  %v3100 = vadd.f32 0.0, %v3099
  %v3101 = vpop.f32.mrb[0].mxu0
  %v3102 = vpop.f32.mrb[0].mxu0
  %v3103 = vadd.f32 0.0, %v3102
  %v3104 = vpop.f32.mrb[0].mxu0
  %3105 = vmatprep.mubr.bf16.mxu0 %v3001
  %3106 = vmatmul.mubr.bf16.gmra.mrb[0].mxu0 %v2883
  %v3107 = vpop.f32.mrb[0].mxu0
  %v3108 = vadd.f32 0.0, %v3107
  %v3109 = vpop.f32.mrb[0].mxu0
  %v3110 = vpop.f32.mrb[0].mxu0
  %v3111 = vadd.f32 0.0, %v3110
  %v3112 = vpop.f32.mrb[0].mxu0
  %3113 = vmatprep.mubr.bf16.mxu0 %v3004
  %3114 = vmatmul.mubr.bf16.gmra.mrb[0].mxu0 %v2885
  %v3115 = vpop.f32.mrb[0].mxu0
  %v3116 = vadd.f32 0.0, %v3115
  %v3117 = vpop.f32.mrb[0].mxu0
  %v3118 = vpop.f32.mrb[0].mxu0
  %v3119 = vadd.f32 0.0, %v3118
  %v3120 = vpop.f32.mrb[0].mxu0
  %3121 = vmatprep.mubr.bf16.mxu0 %v3007
  %3122 = vmatmul.mubr.bf16.gmra.mrb[0].mxu0 %v2887
  %v3123 = vpop.f32.mrb[0].mxu0
  %v3124 = vadd.f32 0.0, %v3123
  %v3125 = vpop.f32.mrb[0].mxu0
  %v3126 = vpop.f32.mrb[0].mxu0
  %v3127 = vadd.f32 0.0, %v3126
  %v3128 = vpop.f32.mrb[0].mxu0
  %3129 = vmatprep.mubr.bf16.mxu0 %v3010
  %3130 = vmatmul.mubr.bf16.gmra.mrb[0].mxu0 %v2889
  %v3131 = vpop.f32.mrb[0].mxu0
  %v3132 = vadd.f32 0.0, %v3131
  %v3133 = vpop.f32.mrb[0].mxu0
  %v3134 = vpop.f32.mrb[0].mxu0
  %v3135 = vadd.f32 0.0, %v3134
  %v3136 = vpop.f32.mrb[0].mxu0
  %3137 = vmatprep.mubr.bf16.mxu0 %v3013
  %3138 = vmatmul.mubr.bf16.gmra.mrb[0].mxu0 %v2891
  %v3139 = vpop.f32.mrb[0].mxu0
  %v3140 = vadd.f32 0.0, %v3139
  %v3141 = vpop.f32.mrb[0].mxu0
  %v3142 = vpop.f32.mrb[0].mxu0
  %v3143 = vadd.f32 0.0, %v3142
  %v3144 = vpop.f32.mrb[0].mxu0
  %3145 = vmatprep.mubr.bf16.mxu0 %v3016
  %3146 = vmatmul.mubr.bf16.gmra.mrb[0].mxu0 %v2893
  %v3147 = vpop.f32.mrb[0].mxu0
  %v3148 = vadd.f32 0.0, %v3147
  %v3149 = vpop.f32.mrb[0].mxu0
  %v3150 = vpop.f32.mrb[0].mxu0
  %v3151 = vadd.f32 0.0, %v3150
  %v3152 = vpop.f32.mrb[0].mxu0
  %3153 = vmatprep.mubr.bf16.mxu0 %v3019
  %3154 = vmatmul.mubr.bf16.gmra.mrb[0].mxu0 %v2895
  %v3155 = vpop.f32.mrb[0].mxu0
  %v3156 = vadd.f32 0.0, %v3155
  %v3157 = vpop.f32.mrb[0].mxu0
  %v3158 = vpop.f32.mrb[0].mxu0
  %v3159 = vadd.f32 0.0, %v3158
  %v3160 = vpop.f32.mrb[0].mxu0
  %3161 = vmatprep.mubr.bf16.mxu0 %v3022
  %3162 = vmatmul.mubr.bf16.gmra.mrb[0].mxu0 %v2897
  %v3163 = vpop.f32.mrb[0].mxu0
  %v3164 = vadd.f32 0.0, %v3163
  %v3165 = vpop.f32.mrb[0].mxu0
  %v3166 = vpop.f32.mrb[0].mxu0
  %v3167 = vadd.f32 0.0, %v3166
  %v3168 = vpop.f32.mrb[0].mxu0
  %3169 = vmatprep.mubr.bf16.mxu0 %v3025
  %3170 = vmatmul.mubr.bf16.gmra.mrb[0].mxu0 %v2899
  %v3171 = vpop.f32.mrb[0].mxu0
  %v3172 = vadd.f32 0.0, %v3171
  %v3173 = vpop.f32.mrb[0].mxu0
  %v3174 = vpop.f32.mrb[0].mxu0
  %v3175 = vadd.f32 0.0, %v3174
  %v3176 = vpop.f32.mrb[0].mxu0
  %3177 = vmatprep.mubr.bf16.mxu0 %v3028
  %3178 = vmatmul.mubr.bf16.gmra.mrb[0].mxu0 %v2901
  %v3179 = vpop.f32.mrb[0].mxu0
  %v3180 = vadd.f32 0.0, %v3179
  %v3181 = vpop.f32.mrb[0].mxu0
  %v3182 = vpop.f32.mrb[0].mxu0
  %v3183 = vadd.f32 0.0, %v3182
  %v3184 = vpop.f32.mrb[0].mxu0
  %3185 = vmatprep.mubr.bf16.mxu0 %v3031
  %3186 = vmatmul.mubr.bf16.gmra.mrb[0].mxu0 %v2903
  %v3187 = vpop.f32.mrb[0].mxu0
  %v3188 = vadd.f32 0.0, %v3187
  %v3189 = vpop.f32.mrb[0].mxu0
  %v3190 = vpop.f32.mrb[0].mxu0
  %v3191 = vadd.f32 0.0, %v3190
  %v3192 = vpop.f32.mrb[0].mxu0
  %3193 = vdwg.mxu0
  %v3226 = vrot.slane %v3068, 2
  %v3227 = vrot.slane %v3071, 2
  %v3228 = vsel %vm378, %v3226, %v3227
  %v3229 = vrot.slane %v3076, 2
  %v3230 = vsel %vm378, %v3227, %v3229
  %v3231 = vrot.slane %v3079, 2
  %v3232 = vsel %vm378, %v3229, %v3231
  %v3233 = vrot.slane %v3084, 2
  %v3234 = vrot.slane %v3087, 2
  %v3235 = vsel %vm378, %v3233, %v3234
  %v3236 = vrot.slane %v3092, 2
  %v3237 = vsel %vm378, %v3234, %v3236
  %v3238 = vrot.slane %v3095, 2
  %v3239 = vsel %vm378, %v3236, %v3238
  %v3240 = vrot.slane %v3100, 2
  %v3241 = vrot.slane %v3103, 2
  %v3242 = vsel %vm378, %v3240, %v3241
  %v3243 = vrot.slane %v3108, 2
  %v3244 = vsel %vm378, %v3241, %v3243
  %v3245 = vrot.slane %v3111, 2
  %v3246 = vsel %vm378, %v3243, %v3245
  %v3247 = vrot.slane %v3116, 2
  %v3248 = vrot.slane %v3119, 2
  %v3249 = vsel %vm378, %v3247, %v3248
  %v3250 = vrot.slane %v3124, 2
  %v3251 = vsel %vm378, %v3248, %v3250
  %v3252 = vrot.slane %v3127, 2
  %v3253 = vsel %vm378, %v3250, %v3252
  %v3254 = vrot.slane %v3132, 2
  %v3255 = vrot.slane %v3135, 2
  %v3256 = vsel %vm378, %v3254, %v3255
  %v3257 = vrot.slane %v3140, 2
  %v3258 = vsel %vm378, %v3255, %v3257
  %v3259 = vrot.slane %v3143, 2
  %v3260 = vsel %vm378, %v3257, %v3259
  %v3261 = vrot.slane %v3148, 2
  %v3262 = vrot.slane %v3151, 2
  %v3263 = vsel %vm378, %v3261, %v3262
  %v3264 = vrot.slane %v3156, 2
  %v3265 = vsel %vm378, %v3262, %v3264
  %v3266 = vrot.slane %v3159, 2
  %v3267 = vsel %vm378, %v3264, %v3266
  %v3268 = vrot.slane %v3164, 2
  %v3269 = vrot.slane %v3167, 2
  %v3270 = vsel %vm378, %v3268, %v3269
  %v3271 = vrot.slane %v3172, 2
  %v3272 = vsel %vm378, %v3269, %v3271
  %v3273 = vrot.slane %v3175, 2
  %v3274 = vsel %vm378, %v3271, %v3273
  %v3275 = vrot.slane %v3180, 2
  %v3276 = vrot.slane %v3183, 2
  %v3277 = vsel %vm378, %v3275, %v3276
  %v3278 = vrot.slane %v3188, 2
  %v3279 = vsel %vm378, %v3276, %v3278
  %v3280 = vrot.slane %v3191, 2
  %v3281 = vsel %vm378, %v3278, %v3280
  %v3306 = vadd.f32 %v3068, %v3228
  %v3307 = vadd.f32 %v3071, %v3230
  %v3308 = vadd.f32 %v3076, %v3232
  %v3309 = vadd.f32 %v3084, %v3235
  %v3310 = vadd.f32 %v3087, %v3237
  %v3311 = vadd.f32 %v3092, %v3239
  %v3312 = vadd.f32 %v3100, %v3242
  %v3313 = vadd.f32 %v3103, %v3244
  %v3314 = vadd.f32 %v3108, %v3246
  %v3315 = vadd.f32 %v3116, %v3249
  %v3316 = vadd.f32 %v3119, %v3251
  %v3317 = vadd.f32 %v3124, %v3253
  %v3318 = vadd.f32 %v3132, %v3256
  %v3319 = vadd.f32 %v3135, %v3258
  %v3320 = vadd.f32 %v3140, %v3260
  %v3321 = vadd.f32 %v3148, %v3263
  %v3322 = vadd.f32 %v3151, %v3265
  %v3323 = vadd.f32 %v3156, %v3267
  %v3324 = vadd.f32 %v3164, %v3270
  %v3325 = vadd.f32 %v3167, %v3272
  %v3326 = vadd.f32 %v3172, %v3274
  %v3327 = vadd.f32 %v3180, %v3277
  %v3328 = vadd.f32 %v3183, %v3279
  %v3329 = vadd.f32 %v3188, %v3281
  %v3330 = vmul.f32 %v3306, 0.5
  %v3331 = vmul.f32 %v3307, 0.5
  %v3332 = vmul.f32 %v3308, 0.5
  %v3333 = vmul.f32 %v3309, 0.5
  %v3334 = vmul.f32 %v3310, 0.5
  %v3335 = vmul.f32 %v3311, 0.5
  %v3336 = vmul.f32 %v3312, 0.5
  %v3337 = vmul.f32 %v3313, 0.5
  %v3338 = vmul.f32 %v3314, 0.5
  %v3339 = vmul.f32 %v3315, 0.5
  %v3340 = vmul.f32 %v3316, 0.5
  %v3341 = vmul.f32 %v3317, 0.5
  %v3342 = vmul.f32 %v3318, 0.5
  %v3343 = vmul.f32 %v3319, 0.5
  %v3344 = vmul.f32 %v3320, 0.5
  %v3345 = vmul.f32 %v3321, 0.5
  %v3346 = vmul.f32 %v3322, 0.5
  %v3347 = vmul.f32 %v3323, 0.5
  %v3348 = vmul.f32 %v3324, 0.5
  %v3349 = vmul.f32 %v3325, 0.5
  %v3350 = vmul.f32 %v3326, 0.5
  %v3351 = vmul.f32 %v3327, 0.5
  %v3352 = vmul.f32 %v3328, 0.5
  %v3353 = vmul.f32 %v3329, 0.5
  %v3362 = vrot.slane %v3333, 7
  %vm3363 = vcmask 1041409
  %v3364 = vsel %vm3363, %v3362, %v3330
  %v3365 = vrot.slane %v3336, 6
  %vm3366 = vcmask 1042434
  %v3367 = vsel %vm3366, %v3365, %v3364
  %v3368 = vrot.slane %v3339, 5
  %vm3369 = vcmask 1043459
  %v3370 = vsel %vm3369, %v3368, %v3367
  %v3371 = vrot.slane %v3342, 4
  %vm3372 = vcmask 1044484
  %v3373 = vsel %vm3372, %v3371, %v3370
  %v3374 = vrot.slane %v3345, 3
  %vm3375 = vcmask 1045509
  %v3376 = vsel %vm3375, %v3374, %v3373
  %v3377 = vrot.slane %v3348, 2
  %vm3378 = vcmask 1046534
  %v3379 = vsel %vm3378, %v3377, %v3376
  %v3380 = vrot.slane %v3351, 1
  %vm3381 = vcmask 1047559
  %v3382 = vsel %vm3381, %v3380, %v3379
  %v3384 = vrot.slane %v3330, 4
  %v3385 = vrot.slane %v3333, 3
  %v3386 = vsel %vm3363, %v3385, %v3384
  %v3387 = vrot.slane %v3336, 2
  %v3388 = vsel %vm3366, %v3387, %v3386
  %v3389 = vrot.slane %v3339, 1
  %v3390 = vsel %vm3369, %v3389, %v3388
  %v3391 = vsel %vm3372, %v3342, %v3390
  %v3392 = vrot.slane %v3345, 7
  %v3393 = vsel %vm3375, %v3392, %v3391
  %v3394 = vrot.slane %v3348, 6
  %v3395 = vsel %vm3378, %v3394, %v3393
  %v3396 = vrot.slane %v3351, 5
  %v3397 = vsel %vm3381, %v3396, %v3395
  %3398 = vrot.lane.b32.xlu0 %v3397, 80
  %v3399 = vpop.permute.xlu0 %3398
  %v3409 = vrot.slane %v3334, 7
  %v3410 = vsel %vm3363, %v3409, %v3331
  %v3411 = vrot.slane %v3337, 6
  %v3412 = vsel %vm3366, %v3411, %v3410
  %v3413 = vrot.slane %v3340, 5
  %v3414 = vsel %vm3369, %v3413, %v3412
  %v3415 = vrot.slane %v3343, 4
  %v3416 = vsel %vm3372, %v3415, %v3414
  %v3417 = vrot.slane %v3346, 3
  %v3418 = vsel %vm3375, %v3417, %v3416
  %v3419 = vrot.slane %v3349, 2
  %v3420 = vsel %vm3378, %v3419, %v3418
  %v3421 = vrot.slane %v3352, 1
  %v3422 = vsel %vm3381, %v3421, %v3420
  %3423 = vrot.lane.b32.xlu0 %v3422, 32
  %v3424 = vpop.permute.xlu0 %3423
  %v3426 = vrot.slane %v3331, 4
  %v3427 = vrot.slane %v3334, 3
  %v3428 = vsel %vm3363, %v3427, %v3426
  %v3429 = vrot.slane %v3337, 2
  %v3430 = vsel %vm3366, %v3429, %v3428
  %v3431 = vrot.slane %v3340, 1
  %v3432 = vsel %vm3369, %v3431, %v3430
  %v3433 = vsel %vm3372, %v3343, %v3432
  %v3434 = vrot.slane %v3346, 7
  %v3435 = vsel %vm3375, %v3434, %v3433
  %v3436 = vrot.slane %v3349, 6
  %v3437 = vsel %vm3378, %v3436, %v3435
  %v3438 = vrot.slane %v3352, 5
  %v3439 = vsel %vm3381, %v3438, %v3437
  %3440 = vrot.lane.b32.xlu0 %v3439, 112
  %v3441 = vpop.permute.xlu0 %3440
  %v3451 = vrot.slane %v3335, 7
  %v3452 = vsel %vm3363, %v3451, %v3332
  %v3453 = vrot.slane %v3338, 6
  %v3454 = vsel %vm3366, %v3453, %v3452
  %v3455 = vrot.slane %v3341, 5
  %v3456 = vsel %vm3369, %v3455, %v3454
  %v3457 = vrot.slane %v3344, 4
  %v3458 = vsel %vm3372, %v3457, %v3456
  %v3459 = vrot.slane %v3347, 3
  %v3460 = vsel %vm3375, %v3459, %v3458
  %v3461 = vrot.slane %v3350, 2
  %v3462 = vsel %vm3378, %v3461, %v3460
  %v3463 = vrot.slane %v3353, 1
  %v3464 = vsel %vm3381, %v3463, %v3462
  %3465 = vrot.lane.b32.xlu0 %v3464, 64
  %v3466 = vpop.permute.xlu0 %3465
  %v3468 = vsel %vm2004, %v3382, %v3399
  %v3469 = vsel %vm481, %v3399, %v3424
  %vm3470 = vcmask 916480
  %v3471 = vsel %vm3470, %v3469, %v3441
  %v3472 = vsel %vm514, %v3441, %v3466
  %v3473 = vpack.c.bf16 %v3468, %v3468
  %v3474 = vpack.c.bf16 %v3471, %v3471
  %v3475 = vpack.c.bf16 %v3472, %v3472
  %v3476 = vpack.c.bf16 %v3466, %v3466
  %v3477 = vld [vmem:[%s7] sm:$0xf]
  %v3478 = vld [vmem:[%s7 + $0x4] sm:$0xf]
  %v3479 = vld [vmem:[%s7 + $0x8] sm:$0xf]
  %v3480 = vld [vmem:[%s7 + $0xc] sm:$0xf]
  %v3481 = vld [vmem:[%s7 + $0x10] sm:$0xf]
  %v3482 = vld [vmem:[%s7 + $0x14] sm:$0xf]
  %v3483 = vld [vmem:[%s7 + $0x18] sm:$0xf]
  %v3484 = vld [vmem:[%s7 + $0x1c] sm:$0xf]
  %v3485 = vld [vmem:[%s7 + $0x20] sm:$0xf]
  %v3486 = vld [vmem:[%s7 + $0x24] sm:$0xf]
  %v3487 = vld [vmem:[%s7 + $0x28] sm:$0xf]
  %v3488 = vld [vmem:[%s7 + $0x2c] sm:$0xf]
  %v3489 = vld [vmem:[%s7 + $0x30] sm:$0xf]
  %v3490 = vld [vmem:[%s7 + $0x34] sm:$0xf]
  %v3491 = vld [vmem:[%s7 + $0x38] sm:$0xf]
  %v3492 = vld [vmem:[%s7 + $0x3c] sm:$0xf]
  %v3493 = vld [vmem:[%s7 + $0x40] sm:$0xf]
  %v3494 = vld [vmem:[%s7 + $0x44] sm:$0xf]
  %v3495 = vld [vmem:[%s7 + $0x48] sm:$0xf]
  %v3496 = vld [vmem:[%s7 + $0x4c] sm:$0xf]
  %v3497 = vld [vmem:[%s7 + $0x50] sm:$0xf]
  %v3498 = vld [vmem:[%s7 + $0x54] sm:$0xf]
  %v3499 = vld [vmem:[%s7 + $0x58] sm:$0xf]
  %v3500 = vld [vmem:[%s7 + $0x5c] sm:$0xf]
  %v3501 = vld [vmem:[%s7 + $0x60] sm:$0xf]
  %v3502 = vld [vmem:[%s7 + $0x64] sm:$0xf]
  %v3503 = vld [vmem:[%s7 + $0x68] sm:$0xf]
  %v3504 = vld [vmem:[%s7 + $0x6c] sm:$0xf]
  %v3505 = vld [vmem:[%s7 + $0x70] sm:$0xf]
  %v3506 = vld [vmem:[%s7 + $0x74] sm:$0xf]
  %v3507 = vld [vmem:[%s7 + $0x78] sm:$0xf]
  %v3508 = vld [vmem:[%s7 + $0x7c] sm:$0xf]
  %v3509 = vld [vmem:[%s7 + $0x80] sm:$0xf]
  %v3510 = vld [vmem:[%s7 + $0x84] sm:$0xf]
  %v3511 = vld [vmem:[%s7 + $0x88] sm:$0xf]
  %v3512 = vld [vmem:[%s7 + $0x8c] sm:$0xf]
  %v3513 = vld [vmem:[%s7 + $0x90] sm:$0xf]
  %v3514 = vld [vmem:[%s7 + $0x94] sm:$0xf]
  %v3515 = vld [vmem:[%s7 + $0x98] sm:$0xf]
  %v3516 = vld [vmem:[%s7 + $0x9c] sm:$0xf]
  %v3517 = vld [vmem:[%s7 + $0xa0] sm:$0xf]
  %v3518 = vld [vmem:[%s7 + $0xa4] sm:$0xf]
  %v3519 = vld [vmem:[%s7 + $0xa8] sm:$0xf]
  %v3520 = vld [vmem:[%s7 + $0xac] sm:$0xf]
  %v3521 = vld [vmem:[%s7 + $0xb0] sm:$0xf]
  %v3522 = vld [vmem:[%s7 + $0xb4] sm:$0xf]
  %v3523 = vld [vmem:[%s7 + $0xb8] sm:$0xf]
  %v3524 = vld [vmem:[%s7 + $0xbc] sm:$0xf]
  %v3525 = vld [vmem:[%s7 + $0xc0] sm:$0xf]
  %v3526 = vld [vmem:[%s7 + $0xc4] sm:$0xf]
  %v3527 = vld [vmem:[%s8] sm:$0x1]
  %v3529 = vlaneseq
  %v3530 = vshrl.u32 %v3529, 7
  %v3531 = vsub.s32 0, %v3530
  %v3532 = vrot.slane %v3527, %v3531
  %v3584 = vunpack.c.l.b16 %v3477
  %v3585 = vunpack.c.l.b16 %v3478
  %v3586 = vunpack.c.l.b16 %v3479
  %v3587 = vunpack.c.l.b16 %v3480
  %v3588 = vunpack.c.l.b16 %v3481
  %v3589 = vunpack.c.l.b16 %v3482
  %v3590 = vunpack.c.l.b16 %v3483
  %v3591 = vunpack.c.l.b16 %v3484
  %v3592 = vunpack.c.l.b16 %v3485
  %v3593 = vunpack.c.l.b16 %v3486
  %v3594 = vunpack.c.l.b16 %v3487
  %v3595 = vunpack.c.l.b16 %v3488
  %v3596 = vunpack.c.l.b16 %v3489
  %v3597 = vunpack.c.l.b16 %v3490
  %v3598 = vunpack.c.l.b16 %v3491
  %v3599 = vunpack.c.l.b16 %v3492
  %v3600 = vunpack.c.l.b16 %v3493
  %v3601 = vunpack.c.l.b16 %v3494
  %v3602 = vunpack.c.l.b16 %v3495
  %v3603 = vunpack.c.l.b16 %v3496
  %v3604 = vunpack.c.l.b16 %v3497
  %v3605 = vunpack.c.l.b16 %v3498
  %v3606 = vunpack.c.l.b16 %v3499
  %v3607 = vunpack.c.l.b16 %v3500
  %v3608 = vunpack.c.l.b16 %v3501
  %v3609 = vunpack.c.l.b16 %v3502
  %v3610 = vunpack.c.l.b16 %v3503
  %v3611 = vunpack.c.l.b16 %v3504
  %v3612 = vunpack.c.l.b16 %v3505
  %v3613 = vunpack.c.l.b16 %v3506
  %v3614 = vunpack.c.l.b16 %v3507
  %v3615 = vunpack.c.l.b16 %v3508
  %v3616 = vunpack.c.l.b16 %v3509
  %v3617 = vunpack.c.l.b16 %v3510
  %v3618 = vunpack.c.l.b16 %v3511
  %v3619 = vunpack.c.l.b16 %v3512
  %v3620 = vunpack.c.l.b16 %v3513
  %v3621 = vunpack.c.l.b16 %v3514
  %v3622 = vunpack.c.l.b16 %v3515
  %v3623 = vunpack.c.l.b16 %v3516
  %v3624 = vunpack.c.l.b16 %v3517
  %v3625 = vunpack.c.l.b16 %v3518
  %v3626 = vunpack.c.l.b16 %v3519
  %v3627 = vunpack.c.l.b16 %v3520
  %v3628 = vunpack.c.l.b16 %v3521
  %v3629 = vunpack.c.l.b16 %v3522
  %v3630 = vunpack.c.l.b16 %v3523
  %v3631 = vunpack.c.l.b16 %v3524
  %v3632 = vunpack.c.l.b16 %v3525
  %v3633 = vunpack.c.l.b16 %v3526
  %v3634 = vpack.c.b16 %v3585, %v3584
  %v3635 = vpack.c.b16 %v3587, %v3586
  %v3636 = vpack.c.b16 %v3589, %v3588
  %v3637 = vpack.c.b16 %v3591, %v3590
  %v3638 = vpack.c.b16 %v3593, %v3592
  %v3639 = vpack.c.b16 %v3595, %v3594
  %v3640 = vpack.c.b16 %v3597, %v3596
  %v3641 = vpack.c.b16 %v3599, %v3598
  %v3642 = vpack.c.b16 %v3601, %v3600
  %v3643 = vpack.c.b16 %v3603, %v3602
  %v3644 = vpack.c.b16 %v3605, %v3604
  %v3645 = vpack.c.b16 %v3607, %v3606
  %v3646 = vpack.c.b16 %v3609, %v3608
  %v3647 = vpack.c.b16 %v3611, %v3610
  %v3648 = vpack.c.b16 %v3613, %v3612
  %v3649 = vpack.c.b16 %v3615, %v3614
  %v3650 = vpack.c.b16 %v3617, %v3616
  %v3651 = vpack.c.b16 %v3619, %v3618
  %v3652 = vpack.c.b16 %v3621, %v3620
  %v3653 = vpack.c.b16 %v3623, %v3622
  %v3654 = vpack.c.b16 %v3625, %v3624
  %v3655 = vpack.c.b16 %v3627, %v3626
  %v3656 = vpack.c.b16 %v3629, %v3628
  %v3657 = vpack.c.b16 %v3631, %v3630
  %v3658 = vpack.c.b16 %v3633, %v3632
  %vm3684 = vcmask 130048
  %v3686 = vsel %vm3684, %v3476, 0
  %3688 = vmatprep.subr.bf16.mxu0 0
  %3689 = vmatpush1.bf16.msra.mxu0 %v3634
  %3690 = vmatprep.subr.bf16.mxu0 0
  %3691 = vmatpush1.bf16.msra.mxu0 %v3635
  %3692 = vmatprep.subr.bf16.mxu0 0
  %3693 = vmatpush1.bf16.msra.mxu0 %v3636
  %3694 = vmatprep.subr.bf16.mxu0 0
  %3695 = vmatpush1.bf16.msra.mxu0 %v3637
  %3696 = vmatprep.subr.bf16.mxu0 0
  %3697 = vmatpush1.bf16.msra.mxu0 %v3638
  %3698 = vmatprep.subr.bf16.mxu0 0
  %3699 = vmatpush1.bf16.msra.mxu0 %v3639
  %3700 = vmatprep.subr.bf16.mxu0 0
  %3701 = vmatpush1.bf16.msra.mxu0 %v3640
  %3702 = vmatprep.subr.bf16.mxu0 0
  %3703 = vmatpush1.bf16.msra.mxu0 %v3641
  %3704 = vmatprep.subr.bf16.mxu0 0
  %3705 = vmatpush1.bf16.msra.mxu0 %v3642
  %3706 = vmatprep.subr.bf16.mxu0 0
  %3707 = vmatpush1.bf16.msra.mxu0 %v3643
  %3708 = vmatprep.subr.bf16.mxu0 0
  %3709 = vmatpush1.bf16.msra.mxu0 %v3644
  %3710 = vmatprep.subr.bf16.mxu0 0
  %3711 = vmatpush1.bf16.msra.mxu0 %v3645
  %3712 = vmatprep.subr.bf16.mxu0 0
  %3713 = vmatpush1.bf16.msra.mxu0 %v3646
  %3714 = vmatprep.subr.bf16.mxu0 0
  %3715 = vmatpush1.bf16.msra.mxu0 %v3647
  %3716 = vmatprep.subr.bf16.mxu0 0
  %3717 = vmatpush1.bf16.msra.mxu0 %v3648
  %3718 = vmatprep.subr.bf16.mxu0 0
  %3719 = vmatpush1.bf16.msra.mxu0 %v3649
  %3720 = vmatprep.mubr.bf16.mxu0 %v3474
  %3721 = vmatmul.mubr.bf16.gmra.mrb[0].mxu0 %v3473
  %v3722 = vpop.f32.mrb[0].mxu0
  %v3723 = vadd.f32 %v3532, %v3722
  %v3724 = vpop.f32.mrb[0].mxu0
  %v3725 = vpop.f32.mrb[0].mxu0
  %v3726 = vpop.f32.mrb[0].mxu0
  %3727 = vdwg.mxu0
  %3728 = vmatprep.subr.bf16.mxu0 0
  %3729 = vmatpush1.bf16.msra.mxu0 %v3650
  %3730 = vmatprep.subr.bf16.mxu0 0
  %3731 = vmatpush1.bf16.msra.mxu0 %v3651
  %3732 = vmatprep.subr.bf16.mxu0 0
  %3733 = vmatpush1.bf16.msra.mxu0 %v3652
  %3734 = vmatprep.subr.bf16.mxu0 0
  %3735 = vmatpush1.bf16.msra.mxu0 %v3653
  %3736 = vmatprep.subr.bf16.mxu0 0
  %3737 = vmatpush1.bf16.msra.mxu0 %v3654
  %3738 = vmatprep.subr.bf16.mxu0 0
  %3739 = vmatpush1.bf16.msra.mxu0 %v3655
  %3740 = vmatprep.subr.bf16.mxu0 0
  %3741 = vmatpush1.bf16.msra.mxu0 %v3656
  %3742 = vmatprep.subr.bf16.mxu0 0
  %3743 = vmatpush1.bf16.msra.mxu0 %v3657
  %3744 = vmatprep.subr.bf16.mxu0 0
  %3745 = vmatpush1.bf16.msra.mxu0 %v3658
  %3746 = vmatprep.subr.bf16.mxu0 0
  %3747 = vmatpush1.bf16.msra.mxu0 0
  %3748 = vmatprep.subr.bf16.mxu0 0
  %3749 = vmatpush1.bf16.msra.mxu0 0
  %3750 = vmatprep.subr.bf16.mxu0 0
  %3751 = vmatpush1.bf16.msra.mxu0 0
  %3752 = vmatprep.subr.bf16.mxu0 0
  %3753 = vmatpush1.bf16.msra.mxu0 0
  %3754 = vmatprep.subr.bf16.mxu0 0
  %3755 = vmatpush1.bf16.msra.mxu0 0
  %3756 = vmatprep.subr.bf16.mxu0 0
  %3757 = vmatpush1.bf16.msra.mxu0 0
  %3758 = vmatprep.subr.bf16.mxu0 0
  %3759 = vmatpush1.bf16.msra.mxu0 0
  %3760 = vmatprep.mubr.bf16.mxu0 %v3686
  %3761 = vmatmul.mubr.bf16.gmra.mrb[0].mxu0 %v3475
  %v3762 = vpop.f32.mrb[0].mxu0
  %v3763 = vadd.f32 %v3723, %v3762
  %v3764 = vpop.f32.mrb[0].mxu0
  %v3765 = vpop.f32.mrb[0].mxu0
  %v3766 = vpop.f32.mrb[0].mxu0
  %3767 = vdwg.mxu0
  %v3768 = vtanh.pop %v3763
  %v3769 = vpack.c.bf16 %v3768, %v3768
  %v3770 = vld [vmem:[%s9] sm:$0xf]
  %v3771 = vld [vmem:[%s9 + $0x4] sm:$0xf]
  %v3772 = vld [vmem:[%s9 + $0x8] sm:$0xf]
  %v3773 = vld [vmem:[%s9 + $0xc] sm:$0xf]
  %v3774 = vld [vmem:[%s9 + $0x10] sm:$0xf]
  %v3775 = vld [vmem:[%s9 + $0x14] sm:$0xf]
  %v3776 = vld [vmem:[%s9 + $0x18] sm:$0xf]
  %v3777 = vld [vmem:[%s9 + $0x1c] sm:$0xf]
  %v3778 = vld [vmem:[%s9 + $0x20] sm:$0xf]
  %v3779 = vld [vmem:[%s9 + $0x24] sm:$0xf]
  %v3780 = vld [vmem:[%s9 + $0x28] sm:$0xf]
  %v3781 = vld [vmem:[%s9 + $0x2c] sm:$0xf]
  %v3782 = vld [vmem:[%s9 + $0x30] sm:$0xf]
  %v3783 = vld [vmem:[%s9 + $0x34] sm:$0xf]
  %v3784 = vld [vmem:[%s9 + $0x38] sm:$0xf]
  %v3785 = vld [vmem:[%s10] sm:$0x1]
  %v3787 = vlaneseq
  %v3788 = vshrl.u32 %v3787, 7
  %v3789 = vsub.s32 0, %v3788
  %v3790 = vrot.slane %v3785, %v3789
  %v3807 = vunpack.c.l.b16 %v3770
  %v3808 = vunpack.c.l.b16 %v3771
  %v3809 = vunpack.c.l.b16 %v3772
  %v3810 = vunpack.c.l.b16 %v3773
  %v3811 = vunpack.c.l.b16 %v3774
  %v3812 = vunpack.c.l.b16 %v3775
  %v3813 = vunpack.c.l.b16 %v3776
  %v3814 = vunpack.c.l.b16 %v3777
  %v3815 = vunpack.c.l.b16 %v3778
  %v3816 = vunpack.c.l.b16 %v3779
  %v3817 = vunpack.c.l.b16 %v3780
  %v3818 = vunpack.c.l.b16 %v3781
  %v3819 = vunpack.c.l.b16 %v3782
  %v3820 = vunpack.c.l.b16 %v3783
  %v3821 = vunpack.c.l.b16 %v3784
  %v3822 = vpack.c.b16 %v3808, %v3807
  %v3823 = vpack.c.b16 %v3810, %v3809
  %v3824 = vpack.c.b16 %v3812, %v3811
  %v3825 = vpack.c.b16 %v3814, %v3813
  %v3826 = vpack.c.b16 %v3816, %v3815
  %v3827 = vpack.c.b16 %v3818, %v3817
  %v3828 = vpack.c.b16 %v3820, %v3819
  %v3829 = vpack.c.b16 %v3821, %v3821
  %vm3837 = vcmask 982016
  %v3839 = vsel %vm3837, %v3769, 0
  %v3842 = vsel %vm1197, %v3829, 0
  %3844 = vmatprep.subr.bf16.mxu0 0
  %3845 = vmatpush1.bf16.msra.mxu0 %v3822
  %3846 = vmatprep.subr.bf16.mxu0 0
  %3847 = vmatpush1.bf16.msra.mxu0 %v3823
  %3848 = vmatprep.subr.bf16.mxu0 0
  %3849 = vmatpush1.bf16.msra.mxu0 %v3824
  %3850 = vmatprep.subr.bf16.mxu0 0
  %3851 = vmatpush1.bf16.msra.mxu0 %v3825
  %3852 = vmatprep.subr.bf16.mxu0 0
  %3853 = vmatpush1.bf16.msra.mxu0 %v3826
  %3854 = vmatprep.subr.bf16.mxu0 0
  %3855 = vmatpush1.bf16.msra.mxu0 %v3827
  %3856 = vmatprep.subr.bf16.mxu0 0
  %3857 = vmatpush1.bf16.msra.mxu0 %v3828
  %3858 = vmatprep.subr.bf16.mxu0 0
  %3859 = vmatpush1.bf16.msra.mxu0 %v3842
  %3860 = vmatprep.subr.bf16.mxu0 0
  %3861 = vmatpush1.bf16.msra.mxu0 0
  %3862 = vmatprep.subr.bf16.mxu0 0
  %3863 = vmatpush1.bf16.msra.mxu0 0
  %3864 = vmatprep.subr.bf16.mxu0 0
  %3865 = vmatpush1.bf16.msra.mxu0 0
  %3866 = vmatprep.subr.bf16.mxu0 0
  %3867 = vmatpush1.bf16.msra.mxu0 0
  %3868 = vmatprep.subr.bf16.mxu0 0
  %3869 = vmatpush1.bf16.msra.mxu0 0
  %3870 = vmatprep.subr.bf16.mxu0 0
  %3871 = vmatpush1.bf16.msra.mxu0 0
  %3872 = vmatprep.subr.bf16.mxu0 0
  %3873 = vmatpush1.bf16.msra.mxu0 0
  %3874 = vmatprep.subr.bf16.mxu0 0
  %3875 = vmatpush1.bf16.msra.mxu0 0
  %3876 = vmatprep.mubr.bf16.mxu0 0
  %3877 = vmatmul.mubr.bf16.gmra.mrb[0].mxu0 %v3839
  %v3878 = vpop.f32.mrb[0].mxu0
  %v3879 = vadd.f32 %v3790, %v3878
  %v3880 = vpop.f32.mrb[0].mxu0
  %v3881 = vpop.f32.mrb[0].mxu0
  %v3882 = vpop.f32.mrb[0].mxu0
  %3883 = vdwg.mxu0
  %v3884 = vtanh.pop %v3879
  %v3885 = vpack.c.bf16 %v3884, %v3884
  %v3886 = vld [vmem:[%s11] sm:$0xf]
  %v3887 = vld [vmem:[%s11 + $0x4] sm:$0xf]
  %v3888 = vld [vmem:[%s11 + $0x8] sm:$0xf]
  %v3889 = vld [vmem:[%s11 + $0xc] sm:$0xf]
  %v3890 = vld [vmem:[%s11 + $0x10] sm:$0xf]
  %v3891 = vld [vmem:[%s11 + $0x14] sm:$0xf]
  %v3892 = vld [vmem:[%s11 + $0x18] sm:$0xf]
  %v3893 = vld [vmem:[%s11 + $0x1c] sm:$0xf]
  %v3894 = vld [vmem:[%s11 + $0x20] sm:$0xf]
  %v3895 = vld [vmem:[%s11 + $0x24] sm:$0xf]
  %v3896 = vld [vmem:[%s11 + $0x28] sm:$0x3]
  %v3897 = vld [vmem:[%s12] sm:$0x1]
  %v3899 = vlaneseq
  %v3900 = vshrl.u32 %v3899, 7
  %v3901 = vsub.s32 0, %v3900
  %v3902 = vrot.slane %v3897, %v3901
  %v3915 = vunpack.c.l.b16 %v3886
  %v3916 = vunpack.c.l.b16 %v3887
  %v3917 = vunpack.c.l.b16 %v3888
  %v3918 = vunpack.c.l.b16 %v3889
  %v3919 = vunpack.c.l.b16 %v3890
  %v3920 = vunpack.c.l.b16 %v3891
  %v3921 = vunpack.c.l.b16 %v3892
  %v3922 = vunpack.c.l.b16 %v3893
  %v3923 = vunpack.c.l.b16 %v3894
  %v3924 = vunpack.c.l.b16 %v3895
  %v3925 = vunpack.c.l.b16 %v3896
  %v3926 = vpack.c.b16 %v3916, %v3915
  %v3927 = vpack.c.b16 %v3918, %v3917
  %v3928 = vpack.c.b16 %v3920, %v3919
  %v3929 = vpack.c.b16 %v3922, %v3921
  %v3930 = vpack.c.b16 %v3924, %v3923
  %v3931 = vpack.c.b16 %v3925, %v3925
  %v3938 = vsel %vm1858, %v3885, 0
  %v3941 = vsel %vm2416, %v3931, 0
  %3943 = vmatprep.subr.bf16.mxu0 0
  %3944 = vmatpush1.bf16.msra.mxu0 %v3926
  %3945 = vmatprep.subr.bf16.mxu0 0
  %3946 = vmatpush1.bf16.msra.mxu0 %v3927
  %3947 = vmatprep.subr.bf16.mxu0 0
  %3948 = vmatpush1.bf16.msra.mxu0 %v3928
  %3949 = vmatprep.subr.bf16.mxu0 0
  %3950 = vmatpush1.bf16.msra.mxu0 %v3929
  %3951 = vmatprep.subr.bf16.mxu0 0
  %3952 = vmatpush1.bf16.msra.mxu0 %v3930
  %3953 = vmatprep.subr.bf16.mxu0 0
  %3954 = vmatpush1.bf16.msra.mxu0 %v3941
  %3955 = vmatprep.subr.bf16.mxu0 0
  %3956 = vmatpush1.bf16.msra.mxu0 0
  %3957 = vmatprep.subr.bf16.mxu0 0
  %3958 = vmatpush1.bf16.msra.mxu0 0
  %3959 = vmatprep.subr.bf16.mxu0 0
  %3960 = vmatpush1.bf16.msra.mxu0 0
  %3961 = vmatprep.subr.bf16.mxu0 0
  %3962 = vmatpush1.bf16.msra.mxu0 0
  %3963 = vmatprep.subr.bf16.mxu0 0
  %3964 = vmatpush1.bf16.msra.mxu0 0
  %3965 = vmatprep.subr.bf16.mxu0 0
  %3966 = vmatpush1.bf16.msra.mxu0 0
  %3967 = vmatprep.subr.bf16.mxu0 0
  %3968 = vmatpush1.bf16.msra.mxu0 0
  %3969 = vmatprep.subr.bf16.mxu0 0
  %3970 = vmatpush1.bf16.msra.mxu0 0
  %3971 = vmatprep.subr.bf16.mxu0 0
  %3972 = vmatpush1.bf16.msra.mxu0 0
  %3973 = vmatprep.subr.bf16.mxu0 0
  %3974 = vmatpush1.bf16.msra.mxu0 0
  %3975 = vmatprep.mubr.bf16.mxu0 0
  %3976 = vmatmul.mubr.bf16.gmra.mrb[0].mxu0 %v3938
  %v3977 = vpop.f32.mrb[0].mxu0
  %v3978 = vadd.f32 %v3902, %v3977
  %v3979 = vpop.f32.mrb[0].mxu0
  %v3980 = vpop.f32.mrb[0].mxu0
  %v3981 = vpop.f32.mrb[0].mxu0
  %3982 = vdwg.mxu0
  %3983 = vst [vmem:[%s13] sm:$0xff] %v3978
  // Predicated region
  $region54: #{lenet5_forward.1} parent=0 // pred_check
    _
  $region55: #{lenet5_forward.1} parent=0 // pred_check_branch
    %3985 = sbr.rel (0) target = $region57
  $region56: #{lenet5_forward.1} parent=0 // pred_region
    _
  $region57: #{lenet5_forward.1} parent=0 // pred_fallthru
    _
  // Predicated region
  $region58: #{lenet5_forward.1} parent=0 // pred_check
    _
  $region59: #{lenet5_forward.1} parent=0 // pred_check_branch
    %3987 = sbr.rel (0) target = $region61
  $region60: #{lenet5_forward.1} parent=0 // pred_region
    _
  $region61: #{lenet5_forward.1} parent=0 // pred_fallthru
    _

</llo_original>
